<compile_context>
chip_gen: v5e
topology: v5e:2x2
jax: 0.10.0
libtpu: 0.0.40
codegen_flags: <defaults>
</compile_context>

<pallas_src>
import functools

import jax
import jax.numpy as jnp
from jax.experimental import pallas as pl
from jax.experimental.pallas import tpu as pltpu


# ----------------------------------------------------------------------------
# Pallas kernels
# ----------------------------------------------------------------------------
def _conv_relu_pool_kernel(xe_ref, xo_ref, w_ref, b_ref, o_ref, *, hp_count):
    """Fused conv(3x3, valid) + bias + ReLU + MaxPool2d(2) for one image.

    xe_ref / xo_ref : (Ho, Wp, K)   bf16  im2col patches at even / odd conv columns
    w_ref           : (K, Cout)     bf16  flattened conv weights (kh, kw, Cin order)
    b_ref           : (1, Cout)     f32   bias
    o_ref           : (Hp, Wp, Cout)      pooled output
    """
    w = w_ref[...]
    b = b_ref[...]

    def body(hp, carry):
        r0 = 2 * hp
        r1 = r0 + 1
        # The 4 pool candidates for every pooled pixel of this output row (pre-bias).
        y00 = jnp.dot(xe_ref[r0], w, preferred_element_type=jnp.float32)
        y01 = jnp.dot(xo_ref[r0], w, preferred_element_type=jnp.float32)
        y10 = jnp.dot(xe_ref[r1], w, preferred_element_type=jnp.float32)
        y11 = jnp.dot(xo_ref[r1], w, preferred_element_type=jnp.float32)
        m = jnp.maximum(jnp.maximum(y00, y01), jnp.maximum(y10, y11))
        # max/bias/ReLU commute, so this equals maxpool(relu(conv + b)).
        o_ref[hp] = jnp.maximum(m + b, 0.0).astype(o_ref.dtype)
        return carry

    jax.lax.fori_loop(0, hp_count, body, 0, unroll=hp_count <= 4)


def _head_kernel(x_ref, wd_ref, bd_ref, wo_ref, bo_ref, o_ref):
    """Fused dense(32->128)+ReLU and output(128->1)+sigmoid."""
    h = jnp.dot(x_ref[...], wd_ref[...], preferred_element_type=jnp.float32)
    h = jnp.maximum(h + bd_ref[...], 0.0)
    y = jnp.dot(h, wo_ref[...], preferred_element_type=jnp.float32) + bo_ref[...]
    o_ref[...] = jax.nn.sigmoid(y)


# ----------------------------------------------------------------------------
# Wrappers (thin XLA glue for patch extraction; hot path lives in Pallas)
# ----------------------------------------------------------------------------
def _im2col_even_odd(x, kh, kw):
    """Valid-conv patches, split by conv-output-column parity (for fused 2x2 pool).

    x: (N, H, W, C) NHWC.  Returns (cols_even, cols_odd), each (N, Ho, Wp, kh*kw*C),
    where cols_p[n, h, wp, :] is the flattened (kh, kw, C)-ordered patch of conv
    output pixel (h, 2*wp + p).
    """
    N, H, W, C = x.shape
    Ho, Wo = H - kh + 1, W - kw + 1
    Wp = Wo // 2

    def build(parity):
        pieces = []
        for i in range(kh):
            for j in range(kw):
                start = parity + j
                pieces.append(
                    jax.lax.slice(
                        x,
                        (0, i, start, 0),
                        (N, i + Ho, start + 2 * (Wp - 1) + 1, C),
                        (1, 1, 2, 1),
                    )
                )
        return jnp.concatenate(pieces, axis=-1).astype(jnp.bfloat16)

    return build(0), build(1)


def conv_relu_pool(x, w, b):
    """x: (N,H,W,Cin) NHWC; w: (kh,kw,Cin,Cout); b: (Cout,).  relu(conv)+pool, NHWC bf16."""
    kh, kw, cin, cout = w.shape
    N, H, W, _ = x.shape
    Ho, Wo = H - kh + 1, W - kw + 1
    Hp, Wp = Ho // 2, Wo // 2
    K = kh * kw * cin

    xe, xo = _im2col_even_odd(x, kh, kw)
    wm = w.reshape(K, cout).astype(jnp.bfloat16)
    bm = b.reshape(1, cout).astype(jnp.float32)

    return pl.pallas_call(
        functools.partial(_conv_relu_pool_kernel, hp_count=Hp),
        out_shape=jax.ShapeDtypeStruct((N, Hp, Wp, cout), jnp.bfloat16),
        grid=(N,),
        in_specs=[
            pl.BlockSpec((None, Ho, Wp, K), lambda n: (n, 0, 0, 0)),
            pl.BlockSpec((None, Ho, Wp, K), lambda n: (n, 0, 0, 0)),
            pl.BlockSpec((K, cout), lambda n: (0, 0)),
            pl.BlockSpec((1, cout), lambda n: (0, 0)),
        ],
        out_specs=pl.BlockSpec((None, Hp, Wp, cout), lambda n: (n, 0, 0, 0)),
        compiler_params=pltpu.CompilerParams(dimension_semantics=("parallel",)),
    )(xe, xo, wm, bm)


def dense_sigmoid_head(x, wd, bd, wo, bo):
    """x: (N, F) -> sigmoid(relu(x @ wd + bd) @ wo + bo) : (N, 1)."""
    N = x.shape[0]
    return pl.pallas_call(
        _head_kernel,
        out_shape=jax.ShapeDtypeStruct((N, wo.shape[1]), jnp.float32),
    )(
        x.astype(jnp.bfloat16),
        wd.astype(jnp.bfloat16),
        bd.reshape(1, -1).astype(jnp.float32),
        wo.astype(jnp.float32),
        bo.reshape(1, -1).astype(jnp.float32),
    )


# ----------------------------------------------------------------------------
# Model
# ----------------------------------------------------------------------------
def init_params(key):
    ks = jax.random.split(key, 12)

    def conv_p(kw_, kb_, cin, cout, k=3):
        scale = 1.0 / jnp.sqrt(cin * k * k)
        return (
            jax.random.uniform(kw_, (k, k, cin, cout), jnp.float32, -scale, scale),
            jax.random.uniform(kb_, (cout,), jnp.float32, -scale, scale),
        )

    def lin_p(kw_, kb_, fin, fout):
        scale = 1.0 / jnp.sqrt(fin)
        return (
            jax.random.uniform(kw_, (fin, fout), jnp.float32, -scale, scale),
            jax.random.uniform(kb_, (fout,), jnp.float32, -scale, scale),
        )

    return {
        "conv1": conv_p(ks[0], ks[1], 3, 32),
        "conv2": conv_p(ks[2], ks[3], 32, 32),
        "conv3": conv_p(ks[4], ks[5], 32, 32),
        "conv4": conv_p(ks[6], ks[7], 32, 32),
        "dense": lin_p(ks[8], ks[9], 32, 128),   # final feature map is 32x1x1 for 48x48 input
        "output": lin_p(ks[10], ks[11], 128, 1),
    }


@jax.jit
def bt_model_forward(params, x_nchw):
    # PyTorch input is NCHW; convert to NHWC (channels on the TPU lane dim).
    x = jnp.transpose(x_nchw, (0, 2, 3, 1))

    for name in ("conv1", "conv2", "conv3", "conv4"):
        w, b = params[name]
        x = conv_relu_pool(x, w, b)   # conv + ReLU + MaxPool2d(2) in one Pallas kernel
        # Dropout2d(0.2): identity in eval mode.

    # Flatten (PyTorch NCHW order; final map is 1x1 spatial so the order is moot).
    x = x.reshape(x.shape[0], -1)

    wd, bd = params["dense"]
    wo, bo = params["output"]
    return dense_sigmoid_head(x, wd, bd, wo, bo)   # dense+ReLU and output+sigmoid fused


if __name__ == "__main__":
    key = jax.random.PRNGKey(0)
    pkey, xkey = jax.random.split(key)
    params = init_params(pkey)

    # 48x48 input: 4x (3x3 valid conv -> 2x2 pool) reduces to 1x1x32, matching dense in=32.
    x = jax.random.normal(xkey, (2, 3, 48, 48), dtype=jnp.float32)  # NCHW like PyTorch

    out = jax.block_until_ready(bt_model_forward(params, x))
    assert out.shape == (2, 1)
    assert bool(jnp.all((out >= 0.0) & (out <= 1.0)))
    print("KERNEL_OK")
</pallas_src>

<mosaic_0001>
module attributes {stable_mosaic.version = 11 : i64} {
  func.func @_conv_relu_pool_kernel(%arg0: i32, %arg1: memref<1x46x23x27xbf16, #tpu.memory_space<vmem>>, %arg2: memref<1x46x23x27xbf16, #tpu.memory_space<vmem>>, %arg3: memref<27x32xbf16, #tpu.memory_space<vmem>>, %arg4: memref<1x32xf32, #tpu.memory_space<vmem>>, %arg5: memref<1x23x23x32xbf16, #tpu.memory_space<vmem>>) attributes {dimension_semantics = [#tpu.dimension_semantics<parallel>], iteration_bounds = array<i64: 2>, scalar_prefetch = 0 : i64, scratch_operands = 0 : i64, tpu.core_type = #tpu.core_type<tc>, window_params = [{transform_indices = @transform_0, window_bounds = array<i64: 1, 46, 23, 27>}, {transform_indices = @transform_1, window_bounds = array<i64: 1, 46, 23, 27>}, {pipeline_mode = #tpu.pipeline_mode<synchronous>, transform_indices = @transform_2, window_bounds = array<i64: 27, 32>}, {pipeline_mode = #tpu.pipeline_mode<synchronous>, transform_indices = @transform_3, window_bounds = array<i64: 1, 32>}, {transform_indices = @transform_4, window_bounds = array<i64: 1, 23, 23, 32>}]} {
    %c0 = arith.constant 0 : index
    %c0_0 = arith.constant 0 : index
    %0 = vector.load %arg3[%c0, %c0_0] : memref<27x32xbf16, #tpu.memory_space<vmem>>, vector<27x32xbf16>
    %c0_1 = arith.constant 0 : index
    %c0_2 = arith.constant 0 : index
    %1 = vector.load %arg4[%c0_1, %c0_2] : memref<1x32xf32, #tpu.memory_space<vmem>>, vector<1x32xf32>
    %c0_i32 = arith.constant 0 : i32
    %c23_i32 = arith.constant 23 : i32
    %2 = arith.addi %c0_i32, %c23_i32 : i32
    %c1_i32 = arith.constant 1 : i32
    scf.for %arg6 = %c0_i32 to %2 step %c1_i32  : i32 {
      %c2_i32 = arith.constant 2 : i32
      %3 = arith.muli %c2_i32, %arg6 : i32
      %c1_i32_4 = arith.constant 1 : i32
      %4 = arith.addi %3, %c1_i32_4 : i32
      %c0_5 = arith.constant 0 : index
      %5 = arith.index_cast %3 : i32 to index
      %c0_6 = arith.constant 0 : index
      %c0_7 = arith.constant 0 : index
      %6 = vector.load %arg1[%c0_5, %5, %c0_6, %c0_7] : memref<1x46x23x27xbf16, #tpu.memory_space<vmem>>, vector<1x1x23x27xbf16>
      %7 = vector.shape_cast %6 : vector<1x1x23x27xbf16> to vector<23x27xbf16>
      %cst = arith.constant dense<0.000000e+00> : vector<23x32xf32>
      %8 = tpu.matmul %7, %0, %cst {dimension_numbers = #tpu.dot_dimension_numbers<[1], [0], [0], [1], [0, 0, 1, 1], [], []>} : vector<23x27xbf16>, vector<27x32xbf16>, vector<23x32xf32> -> vector<23x32xf32>
      %c0_8 = arith.constant 0 : index
      %9 = arith.index_cast %3 : i32 to index
      %c0_9 = arith.constant 0 : index
      %c0_10 = arith.constant 0 : index
      %10 = vector.load %arg2[%c0_8, %9, %c0_9, %c0_10] : memref<1x46x23x27xbf16, #tpu.memory_space<vmem>>, vector<1x1x23x27xbf16>
      %11 = vector.shape_cast %10 : vector<1x1x23x27xbf16> to vector<23x27xbf16>
      %cst_11 = arith.constant dense<0.000000e+00> : vector<23x32xf32>
      %12 = tpu.matmul %11, %0, %cst_11 {dimension_numbers = #tpu.dot_dimension_numbers<[1], [0], [0], [1], [0, 0, 1, 1], [], []>} : vector<23x27xbf16>, vector<27x32xbf16>, vector<23x32xf32> -> vector<23x32xf32>
      %c0_12 = arith.constant 0 : index
      %13 = arith.index_cast %4 : i32 to index
      %c0_13 = arith.constant 0 : index
      %c0_14 = arith.constant 0 : index
      %14 = vector.load %arg1[%c0_12, %13, %c0_13, %c0_14] : memref<1x46x23x27xbf16, #tpu.memory_space<vmem>>, vector<1x1x23x27xbf16>
      %15 = vector.shape_cast %14 : vector<1x1x23x27xbf16> to vector<23x27xbf16>
      %cst_15 = arith.constant dense<0.000000e+00> : vector<23x32xf32>
      %16 = tpu.matmul %15, %0, %cst_15 {dimension_numbers = #tpu.dot_dimension_numbers<[1], [0], [0], [1], [0, 0, 1, 1], [], []>} : vector<23x27xbf16>, vector<27x32xbf16>, vector<23x32xf32> -> vector<23x32xf32>
      %c0_16 = arith.constant 0 : index
      %17 = arith.index_cast %4 : i32 to index
      %c0_17 = arith.constant 0 : index
      %c0_18 = arith.constant 0 : index
      %18 = vector.load %arg2[%c0_16, %17, %c0_17, %c0_18] : memref<1x46x23x27xbf16, #tpu.memory_space<vmem>>, vector<1x1x23x27xbf16>
      %19 = vector.shape_cast %18 : vector<1x1x23x27xbf16> to vector<23x27xbf16>
      %cst_19 = arith.constant dense<0.000000e+00> : vector<23x32xf32>
      %20 = tpu.matmul %19, %0, %cst_19 {dimension_numbers = #tpu.dot_dimension_numbers<[1], [0], [0], [1], [0, 0, 1, 1], [], []>} : vector<23x27xbf16>, vector<27x32xbf16>, vector<23x32xf32> -> vector<23x32xf32>
      %21 = arith.maximumf %8, %12 : vector<23x32xf32>
      %22 = arith.maximumf %16, %20 : vector<23x32xf32>
      %23 = arith.maximumf %21, %22 : vector<23x32xf32>
      %24 = vector.broadcast %1 : vector<1x32xf32> to vector<23x32xf32>
      %25 = arith.addf %23, %24 : vector<23x32xf32>
      %cst_20 = arith.constant 0.000000e+00 : f32
      %26 = vector.broadcast %cst_20 : f32 to vector<23x32xf32>
      %27 = arith.maximumf %25, %26 : vector<23x32xf32>
      %28 = arith.truncf %27 : vector<23x32xf32> to vector<23x32xbf16>
      %c0_21 = arith.constant 0 : index
      %29 = arith.index_cast %arg6 : i32 to index
      %c0_22 = arith.constant 0 : index
      %c0_23 = arith.constant 0 : index
      %30 = vector.load %arg5[%c0_21, %29, %c0_22, %c0_23] : memref<1x23x23x32xbf16, #tpu.memory_space<vmem>>, vector<1x1x23x32xbf16>
      %31 = vector.shape_cast %30 : vector<1x1x23x32xbf16> to vector<23x32xbf16>
      %32 = vector.shape_cast %28 : vector<23x32xbf16> to vector<1x1x23x32xbf16>
      tpu.vector_store %arg5[%c0_21, %29, %c0_22, %c0_23], %32 {strides = array<i32>} : memref<1x23x23x32xbf16, #tpu.memory_space<vmem>>, vector<1x1x23x32xbf16>,
    }
    %c23_i32_3 = arith.constant 23 : i32
    return
  }
  func.func @transform_0(%arg0: i32) -> (i32, i32, i32, i32) {
    %c0_i32 = arith.constant 0 : i32
    %c0_i32_0 = arith.constant 0 : i32
    %c0_i32_1 = arith.constant 0 : i32
    %c0_i32_2 = arith.constant 0 : i32
    return %arg0, %c0_i32, %c0_i32_0, %c0_i32_1 : i32, i32, i32, i32
  }
  func.func @transform_1(%arg0: i32) -> (i32, i32, i32, i32) {
    %c0_i32 = arith.constant 0 : i32
    %c0_i32_0 = arith.constant 0 : i32
    %c0_i32_1 = arith.constant 0 : i32
    %c0_i32_2 = arith.constant 0 : i32
    return %arg0, %c0_i32, %c0_i32_0, %c0_i32_1 : i32, i32, i32, i32
  }
  func.func @transform_2(%arg0: i32) -> (i32, i32) {
    %c0_i32 = arith.constant 0 : i32
    %c0_i32_0 = arith.constant 0 : i32
    %c0_i32_1 = arith.constant 0 : i32
    return %c0_i32, %c0_i32_0 : i32, i32
  }
  func.func @transform_3(%arg0: i32) -> (i32, i32) {
    %c0_i32 = arith.constant 0 : i32
    %c0_i32_0 = arith.constant 0 : i32
    %c0_i32_1 = arith.constant 0 : i32
    return %c0_i32, %c0_i32_0 : i32, i32
  }
  func.func @transform_4(%arg0: i32) -> (i32, i32, i32, i32) {
    %c0_i32 = arith.constant 0 : i32
    %c0_i32_0 = arith.constant 0 : i32
    %c0_i32_1 = arith.constant 0 : i32
    %c0_i32_2 = arith.constant 0 : i32
    return %arg0, %c0_i32, %c0_i32_0, %c0_i32_1 : i32, i32, i32, i32
  }
}

module attributes {stable_mosaic.version = 11 : i64} {
  func.func @_conv_relu_pool_kernel(%arg0: i32, %arg1: memref<1x21x10x288xbf16, #tpu.memory_space<vmem>>, %arg2: memref<1x21x10x288xbf16, #tpu.memory_space<vmem>>, %arg3: memref<288x32xbf16, #tpu.memory_space<vmem>>, %arg4: memref<1x32xf32, #tpu.memory_space<vmem>>, %arg5: memref<1x10x10x32xbf16, #tpu.memory_space<vmem>>) attributes {dimension_semantics = [#tpu.dimension_semantics<parallel>], iteration_bounds = array<i64: 2>, scalar_prefetch = 0 : i64, scratch_operands = 0 : i64, tpu.core_type = #tpu.core_type<tc>, window_params = [{transform_indices = @transform_0, window_bounds = array<i64: 1, 21, 10, 288>}, {transform_indices = @transform_1, window_bounds = array<i64: 1, 21, 10, 288>}, {pipeline_mode = #tpu.pipeline_mode<synchronous>, transform_indices = @transform_2, window_bounds = array<i64: 288, 32>}, {pipeline_mode = #tpu.pipeline_mode<synchronous>, transform_indices = @transform_3, window_bounds = array<i64: 1, 32>}, {transform_indices = @transform_4, window_bounds = array<i64: 1, 10, 10, 32>}]} {
    %c0 = arith.constant 0 : index
    %c0_0 = arith.constant 0 : index
    %0 = vector.load %arg3[%c0, %c0_0] : memref<288x32xbf16, #tpu.memory_space<vmem>>, vector<288x32xbf16>
    %c0_1 = arith.constant 0 : index
    %c0_2 = arith.constant 0 : index
    %1 = vector.load %arg4[%c0_1, %c0_2] : memref<1x32xf32, #tpu.memory_space<vmem>>, vector<1x32xf32>
    %c0_i32 = arith.constant 0 : i32
    %c10_i32 = arith.constant 10 : i32
    %2 = arith.addi %c0_i32, %c10_i32 : i32
    %c1_i32 = arith.constant 1 : i32
    scf.for %arg6 = %c0_i32 to %2 step %c1_i32  : i32 {
      %c2_i32 = arith.constant 2 : i32
      %3 = arith.muli %c2_i32, %arg6 : i32
      %c1_i32_4 = arith.constant 1 : i32
      %4 = arith.addi %3, %c1_i32_4 : i32
      %c0_5 = arith.constant 0 : index
      %5 = arith.index_cast %3 : i32 to index
      %c0_6 = arith.constant 0 : index
      %c0_7 = arith.constant 0 : index
      %6 = vector.load %arg1[%c0_5, %5, %c0_6, %c0_7] : memref<1x21x10x288xbf16, #tpu.memory_space<vmem>>, vector<1x1x10x288xbf16>
      %7 = vector.shape_cast %6 : vector<1x1x10x288xbf16> to vector<10x288xbf16>
      %cst = arith.constant dense<0.000000e+00> : vector<10x32xf32>
      %8 = tpu.matmul %7, %0, %cst {dimension_numbers = #tpu.dot_dimension_numbers<[1], [0], [0], [1], [0, 0, 1, 1], [], []>} : vector<10x288xbf16>, vector<288x32xbf16>, vector<10x32xf32> -> vector<10x32xf32>
      %c0_8 = arith.constant 0 : index
      %9 = arith.index_cast %3 : i32 to index
      %c0_9 = arith.constant 0 : index
      %c0_10 = arith.constant 0 : index
      %10 = vector.load %arg2[%c0_8, %9, %c0_9, %c0_10] : memref<1x21x10x288xbf16, #tpu.memory_space<vmem>>, vector<1x1x10x288xbf16>
      %11 = vector.shape_cast %10 : vector<1x1x10x288xbf16> to vector<10x288xbf16>
      %cst_11 = arith.constant dense<0.000000e+00> : vector<10x32xf32>
      %12 = tpu.matmul %11, %0, %cst_11 {dimension_numbers = #tpu.dot_dimension_numbers<[1], [0], [0], [1], [0, 0, 1, 1], [], []>} : vector<10x288xbf16>, vector<288x32xbf16>, vector<10x32xf32> -> vector<10x32xf32>
      %c0_12 = arith.constant 0 : index
      %13 = arith.index_cast %4 : i32 to index
      %c0_13 = arith.constant 0 : index
      %c0_14 = arith.constant 0 : index
      %14 = vector.load %arg1[%c0_12, %13, %c0_13, %c0_14] : memref<1x21x10x288xbf16, #tpu.memory_space<vmem>>, vector<1x1x10x288xbf16>
      %15 = vector.shape_cast %14 : vector<1x1x10x288xbf16> to vector<10x288xbf16>
      %cst_15 = arith.constant dense<0.000000e+00> : vector<10x32xf32>
      %16 = tpu.matmul %15, %0, %cst_15 {dimension_numbers = #tpu.dot_dimension_numbers<[1], [0], [0], [1], [0, 0, 1, 1], [], []>} : vector<10x288xbf16>, vector<288x32xbf16>, vector<10x32xf32> -> vector<10x32xf32>
      %c0_16 = arith.constant 0 : index
      %17 = arith.index_cast %4 : i32 to index
      %c0_17 = arith.constant 0 : index
      %c0_18 = arith.constant 0 : index
      %18 = vector.load %arg2[%c0_16, %17, %c0_17, %c0_18] : memref<1x21x10x288xbf16, #tpu.memory_space<vmem>>, vector<1x1x10x288xbf16>
      %19 = vector.shape_cast %18 : vector<1x1x10x288xbf16> to vector<10x288xbf16>
      %cst_19 = arith.constant dense<0.000000e+00> : vector<10x32xf32>
      %20 = tpu.matmul %19, %0, %cst_19 {dimension_numbers = #tpu.dot_dimension_numbers<[1], [0], [0], [1], [0, 0, 1, 1], [], []>} : vector<10x288xbf16>, vector<288x32xbf16>, vector<10x32xf32> -> vector<10x32xf32>
      %21 = arith.maximumf %8, %12 : vector<10x32xf32>
      %22 = arith.maximumf %16, %20 : vector<10x32xf32>
      %23 = arith.maximumf %21, %22 : vector<10x32xf32>
      %24 = vector.broadcast %1 : vector<1x32xf32> to vector<10x32xf32>
      %25 = arith.addf %23, %24 : vector<10x32xf32>
      %cst_20 = arith.constant 0.000000e+00 : f32
      %26 = vector.broadcast %cst_20 : f32 to vector<10x32xf32>
      %27 = arith.maximumf %25, %26 : vector<10x32xf32>
      %28 = arith.truncf %27 : vector<10x32xf32> to vector<10x32xbf16>
      %c0_21 = arith.constant 0 : index
      %29 = arith.index_cast %arg6 : i32 to index
      %c0_22 = arith.constant 0 : index
      %c0_23 = arith.constant 0 : index
      %30 = vector.load %arg5[%c0_21, %29, %c0_22, %c0_23] : memref<1x10x10x32xbf16, #tpu.memory_space<vmem>>, vector<1x1x10x32xbf16>
      %31 = vector.shape_cast %30 : vector<1x1x10x32xbf16> to vector<10x32xbf16>
      %32 = vector.shape_cast %28 : vector<10x32xbf16> to vector<1x1x10x32xbf16>
      tpu.vector_store %arg5[%c0_21, %29, %c0_22, %c0_23], %32 {strides = array<i32>} : memref<1x10x10x32xbf16, #tpu.memory_space<vmem>>, vector<1x1x10x32xbf16>,
    }
    %c10_i32_3 = arith.constant 10 : i32
    return
  }
  func.func @transform_0(%arg0: i32) -> (i32, i32, i32, i32) {
    %c0_i32 = arith.constant 0 : i32
    %c0_i32_0 = arith.constant 0 : i32
    %c0_i32_1 = arith.constant 0 : i32
    %c0_i32_2 = arith.constant 0 : i32
    return %arg0, %c0_i32, %c0_i32_0, %c0_i32_1 : i32, i32, i32, i32
  }
  func.func @transform_1(%arg0: i32) -> (i32, i32, i32, i32) {
    %c0_i32 = arith.constant 0 : i32
    %c0_i32_0 = arith.constant 0 : i32
    %c0_i32_1 = arith.constant 0 : i32
    %c0_i32_2 = arith.constant 0 : i32
    return %arg0, %c0_i32, %c0_i32_0, %c0_i32_1 : i32, i32, i32, i32
  }
  func.func @transform_2(%arg0: i32) -> (i32, i32) {
    %c0_i32 = arith.constant 0 : i32
    %c0_i32_0 = arith.constant 0 : i32
    %c0_i32_1 = arith.constant 0 : i32
    return %c0_i32, %c0_i32_0 : i32, i32
  }
  func.func @transform_3(%arg0: i32) -> (i32, i32) {
    %c0_i32 = arith.constant 0 : i32
    %c0_i32_0 = arith.constant 0 : i32
    %c0_i32_1 = arith.constant 0 : i32
    return %c0_i32, %c0_i32_0 : i32, i32
  }
  func.func @transform_4(%arg0: i32) -> (i32, i32, i32, i32) {
    %c0_i32 = arith.constant 0 : i32
    %c0_i32_0 = arith.constant 0 : i32
    %c0_i32_1 = arith.constant 0 : i32
    %c0_i32_2 = arith.constant 0 : i32
    return %arg0, %c0_i32, %c0_i32_0, %c0_i32_1 : i32, i32, i32, i32
  }
}

module attributes {stable_mosaic.version = 11 : i64} {
  func.func @_conv_relu_pool_kernel(%arg0: i32, %arg1: memref<1x8x4x288xbf16, #tpu.memory_space<vmem>>, %arg2: memref<1x8x4x288xbf16, #tpu.memory_space<vmem>>, %arg3: memref<288x32xbf16, #tpu.memory_space<vmem>>, %arg4: memref<1x32xf32, #tpu.memory_space<vmem>>, %arg5: memref<1x4x4x32xbf16, #tpu.memory_space<vmem>>) attributes {dimension_semantics = [#tpu.dimension_semantics<parallel>], iteration_bounds = array<i64: 2>, scalar_prefetch = 0 : i64, scratch_operands = 0 : i64, tpu.core_type = #tpu.core_type<tc>, window_params = [{transform_indices = @transform_0, window_bounds = array<i64: 1, 8, 4, 288>}, {transform_indices = @transform_1, window_bounds = array<i64: 1, 8, 4, 288>}, {pipeline_mode = #tpu.pipeline_mode<synchronous>, transform_indices = @transform_2, window_bounds = array<i64: 288, 32>}, {pipeline_mode = #tpu.pipeline_mode<synchronous>, transform_indices = @transform_3, window_bounds = array<i64: 1, 32>}, {transform_indices = @transform_4, window_bounds = array<i64: 1, 4, 4, 32>}]} {
    %c0 = arith.constant 0 : index
    %c0_0 = arith.constant 0 : index
    %0 = vector.load %arg3[%c0, %c0_0] : memref<288x32xbf16, #tpu.memory_space<vmem>>, vector<288x32xbf16>
    %c0_1 = arith.constant 0 : index
    %c0_2 = arith.constant 0 : index
    %1 = vector.load %arg4[%c0_1, %c0_2] : memref<1x32xf32, #tpu.memory_space<vmem>>, vector<1x32xf32>
    %c0_i32 = arith.constant 0 : i32
    %c2_i32 = arith.constant 2 : i32
    %2 = arith.muli %c2_i32, %c0_i32 : i32
    %c1_i32 = arith.constant 1 : i32
    %3 = arith.addi %2, %c1_i32 : i32
    %c0_3 = arith.constant 0 : index
    %4 = arith.index_cast %2 : i32 to index
    %c0_4 = arith.constant 0 : index
    %c0_5 = arith.constant 0 : index
    %5 = vector.load %arg1[%c0_3, %4, %c0_4, %c0_5] : memref<1x8x4x288xbf16, #tpu.memory_space<vmem>>, vector<1x1x4x288xbf16>
    %6 = vector.shape_cast %5 : vector<1x1x4x288xbf16> to vector<4x288xbf16>
    %cst = arith.constant dense<0.000000e+00> : vector<4x32xf32>
    %7 = tpu.matmul %6, %0, %cst {dimension_numbers = #tpu.dot_dimension_numbers<[1], [0], [0], [1], [0, 0, 1, 1], [], []>} : vector<4x288xbf16>, vector<288x32xbf16>, vector<4x32xf32> -> vector<4x32xf32>
    %c0_6 = arith.constant 0 : index
    %8 = arith.index_cast %2 : i32 to index
    %c0_7 = arith.constant 0 : index
    %c0_8 = arith.constant 0 : index
    %9 = vector.load %arg2[%c0_6, %8, %c0_7, %c0_8] : memref<1x8x4x288xbf16, #tpu.memory_space<vmem>>, vector<1x1x4x288xbf16>
    %10 = vector.shape_cast %9 : vector<1x1x4x288xbf16> to vector<4x288xbf16>
    %cst_9 = arith.constant dense<0.000000e+00> : vector<4x32xf32>
    %11 = tpu.matmul %10, %0, %cst_9 {dimension_numbers = #tpu.dot_dimension_numbers<[1], [0], [0], [1], [0, 0, 1, 1], [], []>} : vector<4x288xbf16>, vector<288x32xbf16>, vector<4x32xf32> -> vector<4x32xf32>
    %c0_10 = arith.constant 0 : index
    %12 = arith.index_cast %3 : i32 to index
    %c0_11 = arith.constant 0 : index
    %c0_12 = arith.constant 0 : index
    %13 = vector.load %arg1[%c0_10, %12, %c0_11, %c0_12] : memref<1x8x4x288xbf16, #tpu.memory_space<vmem>>, vector<1x1x4x288xbf16>
    %14 = vector.shape_cast %13 : vector<1x1x4x288xbf16> to vector<4x288xbf16>
    %cst_13 = arith.constant dense<0.000000e+00> : vector<4x32xf32>
    %15 = tpu.matmul %14, %0, %cst_13 {dimension_numbers = #tpu.dot_dimension_numbers<[1], [0], [0], [1], [0, 0, 1, 1], [], []>} : vector<4x288xbf16>, vector<288x32xbf16>, vector<4x32xf32> -> vector<4x32xf32>
    %c0_14 = arith.constant 0 : index
    %16 = arith.index_cast %3 : i32 to index
    %c0_15 = arith.constant 0 : index
    %c0_16 = arith.constant 0 : index
    %17 = vector.load %arg2[%c0_14, %16, %c0_15, %c0_16] : memref<1x8x4x288xbf16, #tpu.memory_space<vmem>>, vector<1x1x4x288xbf16>
    %18 = vector.shape_cast %17 : vector<1x1x4x288xbf16> to vector<4x288xbf16>
    %cst_17 = arith.constant dense<0.000000e+00> : vector<4x32xf32>
    %19 = tpu.matmul %18, %0, %cst_17 {dimension_numbers = #tpu.dot_dimension_numbers<[1], [0], [0], [1], [0, 0, 1, 1], [], []>} : vector<4x288xbf16>, vector<288x32xbf16>, vector<4x32xf32> -> vector<4x32xf32>
    %20 = arith.maximumf %7, %11 : vector<4x32xf32>
    %21 = arith.maximumf %15, %19 : vector<4x32xf32>
    %22 = arith.maximumf %20, %21 : vector<4x32xf32>
    %23 = vector.broadcast %1 : vector<1x32xf32> to vector<4x32xf32>
    %24 = arith.addf %22, %23 : vector<4x32xf32>
    %cst_18 = arith.constant 0.000000e+00 : f32
    %25 = vector.broadcast %cst_18 : f32 to vector<4x32xf32>
    %26 = arith.maximumf %24, %25 : vector<4x32xf32>
    %27 = arith.truncf %26 : vector<4x32xf32> to vector<4x32xbf16>
    %c0_19 = arith.constant 0 : index
    %28 = arith.index_cast %c0_i32 : i32 to index
    %c0_20 = arith.constant 0 : index
    %c0_21 = arith.constant 0 : index
    %29 = vector.load %arg5[%c0_19, %28, %c0_20, %c0_21] : memref<1x4x4x32xbf16, #tpu.memory_space<vmem>>, vector<1x1x4x32xbf16>
    %30 = vector.shape_cast %29 : vector<1x1x4x32xbf16> to vector<4x32xbf16>
    %31 = vector.shape_cast %27 : vector<4x32xbf16> to vector<1x1x4x32xbf16>
    tpu.vector_store %arg5[%c0_19, %28, %c0_20, %c0_21], %31 {strides = array<i32>} : memref<1x4x4x32xbf16, #tpu.memory_space<vmem>>, vector<1x1x4x32xbf16>,
    %c1_i32_22 = arith.constant 1 : i32
    %c2_i32_23 = arith.constant 2 : i32
    %32 = arith.muli %c2_i32_23, %c1_i32_22 : i32
    %c1_i32_24 = arith.constant 1 : i32
    %33 = arith.addi %32, %c1_i32_24 : i32
    %c0_25 = arith.constant 0 : index
    %34 = arith.index_cast %32 : i32 to index
    %c0_26 = arith.constant 0 : index
    %c0_27 = arith.constant 0 : index
    %35 = vector.load %arg1[%c0_25, %34, %c0_26, %c0_27] : memref<1x8x4x288xbf16, #tpu.memory_space<vmem>>, vector<1x1x4x288xbf16>
    %36 = vector.shape_cast %35 : vector<1x1x4x288xbf16> to vector<4x288xbf16>
    %cst_28 = arith.constant dense<0.000000e+00> : vector<4x32xf32>
    %37 = tpu.matmul %36, %0, %cst_28 {dimension_numbers = #tpu.dot_dimension_numbers<[1], [0], [0], [1], [0, 0, 1, 1], [], []>} : vector<4x288xbf16>, vector<288x32xbf16>, vector<4x32xf32> -> vector<4x32xf32>
    %c0_29 = arith.constant 0 : index
    %38 = arith.index_cast %32 : i32 to index
    %c0_30 = arith.constant 0 : index
    %c0_31 = arith.constant 0 : index
    %39 = vector.load %arg2[%c0_29, %38, %c0_30, %c0_31] : memref<1x8x4x288xbf16, #tpu.memory_space<vmem>>, vector<1x1x4x288xbf16>
    %40 = vector.shape_cast %39 : vector<1x1x4x288xbf16> to vector<4x288xbf16>
    %cst_32 = arith.constant dense<0.000000e+00> : vector<4x32xf32>
    %41 = tpu.matmul %40, %0, %cst_32 {dimension_numbers = #tpu.dot_dimension_numbers<[1], [0], [0], [1], [0, 0, 1, 1], [], []>} : vector<4x288xbf16>, vector<288x32xbf16>, vector<4x32xf32> -> vector<4x32xf32>
    %c0_33 = arith.constant 0 : index
    %42 = arith.index_cast %33 : i32 to index
    %c0_34 = arith.constant 0 : index
    %c0_35 = arith.constant 0 : index
    %43 = vector.load %arg1[%c0_33, %42, %c0_34, %c0_35] : memref<1x8x4x288xbf16, #tpu.memory_space<vmem>>, vector<1x1x4x288xbf16>
    %44 = vector.shape_cast %43 : vector<1x1x4x288xbf16> to vector<4x288xbf16>
    %cst_36 = arith.constant dense<0.000000e+00> : vector<4x32xf32>
    %45 = tpu.matmul %44, %0, %cst_36 {dimension_numbers = #tpu.dot_dimension_numbers<[1], [0], [0], [1], [0, 0, 1, 1], [], []>} : vector<4x288xbf16>, vector<288x32xbf16>, vector<4x32xf32> -> vector<4x32xf32>
    %c0_37 = arith.constant 0 : index
    %46 = arith.index_cast %33 : i32 to index
    %c0_38 = arith.constant 0 : index
    %c0_39 = arith.constant 0 : index
    %47 = vector.load %arg2[%c0_37, %46, %c0_38, %c0_39] : memref<1x8x4x288xbf16, #tpu.memory_space<vmem>>, vector<1x1x4x288xbf16>
    %48 = vector.shape_cast %47 : vector<1x1x4x288xbf16> to vector<4x288xbf16>
    %cst_40 = arith.constant dense<0.000000e+00> : vector<4x32xf32>
    %49 = tpu.matmul %48, %0, %cst_40 {dimension_numbers = #tpu.dot_dimension_numbers<[1], [0], [0], [1], [0, 0, 1, 1], [], []>} : vector<4x288xbf16>, vector<288x32xbf16>, vector<4x32xf32> -> vector<4x32xf32>
    %50 = arith.maximumf %37, %41 : vector<4x32xf32>
    %51 = arith.maximumf %45, %49 : vector<4x32xf32>
    %52 = arith.maximumf %50, %51 : vector<4x32xf32>
    %53 = vector.broadcast %1 : vector<1x32xf32> to vector<4x32xf32>
    %54 = arith.addf %52, %53 : vector<4x32xf32>
    %cst_41 = arith.constant 0.000000e+00 : f32
    %55 = vector.broadcast %cst_41 : f32 to vector<4x32xf32>
    %56 = arith.maximumf %54, %55 : vector<4x32xf32>
    %57 = arith.truncf %56 : vector<4x32xf32> to vector<4x32xbf16>
    %c0_42 = arith.constant 0 : index
    %58 = arith.index_cast %c1_i32_22 : i32 to index
    %c0_43 = arith.constant 0 : index
    %c0_44 = arith.constant 0 : index
    %59 = vector.load %arg5[%c0_42, %58, %c0_43, %c0_44] : memref<1x4x4x32xbf16, #tpu.memory_space<vmem>>, vector<1x1x4x32xbf16>
    %60 = vector.shape_cast %59 : vector<1x1x4x32xbf16> to vector<4x32xbf16>
    %61 = vector.shape_cast %57 : vector<4x32xbf16> to vector<1x1x4x32xbf16>
    tpu.vector_store %arg5[%c0_42, %58, %c0_43, %c0_44], %61 {strides = array<i32>} : memref<1x4x4x32xbf16, #tpu.memory_space<vmem>>, vector<1x1x4x32xbf16>,
    %c2_i32_45 = arith.constant 2 : i32
    %c2_i32_46 = arith.constant 2 : i32
    %62 = arith.muli %c2_i32_46, %c2_i32_45 : i32
    %c1_i32_47 = arith.constant 1 : i32
    %63 = arith.addi %62, %c1_i32_47 : i32
    %c0_48 = arith.constant 0 : index
    %64 = arith.index_cast %62 : i32 to index
    %c0_49 = arith.constant 0 : index
    %c0_50 = arith.constant 0 : index
    %65 = vector.load %arg1[%c0_48, %64, %c0_49, %c0_50] : memref<1x8x4x288xbf16, #tpu.memory_space<vmem>>, vector<1x1x4x288xbf16>
    %66 = vector.shape_cast %65 : vector<1x1x4x288xbf16> to vector<4x288xbf16>
    %cst_51 = arith.constant dense<0.000000e+00> : vector<4x32xf32>
    %67 = tpu.matmul %66, %0, %cst_51 {dimension_numbers = #tpu.dot_dimension_numbers<[1], [0], [0], [1], [0, 0, 1, 1], [], []>} : vector<4x288xbf16>, vector<288x32xbf16>, vector<4x32xf32> -> vector<4x32xf32>
    %c0_52 = arith.constant 0 : index
    %68 = arith.index_cast %62 : i32 to index
    %c0_53 = arith.constant 0 : index
    %c0_54 = arith.constant 0 : index
    %69 = vector.load %arg2[%c0_52, %68, %c0_53, %c0_54] : memref<1x8x4x288xbf16, #tpu.memory_space<vmem>>, vector<1x1x4x288xbf16>
    %70 = vector.shape_cast %69 : vector<1x1x4x288xbf16> to vector<4x288xbf16>
    %cst_55 = arith.constant dense<0.000000e+00> : vector<4x32xf32>
    %71 = tpu.matmul %70, %0, %cst_55 {dimension_numbers = #tpu.dot_dimension_numbers<[1], [0], [0], [1], [0, 0, 1, 1], [], []>} : vector<4x288xbf16>, vector<288x32xbf16>, vector<4x32xf32> -> vector<4x32xf32>
    %c0_56 = arith.constant 0 : index
    %72 = arith.index_cast %63 : i32 to index
    %c0_57 = arith.constant 0 : index
    %c0_58 = arith.constant 0 : index
    %73 = vector.load %arg1[%c0_56, %72, %c0_57, %c0_58] : memref<1x8x4x288xbf16, #tpu.memory_space<vmem>>, vector<1x1x4x288xbf16>
    %74 = vector.shape_cast %73 : vector<1x1x4x288xbf16> to vector<4x288xbf16>
    %cst_59 = arith.constant dense<0.000000e+00> : vector<4x32xf32>
    %75 = tpu.matmul %74, %0, %cst_59 {dimension_numbers = #tpu.dot_dimension_numbers<[1], [0], [0], [1], [0, 0, 1, 1], [], []>} : vector<4x288xbf16>, vector<288x32xbf16>, vector<4x32xf32> -> vector<4x32xf32>
    %c0_60 = arith.constant 0 : index
    %76 = arith.index_cast %63 : i32 to index
    %c0_61 = arith.constant 0 : index
    %c0_62 = arith.constant 0 : index
    %77 = vector.load %arg2[%c0_60, %76, %c0_61, %c0_62] : memref<1x8x4x288xbf16, #tpu.memory_space<vmem>>, vector<1x1x4x288xbf16>
    %78 = vector.shape_cast %77 : vector<1x1x4x288xbf16> to vector<4x288xbf16>
    %cst_63 = arith.constant dense<0.000000e+00> : vector<4x32xf32>
    %79 = tpu.matmul %78, %0, %cst_63 {dimension_numbers = #tpu.dot_dimension_numbers<[1], [0], [0], [1], [0, 0, 1, 1], [], []>} : vector<4x288xbf16>, vector<288x32xbf16>, vector<4x32xf32> -> vector<4x32xf32>
    %80 = arith.maximumf %67, %71 : vector<4x32xf32>
    %81 = arith.maximumf %75, %79 : vector<4x32xf32>
    %82 = arith.maximumf %80, %81 : vector<4x32xf32>
    %83 = vector.broadcast %1 : vector<1x32xf32> to vector<4x32xf32>
    %84 = arith.addf %82, %83 : vector<4x32xf32>
    %cst_64 = arith.constant 0.000000e+00 : f32
    %85 = vector.broadcast %cst_64 : f32 to vector<4x32xf32>
    %86 = arith.maximumf %84, %85 : vector<4x32xf32>
    %87 = arith.truncf %86 : vector<4x32xf32> to vector<4x32xbf16>
    %c0_65 = arith.constant 0 : index
    %88 = arith.index_cast %c2_i32_45 : i32 to index
    %c0_66 = arith.constant 0 : index
    %c0_67 = arith.constant 0 : index
    %89 = vector.load %arg5[%c0_65, %88, %c0_66, %c0_67] : memref<1x4x4x32xbf16, #tpu.memory_space<vmem>>, vector<1x1x4x32xbf16>
    %90 = vector.shape_cast %89 : vector<1x1x4x32xbf16> to vector<4x32xbf16>
    %91 = vector.shape_cast %87 : vector<4x32xbf16> to vector<1x1x4x32xbf16>
    tpu.vector_store %arg5[%c0_65, %88, %c0_66, %c0_67], %91 {strides = array<i32>} : memref<1x4x4x32xbf16, #tpu.memory_space<vmem>>, vector<1x1x4x32xbf16>,
    %c3_i32 = arith.constant 3 : i32
    %c2_i32_68 = arith.constant 2 : i32
    %92 = arith.muli %c2_i32_68, %c3_i32 : i32
    %c1_i32_69 = arith.constant 1 : i32
    %93 = arith.addi %92, %c1_i32_69 : i32
    %c0_70 = arith.constant 0 : index
    %94 = arith.index_cast %92 : i32 to index
    %c0_71 = arith.constant 0 : index
    %c0_72 = arith.constant 0 : index
    %95 = vector.load %arg1[%c0_70, %94, %c0_71, %c0_72] : memref<1x8x4x288xbf16, #tpu.memory_space<vmem>>, vector<1x1x4x288xbf16>
    %96 = vector.shape_cast %95 : vector<1x1x4x288xbf16> to vector<4x288xbf16>
    %cst_73 = arith.constant dense<0.000000e+00> : vector<4x32xf32>
    %97 = tpu.matmul %96, %0, %cst_73 {dimension_numbers = #tpu.dot_dimension_numbers<[1], [0], [0], [1], [0, 0, 1, 1], [], []>} : vector<4x288xbf16>, vector<288x32xbf16>, vector<4x32xf32> -> vector<4x32xf32>
    %c0_74 = arith.constant 0 : index
    %98 = arith.index_cast %92 : i32 to index
    %c0_75 = arith.constant 0 : index
    %c0_76 = arith.constant 0 : index
    %99 = vector.load %arg2[%c0_74, %98, %c0_75, %c0_76] : memref<1x8x4x288xbf16, #tpu.memory_space<vmem>>, vector<1x1x4x288xbf16>
    %100 = vector.shape_cast %99 : vector<1x1x4x288xbf16> to vector<4x288xbf16>
    %cst_77 = arith.constant dense<0.000000e+00> : vector<4x32xf32>
    %101 = tpu.matmul %100, %0, %cst_77 {dimension_numbers = #tpu.dot_dimension_numbers<[1], [0], [0], [1], [0, 0, 1, 1], [], []>} : vector<4x288xbf16>, vector<288x32xbf16>, vector<4x32xf32> -> vector<4x32xf32>
    %c0_78 = arith.constant 0 : index
    %102 = arith.index_cast %93 : i32 to index
    %c0_79 = arith.constant 0 : index
    %c0_80 = arith.constant 0 : index
    %103 = vector.load %arg1[%c0_78, %102, %c0_79, %c0_80] : memref<1x8x4x288xbf16, #tpu.memory_space<vmem>>, vector<1x1x4x288xbf16>
    %104 = vector.shape_cast %103 : vector<1x1x4x288xbf16> to vector<4x288xbf16>
    %cst_81 = arith.constant dense<0.000000e+00> : vector<4x32xf32>
    %105 = tpu.matmul %104, %0, %cst_81 {dimension_numbers = #tpu.dot_dimension_numbers<[1], [0], [0], [1], [0, 0, 1, 1], [], []>} : vector<4x288xbf16>, vector<288x32xbf16>, vector<4x32xf32> -> vector<4x32xf32>
    %c0_82 = arith.constant 0 : index
    %106 = arith.index_cast %93 : i32 to index
    %c0_83 = arith.constant 0 : index
    %c0_84 = arith.constant 0 : index
    %107 = vector.load %arg2[%c0_82, %106, %c0_83, %c0_84] : memref<1x8x4x288xbf16, #tpu.memory_space<vmem>>, vector<1x1x4x288xbf16>
    %108 = vector.shape_cast %107 : vector<1x1x4x288xbf16> to vector<4x288xbf16>
    %cst_85 = arith.constant dense<0.000000e+00> : vector<4x32xf32>
    %109 = tpu.matmul %108, %0, %cst_85 {dimension_numbers = #tpu.dot_dimension_numbers<[1], [0], [0], [1], [0, 0, 1, 1], [], []>} : vector<4x288xbf16>, vector<288x32xbf16>, vector<4x32xf32> -> vector<4x32xf32>
    %110 = arith.maximumf %97, %101 : vector<4x32xf32>
    %111 = arith.maximumf %105, %109 : vector<4x32xf32>
    %112 = arith.maximumf %110, %111 : vector<4x32xf32>
    %113 = vector.broadcast %1 : vector<1x32xf32> to vector<4x32xf32>
    %114 = arith.addf %112, %113 : vector<4x32xf32>
    %cst_86 = arith.constant 0.000000e+00 : f32
    %115 = vector.broadcast %cst_86 : f32 to vector<4x32xf32>
    %116 = arith.maximumf %114, %115 : vector<4x32xf32>
    %117 = arith.truncf %116 : vector<4x32xf32> to vector<4x32xbf16>
    %c0_87 = arith.constant 0 : index
    %118 = arith.index_cast %c3_i32 : i32 to index
    %c0_88 = arith.constant 0 : index
    %c0_89 = arith.constant 0 : index
    %119 = vector.load %arg5[%c0_87, %118, %c0_88, %c0_89] : memref<1x4x4x32xbf16, #tpu.memory_space<vmem>>, vector<1x1x4x32xbf16>
    %120 = vector.shape_cast %119 : vector<1x1x4x32xbf16> to vector<4x32xbf16>
    %121 = vector.shape_cast %117 : vector<4x32xbf16> to vector<1x1x4x32xbf16>
    tpu.vector_store %arg5[%c0_87, %118, %c0_88, %c0_89], %121 {strides = array<i32>} : memref<1x4x4x32xbf16, #tpu.memory_space<vmem>>, vector<1x1x4x32xbf16>,
    %c4_i32 = arith.constant 4 : i32
    return
  }
  func.func @transform_0(%arg0: i32) -> (i32, i32, i32, i32) {
    %c0_i32 = arith.constant 0 : i32
    %c0_i32_0 = arith.constant 0 : i32
    %c0_i32_1 = arith.constant 0 : i32
    %c0_i32_2 = arith.constant 0 : i32
    return %arg0, %c0_i32, %c0_i32_0, %c0_i32_1 : i32, i32, i32, i32
  }
  func.func @transform_1(%arg0: i32) -> (i32, i32, i32, i32) {
    %c0_i32 = arith.constant 0 : i32
    %c0_i32_0 = arith.constant 0 : i32
    %c0_i32_1 = arith.constant 0 : i32
    %c0_i32_2 = arith.constant 0 : i32
    return %arg0, %c0_i32, %c0_i32_0, %c0_i32_1 : i32, i32, i32, i32
  }
  func.func @transform_2(%arg0: i32) -> (i32, i32) {
    %c0_i32 = arith.constant 0 : i32
    %c0_i32_0 = arith.constant 0 : i32
    %c0_i32_1 = arith.constant 0 : i32
    return %c0_i32, %c0_i32_0 : i32, i32
  }
  func.func @transform_3(%arg0: i32) -> (i32, i32) {
    %c0_i32 = arith.constant 0 : i32
    %c0_i32_0 = arith.constant 0 : i32
    %c0_i32_1 = arith.constant 0 : i32
    return %c0_i32, %c0_i32_0 : i32, i32
  }
  func.func @transform_4(%arg0: i32) -> (i32, i32, i32, i32) {
    %c0_i32 = arith.constant 0 : i32
    %c0_i32_0 = arith.constant 0 : i32
    %c0_i32_1 = arith.constant 0 : i32
    %c0_i32_2 = arith.constant 0 : i32
    return %arg0, %c0_i32, %c0_i32_0, %c0_i32_1 : i32, i32, i32, i32
  }
}

module attributes {stable_mosaic.version = 11 : i64} {
  func.func @_conv_relu_pool_kernel(%arg0: i32, %arg1: memref<1x2x1x288xbf16, #tpu.memory_space<vmem>>, %arg2: memref<1x2x1x288xbf16, #tpu.memory_space<vmem>>, %arg3: memref<288x32xbf16, #tpu.memory_space<vmem>>, %arg4: memref<1x32xf32, #tpu.memory_space<vmem>>, %arg5: memref<1x1x1x32xbf16, #tpu.memory_space<vmem>>) attributes {dimension_semantics = [#tpu.dimension_semantics<parallel>], iteration_bounds = array<i64: 2>, scalar_prefetch = 0 : i64, scratch_operands = 0 : i64, tpu.core_type = #tpu.core_type<tc>, window_params = [{transform_indices = @transform_0, window_bounds = array<i64: 1, 2, 1, 288>}, {transform_indices = @transform_1, window_bounds = array<i64: 1, 2, 1, 288>}, {pipeline_mode = #tpu.pipeline_mode<synchronous>, transform_indices = @transform_2, window_bounds = array<i64: 288, 32>}, {pipeline_mode = #tpu.pipeline_mode<synchronous>, transform_indices = @transform_3, window_bounds = array<i64: 1, 32>}, {transform_indices = @transform_4, window_bounds = array<i64: 1, 1, 1, 32>}]} {
    %c0 = arith.constant 0 : index
    %c0_0 = arith.constant 0 : index
    %0 = vector.load %arg3[%c0, %c0_0] : memref<288x32xbf16, #tpu.memory_space<vmem>>, vector<288x32xbf16>
    %c0_1 = arith.constant 0 : index
    %c0_2 = arith.constant 0 : index
    %1 = vector.load %arg4[%c0_1, %c0_2] : memref<1x32xf32, #tpu.memory_space<vmem>>, vector<1x32xf32>
    %c0_i32 = arith.constant 0 : i32
    %c2_i32 = arith.constant 2 : i32
    %2 = arith.muli %c2_i32, %c0_i32 : i32
    %c1_i32 = arith.constant 1 : i32
    %3 = arith.addi %2, %c1_i32 : i32
    %c0_3 = arith.constant 0 : index
    %4 = arith.index_cast %2 : i32 to index
    %c0_4 = arith.constant 0 : index
    %c0_5 = arith.constant 0 : index
    %5 = vector.load %arg1[%c0_3, %4, %c0_4, %c0_5] : memref<1x2x1x288xbf16, #tpu.memory_space<vmem>>, vector<1x1x1x288xbf16>
    %6 = vector.shape_cast %5 : vector<1x1x1x288xbf16> to vector<1x288xbf16>
    %cst = arith.constant dense<0.000000e+00> : vector<1x32xf32>
    %7 = tpu.matmul %6, %0, %cst {dimension_numbers = #tpu.dot_dimension_numbers<[1], [0], [0], [1], [0, 0, 1, 1], [], []>} : vector<1x288xbf16>, vector<288x32xbf16>, vector<1x32xf32> -> vector<1x32xf32>
    %c0_6 = arith.constant 0 : index
    %8 = arith.index_cast %2 : i32 to index
    %c0_7 = arith.constant 0 : index
    %c0_8 = arith.constant 0 : index
    %9 = vector.load %arg2[%c0_6, %8, %c0_7, %c0_8] : memref<1x2x1x288xbf16, #tpu.memory_space<vmem>>, vector<1x1x1x288xbf16>
    %10 = vector.shape_cast %9 : vector<1x1x1x288xbf16> to vector<1x288xbf16>
    %cst_9 = arith.constant dense<0.000000e+00> : vector<1x32xf32>
    %11 = tpu.matmul %10, %0, %cst_9 {dimension_numbers = #tpu.dot_dimension_numbers<[1], [0], [0], [1], [0, 0, 1, 1], [], []>} : vector<1x288xbf16>, vector<288x32xbf16>, vector<1x32xf32> -> vector<1x32xf32>
    %c0_10 = arith.constant 0 : index
    %12 = arith.index_cast %3 : i32 to index
    %c0_11 = arith.constant 0 : index
    %c0_12 = arith.constant 0 : index
    %13 = vector.load %arg1[%c0_10, %12, %c0_11, %c0_12] : memref<1x2x1x288xbf16, #tpu.memory_space<vmem>>, vector<1x1x1x288xbf16>
    %14 = vector.shape_cast %13 : vector<1x1x1x288xbf16> to vector<1x288xbf16>
    %cst_13 = arith.constant dense<0.000000e+00> : vector<1x32xf32>
    %15 = tpu.matmul %14, %0, %cst_13 {dimension_numbers = #tpu.dot_dimension_numbers<[1], [0], [0], [1], [0, 0, 1, 1], [], []>} : vector<1x288xbf16>, vector<288x32xbf16>, vector<1x32xf32> -> vector<1x32xf32>
    %c0_14 = arith.constant 0 : index
    %16 = arith.index_cast %3 : i32 to index
    %c0_15 = arith.constant 0 : index
    %c0_16 = arith.constant 0 : index
    %17 = vector.load %arg2[%c0_14, %16, %c0_15, %c0_16] : memref<1x2x1x288xbf16, #tpu.memory_space<vmem>>, vector<1x1x1x288xbf16>
    %18 = vector.shape_cast %17 : vector<1x1x1x288xbf16> to vector<1x288xbf16>
    %cst_17 = arith.constant dense<0.000000e+00> : vector<1x32xf32>
    %19 = tpu.matmul %18, %0, %cst_17 {dimension_numbers = #tpu.dot_dimension_numbers<[1], [0], [0], [1], [0, 0, 1, 1], [], []>} : vector<1x288xbf16>, vector<288x32xbf16>, vector<1x32xf32> -> vector<1x32xf32>
    %20 = arith.maximumf %7, %11 : vector<1x32xf32>
    %21 = arith.maximumf %15, %19 : vector<1x32xf32>
    %22 = arith.maximumf %20, %21 : vector<1x32xf32>
    %23 = arith.addf %22, %1 : vector<1x32xf32>
    %cst_18 = arith.constant 0.000000e+00 : f32
    %24 = vector.broadcast %cst_18 : f32 to vector<1x32xf32>
    %25 = arith.maximumf %23, %24 : vector<1x32xf32>
    %26 = arith.truncf %25 : vector<1x32xf32> to vector<1x32xbf16>
    %c0_19 = arith.constant 0 : index
    %27 = arith.index_cast %c0_i32 : i32 to index
    %c0_20 = arith.constant 0 : index
    %c0_21 = arith.constant 0 : index
    %28 = vector.load %arg5[%c0_19, %27, %c0_20, %c0_21] : memref<1x1x1x32xbf16, #tpu.memory_space<vmem>>, vector<1x1x1x32xbf16>
    %29 = vector.shape_cast %28 : vector<1x1x1x32xbf16> to vector<1x32xbf16>
    %30 = vector.shape_cast %26 : vector<1x32xbf16> to vector<1x1x1x32xbf16>
    tpu.vector_store %arg5[%c0_19, %27, %c0_20, %c0_21], %30 {strides = array<i32>} : memref<1x1x1x32xbf16, #tpu.memory_space<vmem>>, vector<1x1x1x32xbf16>,
    %c1_i32_22 = arith.constant 1 : i32
    return
  }
  func.func @transform_0(%arg0: i32) -> (i32, i32, i32, i32) {
    %c0_i32 = arith.constant 0 : i32
    %c0_i32_0 = arith.constant 0 : i32
    %c0_i32_1 = arith.constant 0 : i32
    %c0_i32_2 = arith.constant 0 : i32
    return %arg0, %c0_i32, %c0_i32_0, %c0_i32_1 : i32, i32, i32, i32
  }
  func.func @transform_1(%arg0: i32) -> (i32, i32, i32, i32) {
    %c0_i32 = arith.constant 0 : i32
    %c0_i32_0 = arith.constant 0 : i32
    %c0_i32_1 = arith.constant 0 : i32
    %c0_i32_2 = arith.constant 0 : i32
    return %arg0, %c0_i32, %c0_i32_0, %c0_i32_1 : i32, i32, i32, i32
  }
  func.func @transform_2(%arg0: i32) -> (i32, i32) {
    %c0_i32 = arith.constant 0 : i32
    %c0_i32_0 = arith.constant 0 : i32
    %c0_i32_1 = arith.constant 0 : i32
    return %c0_i32, %c0_i32_0 : i32, i32
  }
  func.func @transform_3(%arg0: i32) -> (i32, i32) {
    %c0_i32 = arith.constant 0 : i32
    %c0_i32_0 = arith.constant 0 : i32
    %c0_i32_1 = arith.constant 0 : i32
    return %c0_i32, %c0_i32_0 : i32, i32
  }
  func.func @transform_4(%arg0: i32) -> (i32, i32, i32, i32) {
    %c0_i32 = arith.constant 0 : i32
    %c0_i32_0 = arith.constant 0 : i32
    %c0_i32_1 = arith.constant 0 : i32
    %c0_i32_2 = arith.constant 0 : i32
    return %arg0, %c0_i32, %c0_i32_0, %c0_i32_1 : i32, i32, i32, i32
  }
}

module attributes {stable_mosaic.version = 11 : i64} {
  func.func @_head_kernel(%arg0: memref<2x32xbf16, #tpu.memory_space<vmem>>, %arg1: memref<32x128xbf16, #tpu.memory_space<vmem>>, %arg2: memref<1x128xf32, #tpu.memory_space<vmem>>, %arg3: memref<128x1xf32, #tpu.memory_space<vmem>>, %arg4: memref<1x1xf32, #tpu.memory_space<vmem>>, %arg5: memref<2x1xf32, #tpu.memory_space<vmem>>) attributes {dimension_semantics = [], scalar_prefetch = 0 : i64, scratch_operands = 0 : i64, tpu.core_type = #tpu.core_type<tc>} {
    %c0 = arith.constant 0 : index
    %c0_0 = arith.constant 0 : index
    %0 = vector.load %arg0[%c0, %c0_0] : memref<2x32xbf16, #tpu.memory_space<vmem>>, vector<2x32xbf16>
    %c0_1 = arith.constant 0 : index
    %c0_2 = arith.constant 0 : index
    %1 = vector.load %arg1[%c0_1, %c0_2] : memref<32x128xbf16, #tpu.memory_space<vmem>>, vector<32x128xbf16>
    %cst = arith.constant dense<0.000000e+00> : vector<2x128xf32>
    %2 = tpu.matmul %0, %1, %cst {dimension_numbers = #tpu.dot_dimension_numbers<[1], [0], [0], [1], [0, 0, 1, 1], [], []>} : vector<2x32xbf16>, vector<32x128xbf16>, vector<2x128xf32> -> vector<2x128xf32>
    %c0_3 = arith.constant 0 : index
    %c0_4 = arith.constant 0 : index
    %3 = vector.load %arg2[%c0_3, %c0_4] : memref<1x128xf32, #tpu.memory_space<vmem>>, vector<1x128xf32>
    %4 = vector.broadcast %3 : vector<1x128xf32> to vector<2x128xf32>
    %5 = arith.addf %2, %4 : vector<2x128xf32>
    %cst_5 = arith.constant 0.000000e+00 : f32
    %6 = vector.broadcast %cst_5 : f32 to vector<2x128xf32>
    %7 = arith.maximumf %5, %6 : vector<2x128xf32>
    %c0_6 = arith.constant 0 : index
    %c0_7 = arith.constant 0 : index
    %8 = vector.load %arg3[%c0_6, %c0_7] : memref<128x1xf32, #tpu.memory_space<vmem>>, vector<128x1xf32>
    %cst_8 = arith.constant dense<0.000000e+00> : vector<2x1xf32>
    %9 = tpu.matmul %7, %8, %cst_8 {dimension_numbers = #tpu.dot_dimension_numbers<[1], [0], [0], [1], [0, 0, 1, 1], [], []>} : vector<2x128xf32>, vector<128x1xf32>, vector<2x1xf32> -> vector<2x1xf32>
    %c0_9 = arith.constant 0 : index
    %c0_10 = arith.constant 0 : index
    %10 = vector.load %arg4[%c0_9, %c0_10] : memref<1x1xf32, #tpu.memory_space<vmem>>, vector<1x1xf32>
    %11 = vector.broadcast %10 : vector<1x1xf32> to vector<2x1xf32>
    %12 = arith.addf %9, %11 : vector<2x1xf32>
    %13 = arith.negf %12 : vector<2x1xf32>
    %14 = math.exp %13 : vector<2x1xf32>
    %cst_11 = arith.constant 1.000000e+00 : f32
    %15 = vector.broadcast %cst_11 : f32 to vector<2x1xf32>
    %16 = arith.addf %15, %14 : vector<2x1xf32>
    %17 = arith.divf %15, %16 : vector<2x1xf32>
    %c0_12 = arith.constant 0 : index
    %c0_13 = arith.constant 0 : index
    %18 = vector.load %arg5[%c0_12, %c0_13] : memref<2x1xf32, #tpu.memory_space<vmem>>, vector<2x1xf32>
    tpu.vector_store %arg5[%c0_12, %c0_13], %17 {strides = array<i32>} : memref<2x1xf32, #tpu.memory_space<vmem>>, vector<2x1xf32>,
    return
  }
}

</mosaic_0001>

<llo_original>
// kernel: bt_model_forward.5
$region0: #{bt_model_forward.5}
  #allocation0 [shape = 'u32[]', space=smem, size = 0x4, offset = 0x4, fixed_abs, tag = 'smem constant byte address 0x4 - core index']
  #allocation1 [shape = 'u32[72,128]{1,0:T(1,128)}', space=vmem, size = 0x9000, scoped, tag = 'internal scratch']
  %s0 = inlined_call_operand.vmem [shape: bf16[2,46,23,27], index: 0, kind: input, shape index: {}]
  %s1 = inlined_call_operand.vmem [shape: bf16[2,46,23,27], index: 1, kind: input, shape index: {}]
  %s2 = inlined_call_operand.vmem [shape: bf16[27,32], index: 2, kind: input, shape index: {}]
  %s3 = inlined_call_operand.vmem [shape: f32[1,32], index: 3, kind: input, shape index: {}]
  %s4 = inlined_call_operand.vmem [shape: bf16[2,23,23,32], index: 4, kind: output, shape index: {}]
  %s5 = sld [smem:[#allocation0]]
  $region56: #{bt_model_forward.5} parent=0
    _
  %s7 = ssub.s32 1, %s5
  %s8 = scalar_select 0, %s7, %s5
  loop: start=0, step=1, limit=4
  $region2: #{bt_model_forward.5} parent=0 // loop_pre_header
    _
  $region3: #{bt_model_forward.5} parent=0 // loop_header
    %s10 = sphi 0, %s14
    %p11 = scmp.ge.s32.totalorder %s10, 4
    %s20 = sphi 0, %s22
    %s23 = sphi 0, %s20
    %s24 = sphi 0, %s23
    %s40 = sphi 0, %s24
    %s46 = sphi 0, %s48
    %s49 = sphi 0, %s46
    %s50 = sphi 0, %s49
    %s66 = sphi 0, %s50
    %s70 = sphi 0, %s70
    %s72 = sphi 0, %s70
    %s73 = sphi 0, %s72
    %s87 = sphi 0, %s73
    %s91 = sphi 0, %s91
    %s93 = sphi 0, %s91
    %s94 = sphi 0, %s93
    %s108 = sphi 0, %s94
    %s114 = sphi 0, %s116
    %s117 = sphi 0, %s114
    %s118 = sphi 0, %s117
    %s134 = sphi 0, %s118
  $region4: #{bt_model_forward.5} parent=0 // loop_header_branch
    %13 = sbr.rel (%p11) target = $region8
  $region5: #{bt_model_forward.5} parent=0 // loop_body
    %s15 = ssub.s32 %s10, 1
    %s16 = ssub.s32 %s10, 2
    %s17 = sadd.s32 %s10, 1
    %s18 = ssub.s32 %s10, %s17
    %p19 = scmp.eq.s32.totalorder %s18, 0
    %s21 = sadd.s32 %s20, 1
    %s22 = scalar_select %p19, %s20, %s21
    %p25 = pneg %p19
    %p26 = scmp.eq.s32.totalorder %s10, 1
    %p27 = por %p25, %p26
    %p28 = scmp.ne.s32.totalorder %s20, %s23
    %p29 = scmp.eq.s32.totalorder %s10, 0
    %p30 = por %p28, %p29
    %p31 = scmp.ne.s32.totalorder %s20, %s23
    %p32 = scmp.eq.s32.totalorder %s15, 1
    %p33 = por %p31, %p32
    %p34 = scmp.ne.s32.totalorder %s23, %s24
    %p35 = scmp.eq.s32.totalorder %s15, 0
    %p36 = por %p34, %p35
    %p37 = scmp.ne.s32.totalorder %s23, %s24
    %p38 = scmp.eq.s32.totalorder %s16, 1
    %p39 = por %p37, %p38
    %p41 = scmp.ne.s32.totalorder %s24, %s40
    %p42 = scmp.eq.s32.totalorder %s16, 0
    %p43 = por %p41, %p42
    %s44 = ssub.s32 %s10, %s17
    %p45 = scmp.eq.s32.totalorder %s44, 0
    %s47 = sadd.s32 %s46, 1
    %s48 = scalar_select %p45, %s46, %s47
    %p51 = pneg %p45
    %p52 = scmp.eq.s32.totalorder %s10, 1
    %p53 = por %p51, %p52
    %p54 = scmp.ne.s32.totalorder %s46, %s49
    %p55 = scmp.eq.s32.totalorder %s10, 0
    %p56 = por %p54, %p55
    %p57 = scmp.ne.s32.totalorder %s46, %s49
    %p58 = scmp.eq.s32.totalorder %s15, 1
    %p59 = por %p57, %p58
    %p60 = scmp.ne.s32.totalorder %s49, %s50
    %p61 = scmp.eq.s32.totalorder %s15, 0
    %p62 = por %p60, %p61
    %p63 = scmp.ne.s32.totalorder %s49, %s50
    %p64 = scmp.eq.s32.totalorder %s16, 1
    %p65 = por %p63, %p64
    %p67 = scmp.ne.s32.totalorder %s50, %s66
    %p68 = scmp.eq.s32.totalorder %s16, 0
    %p69 = por %p67, %p68
    %s71 = sadd.s32 %s70, 1
    %p74 = scmp.eq.s32.totalorder %s10, 1
    %p75 = scmp.ne.s32.totalorder %s70, %s72
    %p76 = scmp.eq.s32.totalorder %s10, 0
    %p77 = por %p75, %p76
    %p78 = scmp.ne.s32.totalorder %s70, %s72
    %p79 = scmp.eq.s32.totalorder %s15, 1
    %p80 = por %p78, %p79
    %p81 = scmp.ne.s32.totalorder %s72, %s73
    %p82 = scmp.eq.s32.totalorder %s15, 0
    %p83 = por %p81, %p82
    %p84 = scmp.ne.s32.totalorder %s72, %s73
    %p85 = scmp.eq.s32.totalorder %s16, 1
    %p86 = por %p84, %p85
    %p88 = scmp.ne.s32.totalorder %s73, %s87
    %p89 = scmp.eq.s32.totalorder %s16, 0
    %p90 = por %p88, %p89
    %s92 = sadd.s32 %s91, 1
    %p95 = scmp.eq.s32.totalorder %s10, 1
    %p96 = scmp.ne.s32.totalorder %s91, %s93
    %p97 = scmp.eq.s32.totalorder %s10, 0
    %p98 = por %p96, %p97
    %p99 = scmp.ne.s32.totalorder %s91, %s93
    %p100 = scmp.eq.s32.totalorder %s15, 1
    %p101 = por %p99, %p100
    %p102 = scmp.ne.s32.totalorder %s93, %s94
    %p103 = scmp.eq.s32.totalorder %s15, 0
    %p104 = por %p102, %p103
    %p105 = scmp.ne.s32.totalorder %s93, %s94
    %p106 = scmp.eq.s32.totalorder %s16, 1
    %p107 = por %p105, %p106
    %p109 = scmp.ne.s32.totalorder %s94, %s108
    %p110 = scmp.eq.s32.totalorder %s16, 0
    %p111 = por %p109, %p110
    %s112 = ssub.s32 %s10, %s17
    %p113 = scmp.eq.s32.totalorder %s112, 0
    %s115 = sadd.s32 %s114, 1
    %s116 = scalar_select %p113, %s114, %s115
    %p119 = pneg %p113
    %p120 = scmp.eq.s32.totalorder %s10, 1
    %p121 = por %p119, %p120
    %p122 = scmp.ne.s32.totalorder %s114, %s117
    %p123 = scmp.eq.s32.totalorder %s10, 0
    %p124 = por %p122, %p123
    %p125 = scmp.ne.s32.totalorder %s114, %s117
    %p126 = scmp.eq.s32.totalorder %s15, 1
    %p127 = por %p125, %p126
    %p128 = scmp.ne.s32.totalorder %s117, %s118
    %p129 = scmp.eq.s32.totalorder %s15, 0
    %p130 = por %p128, %p129
    %p131 = scmp.ne.s32.totalorder %s117, %s118
    %p132 = scmp.eq.s32.totalorder %s16, 1
    %p133 = por %p131, %p132
    %p135 = scmp.ne.s32.totalorder %s118, %s134
    %p136 = scmp.eq.s32.totalorder %s16, 0
    %p137 = por %p135, %p136
    %p138 = scmp.le.s32.totalorder 1, %s10
    %p139 = scmp.lt.s32.totalorder %s10, 3
    %p140 = pnand %p138, %p139
    %p141 = pneg %p140
    // Predicated region
    $region9: #{bt_model_forward.5} parent=5 // pred_check
      _
    $region10: #{bt_model_forward.5} parent=5 // pred_check_branch
      %143 = sbr.rel (%p140) target = $region12
    $region11: #{bt_model_forward.5} parent=5 // pred_region
      %s144 = ssub.s32 %s10, 1
      // Predicated region
      $region13: #{bt_model_forward.5} parent=11 // pred_check
        %p145 = pneg %p83
      $region14: #{bt_model_forward.5} parent=11 // pred_check_branch
        %147 = sbr.rel (%p145) target = $region16
      $region15: #{bt_model_forward.5} parent=11 // pred_region
        _
      $region16: #{bt_model_forward.5} parent=11 // pred_fallthru
        _
      // Predicated region
      $region17: #{bt_model_forward.5} parent=11 // pred_check
        %p148 = pneg %p104
      $region18: #{bt_model_forward.5} parent=11 // pred_check_branch
        %150 = sbr.rel (%p148) target = $region20
      $region19: #{bt_model_forward.5} parent=11 // pred_region
        _
      $region20: #{bt_model_forward.5} parent=11 // pred_fallthru
        _
    $region12: #{bt_model_forward.5} parent=5 // pred_fallthru
      _
    %p151 = scmp.lt.s32.totalorder %s10, 2
    // Predicated region
    $region21: #{bt_model_forward.5} parent=5 // pred_check
      %p152 = pneg %p151
    $region22: #{bt_model_forward.5} parent=5 // pred_check_branch
      %154 = sbr.rel (%p152) target = $region24
    $region23: #{bt_model_forward.5} parent=5 // pred_region
      // Predicated region
      $region25: #{bt_model_forward.5} parent=23 // pred_check
        %p155 = pneg %p30
      $region26: #{bt_model_forward.5} parent=23 // pred_check_branch
        %157 = sbr.rel (%p155) target = $region28
      $region27: #{bt_model_forward.5} parent=23 // pred_region
        %p158 = scmp.lt.s32.totalorder %s10, 1
        %s159 = scalar_select %p158, %s10, 1
        %s160 = smul.addr %s159, 138
        %s161 = smul.addr %s160, 4
        %s162 = scalar_lea.vmem %s0, %s161
      $region28: #{bt_model_forward.5} parent=23 // pred_fallthru
        _
      // Predicated region
      $region29: #{bt_model_forward.5} parent=23 // pred_check
        %p163 = pneg %p56
      $region30: #{bt_model_forward.5} parent=23 // pred_check_branch
        %165 = sbr.rel (%p163) target = $region32
      $region31: #{bt_model_forward.5} parent=23 // pred_region
        %p166 = scmp.lt.s32.totalorder %s10, 1
        %s167 = scalar_select %p166, %s10, 1
        %s168 = smul.addr %s167, 138
        %s169 = smul.addr %s168, 4
        %s170 = scalar_lea.vmem %s1, %s169
      $region32: #{bt_model_forward.5} parent=23 // pred_fallthru
        _
    $region24: #{bt_model_forward.5} parent=5 // pred_fallthru
      _
    %p171 = scmp.le.s32.totalorder 1, %s10
    %p172 = scmp.lt.s32.totalorder %s10, 3
    %p173 = pnand %p171, %p172
    %p174 = pneg %p173
    // Predicated region
    $region33: #{bt_model_forward.5} parent=5 // pred_check
      _
    $region34: #{bt_model_forward.5} parent=5 // pred_check_branch
      %176 = sbr.rel (%p173) target = $region36
    $region35: #{bt_model_forward.5} parent=5 // pred_region
      %s177 = ssub.s32 %s10, 1
      %p178 = scmp.lt.s32.totalorder %s15, 1
      %s179 = scalar_select %p178, %s15, 1
      %s180 = smul.addr %s179, 138
      %s181 = smul.addr %s180, 4
      %s182 = scalar_lea.vmem %s0, %s181
      %p183 = pneg %p36
      %p184 = pneg %p33
      %p185 = scmp.lt.s32.totalorder %s15, 1
      %s186 = scalar_select %p185, %s15, 1
      %s187 = smul.addr %s186, 138
      %s188 = smul.addr %s187, 4
      %s189 = scalar_lea.vmem %s1, %s188
      %p190 = pneg %p62
      %p191 = pneg %p59
      %p192 = pneg %p83
      %p193 = pneg %p80
      %p194 = pneg %p104
      %p195 = pneg %p101
      %p196 = pneg %p130
      %p197 = pneg %p127
      %p198 = scmp.lt.s32.totalorder %s15, 1
      %s199 = scalar_select %p198, %s15, 1
      %s200 = smul.addr %s199, 69
      %s201 = smul.addr %s200, 4
      %s202 = scalar_lea.vmem %s4, %s201
      %p203 = scmp.lt.s32.totalorder %s15, 1
      %s204 = scalar_select %p203, %s15, 1
      %s205 = smul.addr %s204, 138
      %s206 = smul.addr %s205, 4
      %s207 = scalar_lea.vmem %s0, %s206
      %p208 = scmp.lt.s32.totalorder %s15, 1
      %s209 = scalar_select %p208, %s15, 1
      %s210 = smul.addr %s209, 138
      %s211 = smul.addr %s210, 4
      %s212 = scalar_lea.vmem %s1, %s211
      %p213 = scmp.lt.s32.totalorder %s15, 1
      %s214 = scalar_select %p213, %s15, 1
      %s215 = smul.addr %s214, 69
      %s216 = smul.addr %s215, 4
      %s217 = scalar_lea.vmem %s4, %s216
      %v219 = vld [vmem:[%s2] sm:$0xf]
      %v220 = vld [vmem:[%s2 + $0x4] sm:$0xf]
      %v221 = vld [vmem:[%s2 + $0x8] sm:$0xf]
      %v222 = vld [vmem:[%s2 + $0xc] sm:$0x3]
      %v223 = vld [vmem:[%s3] sm:$0x1]
      loop: start=0, step=1, limit=23
      $region37: #{bt_model_forward.5} parent=35 // loop_pre_header
        _
      $region38: #{bt_model_forward.5} parent=35 // loop_header
        %s225 = sphi 0, %s229
        %p226 = scmp.ge.s32.totalorder %s225, 23
      $region39: #{bt_model_forward.5} parent=35 // loop_header_branch
        %228 = sbr.rel (%p226) target = $region43
      $region40: #{bt_model_forward.5} parent=35 // loop_body
        %s230 = smul.u32 %s225, 2
        %s231 = sadd.s32 %s230, 1
        %s232 = smul.u32 %s230, 3
        %s233 = smul.addr %s232, 4
        %s234 = scalar_lea.vmem %s207, %s233
        %v235 = vld [vmem:[%s234] sm:$0xf]
        %v236 = vld [vmem:[%s234 + $0x4] sm:$0xf]
        %v237 = vld [vmem:[%s234 + $0x8] sm:$0xf]
        %v241 = vunpack.c.l.b16 %v235
        %v242 = vunpack.c.l.b16 %v236
        %v243 = vunpack.c.l.b16 %v237
        %v244 = vpack.c.b16 %v242, %v241
        %v245 = vpack.c.b16 %v243, %v243
        %v250 = vunpack.c.l.b16 %v219
        %v251 = vunpack.c.l.b16 %v220
        %v252 = vunpack.c.l.b16 %v221
        %v253 = vunpack.c.l.b16 %v222
        %v254 = vpack.c.b16 %v251, %v250
        %v255 = vpack.c.b16 %v253, %v252
        %vm257 = vcmask 220160
        %v259 = vsel %vm257, %v244, 0
        %v262 = vsel %vm257, %v245, 0
        %vm264 = vcmask 1044480
        %vm265 = vcmask 1045504
        %v266 = vsel %vm264, 4294967295, 65535
        %v267 = vsel %vm265, %v266, 0
        %v269 = vand.u32 %v255, %v267
        %271 = vmatpush.bf16.msra.mxu0 0
        %272 = vmatpush.bf16.msra.mxu0 0
        %273 = vmatpush.bf16.msra.mxu0 0
        %274 = vmatpush.bf16.msra.mxu0 0
        %275 = vmatpush.bf16.msra.mxu0 0
        %276 = vmatpush.bf16.msra.mxu0 0
        %277 = vmatpush.bf16.msra.mxu0 %v269
        %278 = vmatpush.bf16.msra.mxu0 %v254
        %279 = vmatmul.bf16.gmra.mxu0 %v259
        %v280 = vpop.f32.mrf.mxu0
        %v281 = vadd.f32 0.0, %v280
        %v282 = vpop.f32.mrf.mxu0
        %v283 = vadd.f32 0.0, %v282
        %284 = vmatmul.bf16.gmra.mxu0 %v262
        %v285 = vpop.f32.mrf.mxu0
        %v286 = vadd.f32 0.0, %v285
        %v287 = vpop.f32.mrf.mxu0
        %288 = vdwg.mxu0
        %s289 = smul.addr %s232, 4
        %s290 = scalar_lea.vmem %s212, %s289
        %v291 = vld [vmem:[%s290] sm:$0xf]
        %v292 = vld [vmem:[%s290 + $0x4] sm:$0xf]
        %v293 = vld [vmem:[%s290 + $0x8] sm:$0xf]
        %v297 = vunpack.c.l.b16 %v291
        %v298 = vunpack.c.l.b16 %v292
        %v299 = vunpack.c.l.b16 %v293
        %v300 = vpack.c.b16 %v298, %v297
        %v301 = vpack.c.b16 %v299, %v299
        %v303 = vsel %vm257, %v300, 0
        %v306 = vsel %vm257, %v301, 0
        %308 = vmatpush.bf16.msra.mxu0 0
        %309 = vmatpush.bf16.msra.mxu0 0
        %310 = vmatpush.bf16.msra.mxu0 0
        %311 = vmatpush.bf16.msra.mxu0 0
        %312 = vmatpush.bf16.msra.mxu0 0
        %313 = vmatpush.bf16.msra.mxu0 0
        %314 = vmatpush.bf16.msra.mxu0 %v269
        %315 = vmatpush.bf16.msra.mxu0 %v254
        %316 = vmatmul.bf16.gmra.mxu0 %v303
        %v317 = vpop.f32.mrf.mxu0
        %v318 = vadd.f32 0.0, %v317
        %v319 = vpop.f32.mrf.mxu0
        %v320 = vadd.f32 0.0, %v319
        %321 = vmatmul.bf16.gmra.mxu0 %v306
        %v322 = vpop.f32.mrf.mxu0
        %v323 = vadd.f32 0.0, %v322
        %v324 = vpop.f32.mrf.mxu0
        %325 = vdwg.mxu0
        %s326 = smul.u32 %s231, 3
        %s327 = smul.addr %s326, 4
        %s328 = scalar_lea.vmem %s207, %s327
        %v329 = vld [vmem:[%s328] sm:$0xf]
        %v330 = vld [vmem:[%s328 + $0x4] sm:$0xf]
        %v331 = vld [vmem:[%s328 + $0x8] sm:$0xf]
        %v335 = vunpack.c.l.b16 %v329
        %v336 = vunpack.c.l.b16 %v330
        %v337 = vunpack.c.l.b16 %v331
        %v338 = vpack.c.b16 %v336, %v335
        %v339 = vpack.c.b16 %v337, %v337
        %v341 = vsel %vm257, %v338, 0
        %v344 = vsel %vm257, %v339, 0
        %346 = vmatpush.bf16.msra.mxu0 0
        %347 = vmatpush.bf16.msra.mxu0 0
        %348 = vmatpush.bf16.msra.mxu0 0
        %349 = vmatpush.bf16.msra.mxu0 0
        %350 = vmatpush.bf16.msra.mxu0 0
        %351 = vmatpush.bf16.msra.mxu0 0
        %352 = vmatpush.bf16.msra.mxu0 %v269
        %353 = vmatpush.bf16.msra.mxu0 %v254
        %354 = vmatmul.bf16.gmra.mxu0 %v341
        %v355 = vpop.f32.mrf.mxu0
        %v356 = vadd.f32 0.0, %v355
        %v357 = vpop.f32.mrf.mxu0
        %v358 = vadd.f32 0.0, %v357
        %359 = vmatmul.bf16.gmra.mxu0 %v344
        %v360 = vpop.f32.mrf.mxu0
        %v361 = vadd.f32 0.0, %v360
        %v362 = vpop.f32.mrf.mxu0
        %363 = vdwg.mxu0
        %s364 = smul.addr %s326, 4
        %s365 = scalar_lea.vmem %s212, %s364
        %v366 = vld [vmem:[%s365] sm:$0xf]
        %v367 = vld [vmem:[%s365 + $0x4] sm:$0xf]
        %v368 = vld [vmem:[%s365 + $0x8] sm:$0xf]
        %v372 = vunpack.c.l.b16 %v366
        %v373 = vunpack.c.l.b16 %v367
        %v374 = vunpack.c.l.b16 %v368
        %v375 = vpack.c.b16 %v373, %v372
        %v376 = vpack.c.b16 %v374, %v374
        %v378 = vsel %vm257, %v375, 0
        %v381 = vsel %vm257, %v376, 0
        %383 = vmatpush.bf16.msra.mxu0 0
        %384 = vmatpush.bf16.msra.mxu0 0
        %385 = vmatpush.bf16.msra.mxu0 0
        %386 = vmatpush.bf16.msra.mxu0 0
        %387 = vmatpush.bf16.msra.mxu0 0
        %388 = vmatpush.bf16.msra.mxu0 0
        %389 = vmatpush.bf16.msra.mxu0 %v269
        %390 = vmatpush.bf16.msra.mxu0 %v254
        %391 = vmatmul.bf16.gmra.mxu0 %v378
        %v392 = vpop.f32.mrf.mxu0
        %v393 = vadd.f32 0.0, %v392
        %v394 = vpop.f32.mrf.mxu0
        %v395 = vadd.f32 0.0, %v394
        %396 = vmatmul.bf16.gmra.mxu0 %v381
        %v397 = vpop.f32.mrf.mxu0
        %v398 = vadd.f32 0.0, %v397
        %v399 = vpop.f32.mrf.mxu0
        %400 = vdwg.mxu0
        %v401 = vmax.f32 %v281, %v318
        %v402 = vmax.f32 %v283, %v320
        %v403 = vmax.f32 %v286, %v323
        %v404 = vmax.f32 %v356, %v393
        %v405 = vmax.f32 %v358, %v395
        %v406 = vmax.f32 %v361, %v398
        %v407 = vmax.f32 %v401, %v404
        %v408 = vmax.f32 %v402, %v405
        %v409 = vmax.f32 %v403, %v406
        %v411 = vperm.slane %v223, 0
        %v413 = vadd.f32 %v407, %v411
        %v414 = vadd.f32 %v408, %v411
        %v415 = vadd.f32 %v409, %v411
        %v416 = vmax.f32 %v413, 0.0
        %v417 = vmax.f32 %v414, 0.0
        %v418 = vmax.f32 %v415, 0.0
        %v419 = vpack.c.bf16 %v416, %v416
        %v420 = vpack.c.bf16 %v417, %v417
        %v421 = vpack.c.bf16 %v418, %v418
        %s422 = smul.u32 %s225, 3
        %s423 = smul.addr %s422, 4
        %s424 = scalar_lea.vmem %s217, %s423
        %vm425 = vcmask 257024
        %426 = vst.msk [vmem:[%s424] sm:$0xf] %vm425, %v419
        %427 = vst.msk [vmem:[%s424 + $0x4] sm:$0xf] %vm425, %v420
        %vm428 = vcmask 257024
        %vm429 = vsmask.f32 3328
        %vm430 = vmand %vm428, %vm429
        %v431 = vld [vmem:[%s424 + $0x8] sm:$0xf]
        %v432 = vsel %vm430, %v421, %v431
        %433 = vst [vmem:[%s424 + $0x8] sm:$0xf] %v432
      $region41: #{bt_model_forward.5} parent=35 // loop_footer
        %s229 = sadd.s32 1, %s225
      $region42: #{bt_model_forward.5} parent=35 // loop_footer_branch
        %224 = sbr.rel target = $region38
      $region43: #{bt_model_forward.5} parent=35 // loop_exit
        _
      %p434 = scmp.lt.s32.totalorder %s15, 1
      %s435 = scalar_select %p434, %s15, 1
      %s436 = smul.addr %s435, 69
      %s437 = smul.addr %s436, 4
      %s438 = scalar_lea.vmem %s4, %s437
      // Predicated region
      $region44: #{bt_model_forward.5} parent=35 // pred_check
        %p439 = pneg %p127
      $region45: #{bt_model_forward.5} parent=35 // pred_check_branch
        %441 = sbr.rel (%p439) target = $region47
      $region46: #{bt_model_forward.5} parent=35 // pred_region
        _
      $region47: #{bt_model_forward.5} parent=35 // pred_fallthru
        _
    $region36: #{bt_model_forward.5} parent=5 // pred_fallthru
      _
    %p442 = scmp.le.s32.totalorder 2, %s10
    // Predicated region
    $region48: #{bt_model_forward.5} parent=5 // pred_check
      %p443 = pneg %p442
    $region49: #{bt_model_forward.5} parent=5 // pred_check_branch
      %445 = sbr.rel (%p443) target = $region51
    $region50: #{bt_model_forward.5} parent=5 // pred_region
      %s446 = ssub.s32 %s10, 2
      // Predicated region
      $region52: #{bt_model_forward.5} parent=50 // pred_check
        %p447 = pneg %p133
      $region53: #{bt_model_forward.5} parent=50 // pred_check_branch
        %449 = sbr.rel (%p447) target = $region55
      $region54: #{bt_model_forward.5} parent=50 // pred_region
        %p450 = scmp.lt.s32.totalorder %s16, 1
        %s451 = scalar_select %p450, %s16, 1
        %s452 = smul.addr %s451, 69
        %s453 = smul.addr %s452, 4
        %s454 = scalar_lea.vmem %s4, %s453
      $region55: #{bt_model_forward.5} parent=50 // pred_fallthru
        _
    $region51: #{bt_model_forward.5} parent=5 // pred_fallthru
      _
  $region6: #{bt_model_forward.5} parent=0 // loop_footer
    %s14 = sadd.s32 1, %s10
  $region7: #{bt_model_forward.5} parent=0 // loop_footer_branch
    %9 = sbr.rel target = $region3
  $region8: #{bt_model_forward.5} parent=0 // loop_exit
    _

// kernel: bt_model_forward.6
$region0: #{bt_model_forward.6}
  #allocation0 [shape = 'u32[]', space=smem, size = 0x4, offset = 0x4, fixed_abs, tag = 'smem constant byte address 0x4 - core index']
  #allocation1 [shape = 'u32[72,128]{1,0:T(1,128)}', space=vmem, size = 0x9000, scoped, tag = 'internal scratch']
  %s0 = inlined_call_operand.vmem [shape: bf16[2,21,10,288], index: 0, kind: input, shape index: {}]
  %s1 = inlined_call_operand.vmem [shape: bf16[2,21,10,288], index: 1, kind: input, shape index: {}]
  %s2 = inlined_call_operand.vmem [shape: bf16[288,32], index: 2, kind: input, shape index: {}]
  %s3 = inlined_call_operand.vmem [shape: f32[1,32], index: 3, kind: input, shape index: {}]
  %s4 = inlined_call_operand.vmem [shape: bf16[2,10,10,32], index: 4, kind: output, shape index: {}]
  %s5 = sld [smem:[#allocation0]]
  $region56: #{bt_model_forward.6} parent=0
    _
  %s7 = ssub.s32 1, %s5
  %s8 = scalar_select 0, %s7, %s5
  loop: start=0, step=1, limit=4
  $region2: #{bt_model_forward.6} parent=0 // loop_pre_header
    _
  $region3: #{bt_model_forward.6} parent=0 // loop_header
    %s10 = sphi 0, %s14
    %p11 = scmp.ge.s32.totalorder %s10, 4
    %s20 = sphi 0, %s22
    %s23 = sphi 0, %s20
    %s24 = sphi 0, %s23
    %s40 = sphi 0, %s24
    %s46 = sphi 0, %s48
    %s49 = sphi 0, %s46
    %s50 = sphi 0, %s49
    %s66 = sphi 0, %s50
    %s70 = sphi 0, %s70
    %s72 = sphi 0, %s70
    %s73 = sphi 0, %s72
    %s87 = sphi 0, %s73
    %s91 = sphi 0, %s91
    %s93 = sphi 0, %s91
    %s94 = sphi 0, %s93
    %s108 = sphi 0, %s94
    %s114 = sphi 0, %s116
    %s117 = sphi 0, %s114
    %s118 = sphi 0, %s117
    %s134 = sphi 0, %s118
  $region4: #{bt_model_forward.6} parent=0 // loop_header_branch
    %13 = sbr.rel (%p11) target = $region8
  $region5: #{bt_model_forward.6} parent=0 // loop_body
    %s15 = ssub.s32 %s10, 1
    %s16 = ssub.s32 %s10, 2
    %s17 = sadd.s32 %s10, 1
    %s18 = ssub.s32 %s10, %s17
    %p19 = scmp.eq.s32.totalorder %s18, 0
    %s21 = sadd.s32 %s20, 1
    %s22 = scalar_select %p19, %s20, %s21
    %p25 = pneg %p19
    %p26 = scmp.eq.s32.totalorder %s10, 1
    %p27 = por %p25, %p26
    %p28 = scmp.ne.s32.totalorder %s20, %s23
    %p29 = scmp.eq.s32.totalorder %s10, 0
    %p30 = por %p28, %p29
    %p31 = scmp.ne.s32.totalorder %s20, %s23
    %p32 = scmp.eq.s32.totalorder %s15, 1
    %p33 = por %p31, %p32
    %p34 = scmp.ne.s32.totalorder %s23, %s24
    %p35 = scmp.eq.s32.totalorder %s15, 0
    %p36 = por %p34, %p35
    %p37 = scmp.ne.s32.totalorder %s23, %s24
    %p38 = scmp.eq.s32.totalorder %s16, 1
    %p39 = por %p37, %p38
    %p41 = scmp.ne.s32.totalorder %s24, %s40
    %p42 = scmp.eq.s32.totalorder %s16, 0
    %p43 = por %p41, %p42
    %s44 = ssub.s32 %s10, %s17
    %p45 = scmp.eq.s32.totalorder %s44, 0
    %s47 = sadd.s32 %s46, 1
    %s48 = scalar_select %p45, %s46, %s47
    %p51 = pneg %p45
    %p52 = scmp.eq.s32.totalorder %s10, 1
    %p53 = por %p51, %p52
    %p54 = scmp.ne.s32.totalorder %s46, %s49
    %p55 = scmp.eq.s32.totalorder %s10, 0
    %p56 = por %p54, %p55
    %p57 = scmp.ne.s32.totalorder %s46, %s49
    %p58 = scmp.eq.s32.totalorder %s15, 1
    %p59 = por %p57, %p58
    %p60 = scmp.ne.s32.totalorder %s49, %s50
    %p61 = scmp.eq.s32.totalorder %s15, 0
    %p62 = por %p60, %p61
    %p63 = scmp.ne.s32.totalorder %s49, %s50
    %p64 = scmp.eq.s32.totalorder %s16, 1
    %p65 = por %p63, %p64
    %p67 = scmp.ne.s32.totalorder %s50, %s66
    %p68 = scmp.eq.s32.totalorder %s16, 0
    %p69 = por %p67, %p68
    %s71 = sadd.s32 %s70, 1
    %p74 = scmp.eq.s32.totalorder %s10, 1
    %p75 = scmp.ne.s32.totalorder %s70, %s72
    %p76 = scmp.eq.s32.totalorder %s10, 0
    %p77 = por %p75, %p76
    %p78 = scmp.ne.s32.totalorder %s70, %s72
    %p79 = scmp.eq.s32.totalorder %s15, 1
    %p80 = por %p78, %p79
    %p81 = scmp.ne.s32.totalorder %s72, %s73
    %p82 = scmp.eq.s32.totalorder %s15, 0
    %p83 = por %p81, %p82
    %p84 = scmp.ne.s32.totalorder %s72, %s73
    %p85 = scmp.eq.s32.totalorder %s16, 1
    %p86 = por %p84, %p85
    %p88 = scmp.ne.s32.totalorder %s73, %s87
    %p89 = scmp.eq.s32.totalorder %s16, 0
    %p90 = por %p88, %p89
    %s92 = sadd.s32 %s91, 1
    %p95 = scmp.eq.s32.totalorder %s10, 1
    %p96 = scmp.ne.s32.totalorder %s91, %s93
    %p97 = scmp.eq.s32.totalorder %s10, 0
    %p98 = por %p96, %p97
    %p99 = scmp.ne.s32.totalorder %s91, %s93
    %p100 = scmp.eq.s32.totalorder %s15, 1
    %p101 = por %p99, %p100
    %p102 = scmp.ne.s32.totalorder %s93, %s94
    %p103 = scmp.eq.s32.totalorder %s15, 0
    %p104 = por %p102, %p103
    %p105 = scmp.ne.s32.totalorder %s93, %s94
    %p106 = scmp.eq.s32.totalorder %s16, 1
    %p107 = por %p105, %p106
    %p109 = scmp.ne.s32.totalorder %s94, %s108
    %p110 = scmp.eq.s32.totalorder %s16, 0
    %p111 = por %p109, %p110
    %s112 = ssub.s32 %s10, %s17
    %p113 = scmp.eq.s32.totalorder %s112, 0
    %s115 = sadd.s32 %s114, 1
    %s116 = scalar_select %p113, %s114, %s115
    %p119 = pneg %p113
    %p120 = scmp.eq.s32.totalorder %s10, 1
    %p121 = por %p119, %p120
    %p122 = scmp.ne.s32.totalorder %s114, %s117
    %p123 = scmp.eq.s32.totalorder %s10, 0
    %p124 = por %p122, %p123
    %p125 = scmp.ne.s32.totalorder %s114, %s117
    %p126 = scmp.eq.s32.totalorder %s15, 1
    %p127 = por %p125, %p126
    %p128 = scmp.ne.s32.totalorder %s117, %s118
    %p129 = scmp.eq.s32.totalorder %s15, 0
    %p130 = por %p128, %p129
    %p131 = scmp.ne.s32.totalorder %s117, %s118
    %p132 = scmp.eq.s32.totalorder %s16, 1
    %p133 = por %p131, %p132
    %p135 = scmp.ne.s32.totalorder %s118, %s134
    %p136 = scmp.eq.s32.totalorder %s16, 0
    %p137 = por %p135, %p136
    %p138 = scmp.le.s32.totalorder 1, %s10
    %p139 = scmp.lt.s32.totalorder %s10, 3
    %p140 = pnand %p138, %p139
    %p141 = pneg %p140
    // Predicated region
    $region9: #{bt_model_forward.6} parent=5 // pred_check
      _
    $region10: #{bt_model_forward.6} parent=5 // pred_check_branch
      %143 = sbr.rel (%p140) target = $region12
    $region11: #{bt_model_forward.6} parent=5 // pred_region
      %s144 = ssub.s32 %s10, 1
      // Predicated region
      $region13: #{bt_model_forward.6} parent=11 // pred_check
        %p145 = pneg %p83
      $region14: #{bt_model_forward.6} parent=11 // pred_check_branch
        %147 = sbr.rel (%p145) target = $region16
      $region15: #{bt_model_forward.6} parent=11 // pred_region
        _
      $region16: #{bt_model_forward.6} parent=11 // pred_fallthru
        _
      // Predicated region
      $region17: #{bt_model_forward.6} parent=11 // pred_check
        %p148 = pneg %p104
      $region18: #{bt_model_forward.6} parent=11 // pred_check_branch
        %150 = sbr.rel (%p148) target = $region20
      $region19: #{bt_model_forward.6} parent=11 // pred_region
        _
      $region20: #{bt_model_forward.6} parent=11 // pred_fallthru
        _
    $region12: #{bt_model_forward.6} parent=5 // pred_fallthru
      _
    %p151 = scmp.lt.s32.totalorder %s10, 2
    // Predicated region
    $region21: #{bt_model_forward.6} parent=5 // pred_check
      %p152 = pneg %p151
    $region22: #{bt_model_forward.6} parent=5 // pred_check_branch
      %154 = sbr.rel (%p152) target = $region24
    $region23: #{bt_model_forward.6} parent=5 // pred_region
      // Predicated region
      $region25: #{bt_model_forward.6} parent=23 // pred_check
        %p155 = pneg %p30
      $region26: #{bt_model_forward.6} parent=23 // pred_check_branch
        %157 = sbr.rel (%p155) target = $region28
      $region27: #{bt_model_forward.6} parent=23 // pred_region
        %p158 = scmp.lt.s32.totalorder %s10, 1
        %s159 = scalar_select %p158, %s10, 1
        %s160 = smul.addr %s159, 126
        %s161 = smul.addr %s160, 4
        %s162 = scalar_lea.vmem %s0, %s161
      $region28: #{bt_model_forward.6} parent=23 // pred_fallthru
        _
      // Predicated region
      $region29: #{bt_model_forward.6} parent=23 // pred_check
        %p163 = pneg %p56
      $region30: #{bt_model_forward.6} parent=23 // pred_check_branch
        %165 = sbr.rel (%p163) target = $region32
      $region31: #{bt_model_forward.6} parent=23 // pred_region
        %p166 = scmp.lt.s32.totalorder %s10, 1
        %s167 = scalar_select %p166, %s10, 1
        %s168 = smul.addr %s167, 126
        %s169 = smul.addr %s168, 4
        %s170 = scalar_lea.vmem %s1, %s169
      $region32: #{bt_model_forward.6} parent=23 // pred_fallthru
        _
    $region24: #{bt_model_forward.6} parent=5 // pred_fallthru
      _
    %p171 = scmp.le.s32.totalorder 1, %s10
    %p172 = scmp.lt.s32.totalorder %s10, 3
    %p173 = pnand %p171, %p172
    %p174 = pneg %p173
    // Predicated region
    $region33: #{bt_model_forward.6} parent=5 // pred_check
      _
    $region34: #{bt_model_forward.6} parent=5 // pred_check_branch
      %176 = sbr.rel (%p173) target = $region36
    $region35: #{bt_model_forward.6} parent=5 // pred_region
      %s177 = ssub.s32 %s10, 1
      %p178 = scmp.lt.s32.totalorder %s15, 1
      %s179 = scalar_select %p178, %s15, 1
      %s180 = smul.addr %s179, 126
      %s181 = smul.addr %s180, 4
      %s182 = scalar_lea.vmem %s0, %s181
      %p183 = pneg %p36
      %p184 = pneg %p33
      %p185 = scmp.lt.s32.totalorder %s15, 1
      %s186 = scalar_select %p185, %s15, 1
      %s187 = smul.addr %s186, 126
      %s188 = smul.addr %s187, 4
      %s189 = scalar_lea.vmem %s1, %s188
      %p190 = pneg %p62
      %p191 = pneg %p59
      %p192 = pneg %p83
      %p193 = pneg %p80
      %p194 = pneg %p104
      %p195 = pneg %p101
      %p196 = pneg %p130
      %p197 = pneg %p127
      %p198 = scmp.lt.s32.totalorder %s15, 1
      %s199 = scalar_select %p198, %s15, 1
      %s200 = smul.addr %s199, 20
      %s201 = smul.addr %s200, 4
      %s202 = scalar_lea.vmem %s4, %s201
      %p203 = scmp.lt.s32.totalorder %s15, 1
      %s204 = scalar_select %p203, %s15, 1
      %s205 = smul.addr %s204, 126
      %s206 = smul.addr %s205, 4
      %s207 = scalar_lea.vmem %s0, %s206
      %p208 = scmp.lt.s32.totalorder %s15, 1
      %s209 = scalar_select %p208, %s15, 1
      %s210 = smul.addr %s209, 126
      %s211 = smul.addr %s210, 4
      %s212 = scalar_lea.vmem %s1, %s211
      %p213 = scmp.lt.s32.totalorder %s15, 1
      %s214 = scalar_select %p213, %s15, 1
      %s215 = smul.addr %s214, 20
      %s216 = smul.addr %s215, 4
      %s217 = scalar_lea.vmem %s4, %s216
      %v219 = vld [vmem:[%s2] sm:$0xf]
      %v220 = vld [vmem:[%s2 + $0x4] sm:$0xf]
      %v221 = vld [vmem:[%s2 + $0x8] sm:$0xf]
      %v222 = vld [vmem:[%s2 + $0xc] sm:$0xf]
      %v223 = vld [vmem:[%s2 + $0x10] sm:$0xf]
      %v224 = vld [vmem:[%s2 + $0x14] sm:$0xf]
      %v225 = vld [vmem:[%s2 + $0x18] sm:$0xf]
      %v226 = vld [vmem:[%s2 + $0x1c] sm:$0xf]
      %v227 = vld [vmem:[%s2 + $0x20] sm:$0xf]
      %v228 = vld [vmem:[%s2 + $0x24] sm:$0xf]
      %v229 = vld [vmem:[%s2 + $0x28] sm:$0xf]
      %v230 = vld [vmem:[%s2 + $0x2c] sm:$0xf]
      %v231 = vld [vmem:[%s2 + $0x30] sm:$0xf]
      %v232 = vld [vmem:[%s2 + $0x34] sm:$0xf]
      %v233 = vld [vmem:[%s2 + $0x38] sm:$0xf]
      %v234 = vld [vmem:[%s2 + $0x3c] sm:$0xf]
      %v235 = vld [vmem:[%s2 + $0x40] sm:$0xf]
      %v236 = vld [vmem:[%s2 + $0x44] sm:$0xf]
      %v237 = vld [vmem:[%s2 + $0x48] sm:$0xf]
      %v238 = vld [vmem:[%s2 + $0x4c] sm:$0xf]
      %v239 = vld [vmem:[%s2 + $0x50] sm:$0xf]
      %v240 = vld [vmem:[%s2 + $0x54] sm:$0xf]
      %v241 = vld [vmem:[%s2 + $0x58] sm:$0xf]
      %v242 = vld [vmem:[%s2 + $0x5c] sm:$0xf]
      %v243 = vld [vmem:[%s2 + $0x60] sm:$0xf]
      %v244 = vld [vmem:[%s2 + $0x64] sm:$0xf]
      %v245 = vld [vmem:[%s2 + $0x68] sm:$0xf]
      %v246 = vld [vmem:[%s2 + $0x6c] sm:$0xf]
      %v247 = vld [vmem:[%s2 + $0x70] sm:$0xf]
      %v248 = vld [vmem:[%s2 + $0x74] sm:$0xf]
      %v249 = vld [vmem:[%s2 + $0x78] sm:$0xf]
      %v250 = vld [vmem:[%s2 + $0x7c] sm:$0xf]
      %v251 = vld [vmem:[%s2 + $0x80] sm:$0xf]
      %v252 = vld [vmem:[%s2 + $0x84] sm:$0xf]
      %v253 = vld [vmem:[%s2 + $0x88] sm:$0xf]
      %v254 = vld [vmem:[%s2 + $0x8c] sm:$0xf]
      %v255 = vld [vmem:[%s3] sm:$0x1]
      loop: start=0, step=1, limit=10
      $region37: #{bt_model_forward.6} parent=35 // loop_pre_header
        _
      $region38: #{bt_model_forward.6} parent=35 // loop_header
        %s257 = sphi 0, %s261
        %p258 = scmp.ge.s32.totalorder %s257, 10
      $region39: #{bt_model_forward.6} parent=35 // loop_header_branch
        %260 = sbr.rel (%p258) target = $region43
      $region40: #{bt_model_forward.6} parent=35 // loop_body
        %s262 = smul.u32 %s257, 2
        %s263 = sadd.s32 %s262, 1
        %s264 = smul.u32 %s262, 6
        %s265 = smul.addr %s264, 4
        %s266 = scalar_lea.vmem %s207, %s265
        %v267 = vld [vmem:[%s266] sm:$0xff]
        %v268 = vld [vmem:[%s266 + $0x8] sm:$0xf]
        %v269 = vld [vmem:[%s266 + $0xc] sm:$0x11]
        %v270 = vld [vmem:[%s266 + $0x14] sm:$0x1]
        %v275 = vunpack.c.l.b16 %v267
        %v276 = vunpack.c.h.b16 %v267
        %v277 = vunpack.c.l.b16 %v268
        %v278 = vunpack.c.l.b16 %v269
        %v279 = vunpack.c.h.b16 %v269
        %v280 = vunpack.c.l.b16 %v270
        %v281 = vpack.c.b16 %v278, %v275
        %v282 = vpack.c.b16 %v279, %v276
        %v283 = vpack.c.b16 %v280, %v277
        %v322 = vunpack.c.l.b16 %v219
        %v323 = vunpack.c.l.b16 %v220
        %v324 = vunpack.c.l.b16 %v221
        %v325 = vunpack.c.l.b16 %v222
        %v326 = vunpack.c.l.b16 %v223
        %v327 = vunpack.c.l.b16 %v224
        %v328 = vunpack.c.l.b16 %v225
        %v329 = vunpack.c.l.b16 %v226
        %v330 = vunpack.c.l.b16 %v227
        %v331 = vunpack.c.l.b16 %v228
        %v332 = vunpack.c.l.b16 %v229
        %v333 = vunpack.c.l.b16 %v230
        %v334 = vunpack.c.l.b16 %v231
        %v335 = vunpack.c.l.b16 %v232
        %v336 = vunpack.c.l.b16 %v233
        %v337 = vunpack.c.l.b16 %v234
        %v338 = vunpack.c.l.b16 %v235
        %v339 = vunpack.c.l.b16 %v236
        %v340 = vunpack.c.l.b16 %v237
        %v341 = vunpack.c.l.b16 %v238
        %v342 = vunpack.c.l.b16 %v239
        %v343 = vunpack.c.l.b16 %v240
        %v344 = vunpack.c.l.b16 %v241
        %v345 = vunpack.c.l.b16 %v242
        %v346 = vunpack.c.l.b16 %v243
        %v347 = vunpack.c.l.b16 %v244
        %v348 = vunpack.c.l.b16 %v245
        %v349 = vunpack.c.l.b16 %v246
        %v350 = vunpack.c.l.b16 %v247
        %v351 = vunpack.c.l.b16 %v248
        %v352 = vunpack.c.l.b16 %v249
        %v353 = vunpack.c.l.b16 %v250
        %v354 = vunpack.c.l.b16 %v251
        %v355 = vunpack.c.l.b16 %v252
        %v356 = vunpack.c.l.b16 %v253
        %v357 = vunpack.c.l.b16 %v254
        %v358 = vpack.c.b16 %v323, %v322
        %v359 = vpack.c.b16 %v325, %v324
        %v360 = vpack.c.b16 %v327, %v326
        %v361 = vpack.c.b16 %v329, %v328
        %v362 = vpack.c.b16 %v331, %v330
        %v363 = vpack.c.b16 %v333, %v332
        %v364 = vpack.c.b16 %v335, %v334
        %v365 = vpack.c.b16 %v337, %v336
        %v366 = vpack.c.b16 %v339, %v338
        %v367 = vpack.c.b16 %v341, %v340
        %v368 = vpack.c.b16 %v343, %v342
        %v369 = vpack.c.b16 %v345, %v344
        %v370 = vpack.c.b16 %v347, %v346
        %v371 = vpack.c.b16 %v349, %v348
        %v372 = vpack.c.b16 %v351, %v350
        %v373 = vpack.c.b16 %v353, %v352
        %v374 = vpack.c.b16 %v355, %v354
        %v375 = vpack.c.b16 %v357, %v356
        %vm394 = vcmask 261120
        %v396 = vsel %vm394, %v283, 0
        %398 = vmatpush.bf16.msra.mxu0 %v365
        %399 = vmatpush.bf16.msra.mxu0 %v364
        %400 = vmatpush.bf16.msra.mxu0 %v363
        %401 = vmatpush.bf16.msra.mxu0 %v362
        %402 = vmatpush.bf16.msra.mxu0 %v361
        %403 = vmatpush.bf16.msra.mxu0 %v360
        %404 = vmatpush.bf16.msra.mxu0 %v359
        %405 = vmatpush.bf16.msra.mxu0 %v358
        %406 = vmatmul.bf16.gmra.mxu0 %v281
        %v407 = vpop.f32.mrf.mxu0
        %v408 = vadd.f32 0.0, %v407
        %v409 = vpop.f32.mrf.mxu0
        %v410 = vadd.f32 0.0, %v409
        %411 = vdwg.mxu0
        %412 = vmatpush.bf16.msra.mxu0 %v373
        %413 = vmatpush.bf16.msra.mxu0 %v372
        %414 = vmatpush.bf16.msra.mxu0 %v371
        %415 = vmatpush.bf16.msra.mxu0 %v370
        %416 = vmatpush.bf16.msra.mxu0 %v369
        %417 = vmatpush.bf16.msra.mxu0 %v368
        %418 = vmatpush.bf16.msra.mxu0 %v367
        %419 = vmatpush.bf16.msra.mxu0 %v366
        %420 = vmatmul.bf16.gmra.mxu0 %v282
        %v421 = vpop.f32.mrf.mxu0
        %v422 = vadd.f32 %v408, %v421
        %v423 = vpop.f32.mrf.mxu0
        %v424 = vadd.f32 %v410, %v423
        %425 = vdwg.mxu0
        %426 = vmatpush.bf16.msra.mxu0 0
        %427 = vmatpush.bf16.msra.mxu0 0
        %428 = vmatpush.bf16.msra.mxu0 0
        %429 = vmatpush.bf16.msra.mxu0 0
        %430 = vmatpush.bf16.msra.mxu0 0
        %431 = vmatpush.bf16.msra.mxu0 0
        %432 = vmatpush.bf16.msra.mxu0 %v375
        %433 = vmatpush.bf16.msra.mxu0 %v374
        %434 = vmatmul.bf16.gmra.mxu0 %v396
        %v435 = vpop.f32.mrf.mxu0
        %v436 = vadd.f32 %v422, %v435
        %v437 = vpop.f32.mrf.mxu0
        %v438 = vadd.f32 %v424, %v437
        %439 = vdwg.mxu0
        %s440 = smul.addr %s264, 4
        %s441 = scalar_lea.vmem %s212, %s440
        %v442 = vld [vmem:[%s441] sm:$0xff]
        %v443 = vld [vmem:[%s441 + $0x8] sm:$0xf]
        %v444 = vld [vmem:[%s441 + $0xc] sm:$0x11]
        %v445 = vld [vmem:[%s441 + $0x14] sm:$0x1]
        %v450 = vunpack.c.l.b16 %v442
        %v451 = vunpack.c.h.b16 %v442
        %v452 = vunpack.c.l.b16 %v443
        %v453 = vunpack.c.l.b16 %v444
        %v454 = vunpack.c.h.b16 %v444
        %v455 = vunpack.c.l.b16 %v445
        %v456 = vpack.c.b16 %v453, %v450
        %v457 = vpack.c.b16 %v454, %v451
        %v458 = vpack.c.b16 %v455, %v452
        %v462 = vsel %vm394, %v458, 0
        %464 = vmatpush.bf16.msra.mxu0 %v365
        %465 = vmatpush.bf16.msra.mxu0 %v364
        %466 = vmatpush.bf16.msra.mxu0 %v363
        %467 = vmatpush.bf16.msra.mxu0 %v362
        %468 = vmatpush.bf16.msra.mxu0 %v361
        %469 = vmatpush.bf16.msra.mxu0 %v360
        %470 = vmatpush.bf16.msra.mxu0 %v359
        %471 = vmatpush.bf16.msra.mxu0 %v358
        %472 = vmatmul.bf16.gmra.mxu0 %v456
        %v473 = vpop.f32.mrf.mxu0
        %v474 = vadd.f32 0.0, %v473
        %v475 = vpop.f32.mrf.mxu0
        %v476 = vadd.f32 0.0, %v475
        %477 = vdwg.mxu0
        %478 = vmatpush.bf16.msra.mxu0 %v373
        %479 = vmatpush.bf16.msra.mxu0 %v372
        %480 = vmatpush.bf16.msra.mxu0 %v371
        %481 = vmatpush.bf16.msra.mxu0 %v370
        %482 = vmatpush.bf16.msra.mxu0 %v369
        %483 = vmatpush.bf16.msra.mxu0 %v368
        %484 = vmatpush.bf16.msra.mxu0 %v367
        %485 = vmatpush.bf16.msra.mxu0 %v366
        %486 = vmatmul.bf16.gmra.mxu0 %v457
        %v487 = vpop.f32.mrf.mxu0
        %v488 = vadd.f32 %v474, %v487
        %v489 = vpop.f32.mrf.mxu0
        %v490 = vadd.f32 %v476, %v489
        %491 = vdwg.mxu0
        %492 = vmatpush.bf16.msra.mxu0 0
        %493 = vmatpush.bf16.msra.mxu0 0
        %494 = vmatpush.bf16.msra.mxu0 0
        %495 = vmatpush.bf16.msra.mxu0 0
        %496 = vmatpush.bf16.msra.mxu0 0
        %497 = vmatpush.bf16.msra.mxu0 0
        %498 = vmatpush.bf16.msra.mxu0 %v375
        %499 = vmatpush.bf16.msra.mxu0 %v374
        %500 = vmatmul.bf16.gmra.mxu0 %v462
        %v501 = vpop.f32.mrf.mxu0
        %v502 = vadd.f32 %v488, %v501
        %v503 = vpop.f32.mrf.mxu0
        %v504 = vadd.f32 %v490, %v503
        %505 = vdwg.mxu0
        %s506 = smul.u32 %s263, 6
        %s507 = smul.addr %s506, 4
        %s508 = scalar_lea.vmem %s207, %s507
        %v509 = vld [vmem:[%s508] sm:$0xff]
        %v510 = vld [vmem:[%s508 + $0x8] sm:$0xf]
        %v511 = vld [vmem:[%s508 + $0xc] sm:$0x11]
        %v512 = vld [vmem:[%s508 + $0x14] sm:$0x1]
        %v517 = vunpack.c.l.b16 %v509
        %v518 = vunpack.c.h.b16 %v509
        %v519 = vunpack.c.l.b16 %v510
        %v520 = vunpack.c.l.b16 %v511
        %v521 = vunpack.c.h.b16 %v511
        %v522 = vunpack.c.l.b16 %v512
        %v523 = vpack.c.b16 %v520, %v517
        %v524 = vpack.c.b16 %v521, %v518
        %v525 = vpack.c.b16 %v522, %v519
        %v529 = vsel %vm394, %v525, 0
        %531 = vmatpush.bf16.msra.mxu0 %v365
        %532 = vmatpush.bf16.msra.mxu0 %v364
        %533 = vmatpush.bf16.msra.mxu0 %v363
        %534 = vmatpush.bf16.msra.mxu0 %v362
        %535 = vmatpush.bf16.msra.mxu0 %v361
        %536 = vmatpush.bf16.msra.mxu0 %v360
        %537 = vmatpush.bf16.msra.mxu0 %v359
        %538 = vmatpush.bf16.msra.mxu0 %v358
        %539 = vmatmul.bf16.gmra.mxu0 %v523
        %v540 = vpop.f32.mrf.mxu0
        %v541 = vadd.f32 0.0, %v540
        %v542 = vpop.f32.mrf.mxu0
        %v543 = vadd.f32 0.0, %v542
        %544 = vdwg.mxu0
        %545 = vmatpush.bf16.msra.mxu0 %v373
        %546 = vmatpush.bf16.msra.mxu0 %v372
        %547 = vmatpush.bf16.msra.mxu0 %v371
        %548 = vmatpush.bf16.msra.mxu0 %v370
        %549 = vmatpush.bf16.msra.mxu0 %v369
        %550 = vmatpush.bf16.msra.mxu0 %v368
        %551 = vmatpush.bf16.msra.mxu0 %v367
        %552 = vmatpush.bf16.msra.mxu0 %v366
        %553 = vmatmul.bf16.gmra.mxu0 %v524
        %v554 = vpop.f32.mrf.mxu0
        %v555 = vadd.f32 %v541, %v554
        %v556 = vpop.f32.mrf.mxu0
        %v557 = vadd.f32 %v543, %v556
        %558 = vdwg.mxu0
        %559 = vmatpush.bf16.msra.mxu0 0
        %560 = vmatpush.bf16.msra.mxu0 0
        %561 = vmatpush.bf16.msra.mxu0 0
        %562 = vmatpush.bf16.msra.mxu0 0
        %563 = vmatpush.bf16.msra.mxu0 0
        %564 = vmatpush.bf16.msra.mxu0 0
        %565 = vmatpush.bf16.msra.mxu0 %v375
        %566 = vmatpush.bf16.msra.mxu0 %v374
        %567 = vmatmul.bf16.gmra.mxu0 %v529
        %v568 = vpop.f32.mrf.mxu0
        %v569 = vadd.f32 %v555, %v568
        %v570 = vpop.f32.mrf.mxu0
        %v571 = vadd.f32 %v557, %v570
        %572 = vdwg.mxu0
        %s573 = smul.addr %s506, 4
        %s574 = scalar_lea.vmem %s212, %s573
        %v575 = vld [vmem:[%s574] sm:$0xff]
        %v576 = vld [vmem:[%s574 + $0x8] sm:$0xf]
        %v577 = vld [vmem:[%s574 + $0xc] sm:$0x11]
        %v578 = vld [vmem:[%s574 + $0x14] sm:$0x1]
        %v583 = vunpack.c.l.b16 %v575
        %v584 = vunpack.c.h.b16 %v575
        %v585 = vunpack.c.l.b16 %v576
        %v586 = vunpack.c.l.b16 %v577
        %v587 = vunpack.c.h.b16 %v577
        %v588 = vunpack.c.l.b16 %v578
        %v589 = vpack.c.b16 %v586, %v583
        %v590 = vpack.c.b16 %v587, %v584
        %v591 = vpack.c.b16 %v588, %v585
        %v595 = vsel %vm394, %v591, 0
        %597 = vmatpush.bf16.msra.mxu0 %v365
        %598 = vmatpush.bf16.msra.mxu0 %v364
        %599 = vmatpush.bf16.msra.mxu0 %v363
        %600 = vmatpush.bf16.msra.mxu0 %v362
        %601 = vmatpush.bf16.msra.mxu0 %v361
        %602 = vmatpush.bf16.msra.mxu0 %v360
        %603 = vmatpush.bf16.msra.mxu0 %v359
        %604 = vmatpush.bf16.msra.mxu0 %v358
        %605 = vmatmul.bf16.gmra.mxu0 %v589
        %v606 = vpop.f32.mrf.mxu0
        %v607 = vadd.f32 0.0, %v606
        %v608 = vpop.f32.mrf.mxu0
        %v609 = vadd.f32 0.0, %v608
        %610 = vdwg.mxu0
        %611 = vmatpush.bf16.msra.mxu0 %v373
        %612 = vmatpush.bf16.msra.mxu0 %v372
        %613 = vmatpush.bf16.msra.mxu0 %v371
        %614 = vmatpush.bf16.msra.mxu0 %v370
        %615 = vmatpush.bf16.msra.mxu0 %v369
        %616 = vmatpush.bf16.msra.mxu0 %v368
        %617 = vmatpush.bf16.msra.mxu0 %v367
        %618 = vmatpush.bf16.msra.mxu0 %v366
        %619 = vmatmul.bf16.gmra.mxu0 %v590
        %v620 = vpop.f32.mrf.mxu0
        %v621 = vadd.f32 %v607, %v620
        %v622 = vpop.f32.mrf.mxu0
        %v623 = vadd.f32 %v609, %v622
        %624 = vdwg.mxu0
        %625 = vmatpush.bf16.msra.mxu0 0
        %626 = vmatpush.bf16.msra.mxu0 0
        %627 = vmatpush.bf16.msra.mxu0 0
        %628 = vmatpush.bf16.msra.mxu0 0
        %629 = vmatpush.bf16.msra.mxu0 0
        %630 = vmatpush.bf16.msra.mxu0 0
        %631 = vmatpush.bf16.msra.mxu0 %v375
        %632 = vmatpush.bf16.msra.mxu0 %v374
        %633 = vmatmul.bf16.gmra.mxu0 %v595
        %v634 = vpop.f32.mrf.mxu0
        %v635 = vadd.f32 %v621, %v634
        %v636 = vpop.f32.mrf.mxu0
        %v637 = vadd.f32 %v623, %v636
        %638 = vdwg.mxu0
        %v639 = vmax.f32 %v436, %v502
        %v640 = vmax.f32 %v438, %v504
        %v641 = vmax.f32 %v569, %v635
        %v642 = vmax.f32 %v571, %v637
        %v643 = vmax.f32 %v639, %v641
        %v644 = vmax.f32 %v640, %v642
        %v646 = vperm.slane %v255, 0
        %v648 = vadd.f32 %v643, %v646
        %v649 = vadd.f32 %v644, %v646
        %v650 = vmax.f32 %v648, 0.0
        %v651 = vmax.f32 %v649, 0.0
        %v652 = vpack.c.bf16 %v650, %v650
        %v653 = vpack.c.bf16 %v651, %v651
        %s654 = smul.addr %s262, 4
        %s655 = scalar_lea.vmem %s217, %s654
        %vm656 = vcmask 257024
        %657 = vst.msk [vmem:[%s655] sm:$0xf] %vm656, %v652
        %vm658 = vcmask 253952
        %659 = vst.msk [vmem:[%s655 + $0x4] sm:$0x1] %vm658, %v653
      $region41: #{bt_model_forward.6} parent=35 // loop_footer
        %s261 = sadd.s32 1, %s257
      $region42: #{bt_model_forward.6} parent=35 // loop_footer_branch
        %256 = sbr.rel target = $region38
      $region43: #{bt_model_forward.6} parent=35 // loop_exit
        _
      %p660 = scmp.lt.s32.totalorder %s15, 1
      %s661 = scalar_select %p660, %s15, 1
      %s662 = smul.addr %s661, 20
      %s663 = smul.addr %s662, 4
      %s664 = scalar_lea.vmem %s4, %s663
      // Predicated region
      $region44: #{bt_model_forward.6} parent=35 // pred_check
        %p665 = pneg %p127
      $region45: #{bt_model_forward.6} parent=35 // pred_check_branch
        %667 = sbr.rel (%p665) target = $region47
      $region46: #{bt_model_forward.6} parent=35 // pred_region
        _
      $region47: #{bt_model_forward.6} parent=35 // pred_fallthru
        _
    $region36: #{bt_model_forward.6} parent=5 // pred_fallthru
      _
    %p668 = scmp.le.s32.totalorder 2, %s10
    // Predicated region
    $region48: #{bt_model_forward.6} parent=5 // pred_check
      %p669 = pneg %p668
    $region49: #{bt_model_forward.6} parent=5 // pred_check_branch
      %671 = sbr.rel (%p669) target = $region51
    $region50: #{bt_model_forward.6} parent=5 // pred_region
      %s672 = ssub.s32 %s10, 2
      // Predicated region
      $region52: #{bt_model_forward.6} parent=50 // pred_check
        %p673 = pneg %p133
      $region53: #{bt_model_forward.6} parent=50 // pred_check_branch
        %675 = sbr.rel (%p673) target = $region55
      $region54: #{bt_model_forward.6} parent=50 // pred_region
        %p676 = scmp.lt.s32.totalorder %s16, 1
        %s677 = scalar_select %p676, %s16, 1
        %s678 = smul.addr %s677, 20
        %s679 = smul.addr %s678, 4
        %s680 = scalar_lea.vmem %s4, %s679
      $region55: #{bt_model_forward.6} parent=50 // pred_fallthru
        _
    $region51: #{bt_model_forward.6} parent=5 // pred_fallthru
      _
  $region6: #{bt_model_forward.6} parent=0 // loop_footer
    %s14 = sadd.s32 1, %s10
  $region7: #{bt_model_forward.6} parent=0 // loop_footer_branch
    %9 = sbr.rel target = $region3
  $region8: #{bt_model_forward.6} parent=0 // loop_exit
    _

// kernel: bt_model_forward.8
$region0: #{bt_model_forward.8}
  #allocation0 [shape = 'u32[]', space=smem, size = 0x4, offset = 0x4, fixed_abs, tag = 'smem constant byte address 0x4 - core index']
  #allocation1 [shape = 'u32[72,128]{1,0:T(1,128)}', space=vmem, size = 0x9000, scoped, tag = 'internal scratch']
  %s0 = inlined_call_operand.vmem [shape: bf16[2,2,1,288], index: 0, kind: input, shape index: {}]
  %s1 = inlined_call_operand.vmem [shape: bf16[2,2,1,288], index: 1, kind: input, shape index: {}]
  %s2 = inlined_call_operand.vmem [shape: bf16[288,32], index: 2, kind: input, shape index: {}]
  %s3 = inlined_call_operand.vmem [shape: f32[1,32], index: 3, kind: input, shape index: {}]
  %s4 = inlined_call_operand.vmem [shape: bf16[2,1,1,32], index: 4, kind: output, shape index: {}]
  %s5 = sld [smem:[#allocation0]]
  $region49: #{bt_model_forward.8} parent=0
    _
  %s7 = ssub.s32 1, %s5
  %s8 = scalar_select 0, %s7, %s5
  loop: start=0, step=1, limit=4
  $region2: #{bt_model_forward.8} parent=0 // loop_pre_header
    _
  $region3: #{bt_model_forward.8} parent=0 // loop_header
    %s10 = sphi 0, %s14
    %p11 = scmp.ge.s32.totalorder %s10, 4
    %s20 = sphi 0, %s22
    %s23 = sphi 0, %s20
    %s24 = sphi 0, %s23
    %s40 = sphi 0, %s24
    %s46 = sphi 0, %s48
    %s49 = sphi 0, %s46
    %s50 = sphi 0, %s49
    %s66 = sphi 0, %s50
    %s70 = sphi 0, %s70
    %s72 = sphi 0, %s70
    %s73 = sphi 0, %s72
    %s87 = sphi 0, %s73
    %s91 = sphi 0, %s91
    %s93 = sphi 0, %s91
    %s94 = sphi 0, %s93
    %s108 = sphi 0, %s94
    %s114 = sphi 0, %s116
    %s117 = sphi 0, %s114
    %s118 = sphi 0, %s117
    %s134 = sphi 0, %s118
  $region4: #{bt_model_forward.8} parent=0 // loop_header_branch
    %13 = sbr.rel (%p11) target = $region8
  $region5: #{bt_model_forward.8} parent=0 // loop_body
    %s15 = ssub.s32 %s10, 1
    %s16 = ssub.s32 %s10, 2
    %s17 = sadd.s32 %s10, 1
    %s18 = ssub.s32 %s10, %s17
    %p19 = scmp.eq.s32.totalorder %s18, 0
    %s21 = sadd.s32 %s20, 1
    %s22 = scalar_select %p19, %s20, %s21
    %p25 = pneg %p19
    %p26 = scmp.eq.s32.totalorder %s10, 1
    %p27 = por %p25, %p26
    %p28 = scmp.ne.s32.totalorder %s20, %s23
    %p29 = scmp.eq.s32.totalorder %s10, 0
    %p30 = por %p28, %p29
    %p31 = scmp.ne.s32.totalorder %s20, %s23
    %p32 = scmp.eq.s32.totalorder %s15, 1
    %p33 = por %p31, %p32
    %p34 = scmp.ne.s32.totalorder %s23, %s24
    %p35 = scmp.eq.s32.totalorder %s15, 0
    %p36 = por %p34, %p35
    %p37 = scmp.ne.s32.totalorder %s23, %s24
    %p38 = scmp.eq.s32.totalorder %s16, 1
    %p39 = por %p37, %p38
    %p41 = scmp.ne.s32.totalorder %s24, %s40
    %p42 = scmp.eq.s32.totalorder %s16, 0
    %p43 = por %p41, %p42
    %s44 = ssub.s32 %s10, %s17
    %p45 = scmp.eq.s32.totalorder %s44, 0
    %s47 = sadd.s32 %s46, 1
    %s48 = scalar_select %p45, %s46, %s47
    %p51 = pneg %p45
    %p52 = scmp.eq.s32.totalorder %s10, 1
    %p53 = por %p51, %p52
    %p54 = scmp.ne.s32.totalorder %s46, %s49
    %p55 = scmp.eq.s32.totalorder %s10, 0
    %p56 = por %p54, %p55
    %p57 = scmp.ne.s32.totalorder %s46, %s49
    %p58 = scmp.eq.s32.totalorder %s15, 1
    %p59 = por %p57, %p58
    %p60 = scmp.ne.s32.totalorder %s49, %s50
    %p61 = scmp.eq.s32.totalorder %s15, 0
    %p62 = por %p60, %p61
    %p63 = scmp.ne.s32.totalorder %s49, %s50
    %p64 = scmp.eq.s32.totalorder %s16, 1
    %p65 = por %p63, %p64
    %p67 = scmp.ne.s32.totalorder %s50, %s66
    %p68 = scmp.eq.s32.totalorder %s16, 0
    %p69 = por %p67, %p68
    %s71 = sadd.s32 %s70, 1
    %p74 = scmp.eq.s32.totalorder %s10, 1
    %p75 = scmp.ne.s32.totalorder %s70, %s72
    %p76 = scmp.eq.s32.totalorder %s10, 0
    %p77 = por %p75, %p76
    %p78 = scmp.ne.s32.totalorder %s70, %s72
    %p79 = scmp.eq.s32.totalorder %s15, 1
    %p80 = por %p78, %p79
    %p81 = scmp.ne.s32.totalorder %s72, %s73
    %p82 = scmp.eq.s32.totalorder %s15, 0
    %p83 = por %p81, %p82
    %p84 = scmp.ne.s32.totalorder %s72, %s73
    %p85 = scmp.eq.s32.totalorder %s16, 1
    %p86 = por %p84, %p85
    %p88 = scmp.ne.s32.totalorder %s73, %s87
    %p89 = scmp.eq.s32.totalorder %s16, 0
    %p90 = por %p88, %p89
    %s92 = sadd.s32 %s91, 1
    %p95 = scmp.eq.s32.totalorder %s10, 1
    %p96 = scmp.ne.s32.totalorder %s91, %s93
    %p97 = scmp.eq.s32.totalorder %s10, 0
    %p98 = por %p96, %p97
    %p99 = scmp.ne.s32.totalorder %s91, %s93
    %p100 = scmp.eq.s32.totalorder %s15, 1
    %p101 = por %p99, %p100
    %p102 = scmp.ne.s32.totalorder %s93, %s94
    %p103 = scmp.eq.s32.totalorder %s15, 0
    %p104 = por %p102, %p103
    %p105 = scmp.ne.s32.totalorder %s93, %s94
    %p106 = scmp.eq.s32.totalorder %s16, 1
    %p107 = por %p105, %p106
    %p109 = scmp.ne.s32.totalorder %s94, %s108
    %p110 = scmp.eq.s32.totalorder %s16, 0
    %p111 = por %p109, %p110
    %s112 = ssub.s32 %s10, %s17
    %p113 = scmp.eq.s32.totalorder %s112, 0
    %s115 = sadd.s32 %s114, 1
    %s116 = scalar_select %p113, %s114, %s115
    %p119 = pneg %p113
    %p120 = scmp.eq.s32.totalorder %s10, 1
    %p121 = por %p119, %p120
    %p122 = scmp.ne.s32.totalorder %s114, %s117
    %p123 = scmp.eq.s32.totalorder %s10, 0
    %p124 = por %p122, %p123
    %p125 = scmp.ne.s32.totalorder %s114, %s117
    %p126 = scmp.eq.s32.totalorder %s15, 1
    %p127 = por %p125, %p126
    %p128 = scmp.ne.s32.totalorder %s117, %s118
    %p129 = scmp.eq.s32.totalorder %s15, 0
    %p130 = por %p128, %p129
    %p131 = scmp.ne.s32.totalorder %s117, %s118
    %p132 = scmp.eq.s32.totalorder %s16, 1
    %p133 = por %p131, %p132
    %p135 = scmp.ne.s32.totalorder %s118, %s134
    %p136 = scmp.eq.s32.totalorder %s16, 0
    %p137 = por %p135, %p136
    %p138 = scmp.le.s32.totalorder 1, %s10
    %p139 = scmp.lt.s32.totalorder %s10, 3
    %p140 = pnand %p138, %p139
    %p141 = pneg %p140
    // Predicated region
    $region9: #{bt_model_forward.8} parent=5 // pred_check
      _
    $region10: #{bt_model_forward.8} parent=5 // pred_check_branch
      %143 = sbr.rel (%p140) target = $region12
    $region11: #{bt_model_forward.8} parent=5 // pred_region
      %s144 = ssub.s32 %s10, 1
      // Predicated region
      $region13: #{bt_model_forward.8} parent=11 // pred_check
        %p145 = pneg %p83
      $region14: #{bt_model_forward.8} parent=11 // pred_check_branch
        %147 = sbr.rel (%p145) target = $region16
      $region15: #{bt_model_forward.8} parent=11 // pred_region
        _
      $region16: #{bt_model_forward.8} parent=11 // pred_fallthru
        _
      // Predicated region
      $region17: #{bt_model_forward.8} parent=11 // pred_check
        %p148 = pneg %p104
      $region18: #{bt_model_forward.8} parent=11 // pred_check_branch
        %150 = sbr.rel (%p148) target = $region20
      $region19: #{bt_model_forward.8} parent=11 // pred_region
        _
      $region20: #{bt_model_forward.8} parent=11 // pred_fallthru
        _
    $region12: #{bt_model_forward.8} parent=5 // pred_fallthru
      _
    %p151 = scmp.lt.s32.totalorder %s10, 2
    // Predicated region
    $region21: #{bt_model_forward.8} parent=5 // pred_check
      %p152 = pneg %p151
    $region22: #{bt_model_forward.8} parent=5 // pred_check_branch
      %154 = sbr.rel (%p152) target = $region24
    $region23: #{bt_model_forward.8} parent=5 // pred_region
      // Predicated region
      $region25: #{bt_model_forward.8} parent=23 // pred_check
        %p155 = pneg %p30
      $region26: #{bt_model_forward.8} parent=23 // pred_check_branch
        %157 = sbr.rel (%p155) target = $region28
      $region27: #{bt_model_forward.8} parent=23 // pred_region
        %p158 = scmp.lt.s32.totalorder %s10, 1
        %s159 = scalar_select %p158, %s10, 1
        %s160 = smul.addr %s159, 6
        %s161 = scalar_lea.vmem %s0, %s160
      $region28: #{bt_model_forward.8} parent=23 // pred_fallthru
        _
      // Predicated region
      $region29: #{bt_model_forward.8} parent=23 // pred_check
        %p162 = pneg %p56
      $region30: #{bt_model_forward.8} parent=23 // pred_check_branch
        %164 = sbr.rel (%p162) target = $region32
      $region31: #{bt_model_forward.8} parent=23 // pred_region
        %p165 = scmp.lt.s32.totalorder %s10, 1
        %s166 = scalar_select %p165, %s10, 1
        %s167 = smul.addr %s166, 6
        %s168 = scalar_lea.vmem %s1, %s167
      $region32: #{bt_model_forward.8} parent=23 // pred_fallthru
        _
    $region24: #{bt_model_forward.8} parent=5 // pred_fallthru
      _
    %p169 = scmp.le.s32.totalorder 1, %s10
    %p170 = scmp.lt.s32.totalorder %s10, 3
    %p171 = pnand %p169, %p170
    %p172 = pneg %p171
    // Predicated region
    $region33: #{bt_model_forward.8} parent=5 // pred_check
      _
    $region34: #{bt_model_forward.8} parent=5 // pred_check_branch
      %174 = sbr.rel (%p171) target = $region36
    $region35: #{bt_model_forward.8} parent=5 // pred_region
      %s175 = ssub.s32 %s10, 1
      %p176 = scmp.lt.s32.totalorder %s15, 1
      %s177 = scalar_select %p176, %s15, 1
      %s178 = smul.addr %s177, 6
      %s179 = scalar_lea.vmem %s0, %s178
      %p180 = pneg %p36
      %p181 = pneg %p33
      %p182 = scmp.lt.s32.totalorder %s15, 1
      %s183 = scalar_select %p182, %s15, 1
      %s184 = smul.addr %s183, 6
      %s185 = scalar_lea.vmem %s1, %s184
      %p186 = pneg %p62
      %p187 = pneg %p59
      %p188 = pneg %p83
      %p189 = pneg %p80
      %p190 = pneg %p104
      %p191 = pneg %p101
      %p192 = pneg %p130
      %p193 = pneg %p127
      %p194 = scmp.lt.s32.totalorder %s15, 1
      %s195 = scalar_select %p194, %s15, 1
      %s196 = scalar_lea.vmem %s4, %s195
      %p197 = scmp.lt.s32.totalorder %s15, 1
      %s198 = scalar_select %p197, %s15, 1
      %s199 = smul.addr %s198, 6
      %s200 = scalar_lea.vmem %s0, %s199
      %p201 = scmp.lt.s32.totalorder %s15, 1
      %s202 = scalar_select %p201, %s15, 1
      %s203 = smul.addr %s202, 6
      %s204 = scalar_lea.vmem %s1, %s203
      %p205 = scmp.lt.s32.totalorder %s15, 1
      %s206 = scalar_select %p205, %s15, 1
      %s207 = scalar_lea.vmem %s4, %s206
      %v209 = vld [vmem:[%s2] sm:$0xf]
      %v210 = vld [vmem:[%s2 + $0x4] sm:$0xf]
      %v211 = vld [vmem:[%s2 + $0x8] sm:$0xf]
      %v212 = vld [vmem:[%s2 + $0xc] sm:$0xf]
      %v213 = vld [vmem:[%s2 + $0x10] sm:$0xf]
      %v214 = vld [vmem:[%s2 + $0x14] sm:$0xf]
      %v215 = vld [vmem:[%s2 + $0x18] sm:$0xf]
      %v216 = vld [vmem:[%s2 + $0x1c] sm:$0xf]
      %v217 = vld [vmem:[%s2 + $0x20] sm:$0xf]
      %v218 = vld [vmem:[%s2 + $0x24] sm:$0xf]
      %v219 = vld [vmem:[%s2 + $0x28] sm:$0xf]
      %v220 = vld [vmem:[%s2 + $0x2c] sm:$0xf]
      %v221 = vld [vmem:[%s2 + $0x30] sm:$0xf]
      %v222 = vld [vmem:[%s2 + $0x34] sm:$0xf]
      %v223 = vld [vmem:[%s2 + $0x38] sm:$0xf]
      %v224 = vld [vmem:[%s2 + $0x3c] sm:$0xf]
      %v225 = vld [vmem:[%s2 + $0x40] sm:$0xf]
      %v226 = vld [vmem:[%s2 + $0x44] sm:$0xf]
      %v227 = vld [vmem:[%s2 + $0x48] sm:$0xf]
      %v228 = vld [vmem:[%s2 + $0x4c] sm:$0xf]
      %v229 = vld [vmem:[%s2 + $0x50] sm:$0xf]
      %v230 = vld [vmem:[%s2 + $0x54] sm:$0xf]
      %v231 = vld [vmem:[%s2 + $0x58] sm:$0xf]
      %v232 = vld [vmem:[%s2 + $0x5c] sm:$0xf]
      %v233 = vld [vmem:[%s2 + $0x60] sm:$0xf]
      %v234 = vld [vmem:[%s2 + $0x64] sm:$0xf]
      %v235 = vld [vmem:[%s2 + $0x68] sm:$0xf]
      %v236 = vld [vmem:[%s2 + $0x6c] sm:$0xf]
      %v237 = vld [vmem:[%s2 + $0x70] sm:$0xf]
      %v238 = vld [vmem:[%s2 + $0x74] sm:$0xf]
      %v239 = vld [vmem:[%s2 + $0x78] sm:$0xf]
      %v240 = vld [vmem:[%s2 + $0x7c] sm:$0xf]
      %v241 = vld [vmem:[%s2 + $0x80] sm:$0xf]
      %v242 = vld [vmem:[%s2 + $0x84] sm:$0xf]
      %v243 = vld [vmem:[%s2 + $0x88] sm:$0xf]
      %v244 = vld [vmem:[%s2 + $0x8c] sm:$0xf]
      %v245 = vld [vmem:[%s3] sm:$0x1]
      %v246 = vld [vmem:[%s200] sm:$0x7]
      %248 = vst [vmem:[#allocation1] ss:$9 sm:$0xff] %v246
      %v249 = vld [vmem:[#allocation1] sm:$0xff]
      %v250 = vld [vmem:[#allocation1 + $0x9] sm:$0xff]
      %v251 = vld [vmem:[#allocation1 + $0x12] sm:$0xff]
      %v290 = vunpack.c.l.b16 %v209
      %v291 = vunpack.c.l.b16 %v210
      %v292 = vunpack.c.l.b16 %v211
      %v293 = vunpack.c.l.b16 %v212
      %v294 = vunpack.c.l.b16 %v213
      %v295 = vunpack.c.l.b16 %v214
      %v296 = vunpack.c.l.b16 %v215
      %v297 = vunpack.c.l.b16 %v216
      %v298 = vunpack.c.l.b16 %v217
      %v299 = vunpack.c.l.b16 %v218
      %v300 = vunpack.c.l.b16 %v219
      %v301 = vunpack.c.l.b16 %v220
      %v302 = vunpack.c.l.b16 %v221
      %v303 = vunpack.c.l.b16 %v222
      %v304 = vunpack.c.l.b16 %v223
      %v305 = vunpack.c.l.b16 %v224
      %v306 = vunpack.c.l.b16 %v225
      %v307 = vunpack.c.l.b16 %v226
      %v308 = vunpack.c.l.b16 %v227
      %v309 = vunpack.c.l.b16 %v228
      %v310 = vunpack.c.l.b16 %v229
      %v311 = vunpack.c.l.b16 %v230
      %v312 = vunpack.c.l.b16 %v231
      %v313 = vunpack.c.l.b16 %v232
      %v314 = vunpack.c.l.b16 %v233
      %v315 = vunpack.c.l.b16 %v234
      %v316 = vunpack.c.l.b16 %v235
      %v317 = vunpack.c.l.b16 %v236
      %v318 = vunpack.c.l.b16 %v237
      %v319 = vunpack.c.l.b16 %v238
      %v320 = vunpack.c.l.b16 %v239
      %v321 = vunpack.c.l.b16 %v240
      %v322 = vunpack.c.l.b16 %v241
      %v323 = vunpack.c.l.b16 %v242
      %v324 = vunpack.c.l.b16 %v243
      %v325 = vunpack.c.l.b16 %v244
      %v326 = vpack.c.b16 %v291, %v290
      %v327 = vpack.c.b16 %v293, %v292
      %v328 = vpack.c.b16 %v295, %v294
      %v329 = vpack.c.b16 %v297, %v296
      %v330 = vpack.c.b16 %v299, %v298
      %v331 = vpack.c.b16 %v301, %v300
      %v332 = vpack.c.b16 %v303, %v302
      %v333 = vpack.c.b16 %v305, %v304
      %v334 = vpack.c.b16 %v307, %v306
      %v335 = vpack.c.b16 %v309, %v308
      %v336 = vpack.c.b16 %v311, %v310
      %v337 = vpack.c.b16 %v313, %v312
      %v338 = vpack.c.b16 %v315, %v314
      %v339 = vpack.c.b16 %v317, %v316
      %v340 = vpack.c.b16 %v319, %v318
      %v341 = vpack.c.b16 %v321, %v320
      %v342 = vpack.c.b16 %v323, %v322
      %v343 = vpack.c.b16 %v325, %v324
      %vm362 = vcmask 261120
      %v363 = vsel %vm362, %v251, 0
      %365 = vmatpush.bf16.msra.mxu0 %v333
      %366 = vmatpush.bf16.msra.mxu0 %v332
      %367 = vmatpush.bf16.msra.mxu0 %v331
      %368 = vmatpush.bf16.msra.mxu0 %v330
      %369 = vmatpush.bf16.msra.mxu0 %v329
      %370 = vmatpush.bf16.msra.mxu0 %v328
      %371 = vmatpush.bf16.msra.mxu0 %v327
      %372 = vmatpush.bf16.msra.mxu0 %v326
      %373 = vmatmul.bf16.gmra.mxu0 %v249
      %v374 = vpop.f32.mrf.mxu0
      %v375 = vadd.f32 0.0, %v374
      %v376 = vpop.f32.mrf.mxu0
      %377 = vdwg.mxu0
      %378 = vmatpush.bf16.msra.mxu0 %v341
      %379 = vmatpush.bf16.msra.mxu0 %v340
      %380 = vmatpush.bf16.msra.mxu0 %v339
      %381 = vmatpush.bf16.msra.mxu0 %v338
      %382 = vmatpush.bf16.msra.mxu0 %v337
      %383 = vmatpush.bf16.msra.mxu0 %v336
      %384 = vmatpush.bf16.msra.mxu0 %v335
      %385 = vmatpush.bf16.msra.mxu0 %v334
      %386 = vmatmul.bf16.gmra.mxu0 %v250
      %v387 = vpop.f32.mrf.mxu0
      %v388 = vadd.f32 %v375, %v387
      %v389 = vpop.f32.mrf.mxu0
      %390 = vdwg.mxu0
      %391 = vmatpush.bf16.msra.mxu0 0
      %392 = vmatpush.bf16.msra.mxu0 0
      %393 = vmatpush.bf16.msra.mxu0 0
      %394 = vmatpush.bf16.msra.mxu0 0
      %395 = vmatpush.bf16.msra.mxu0 0
      %396 = vmatpush.bf16.msra.mxu0 0
      %397 = vmatpush.bf16.msra.mxu0 %v343
      %398 = vmatpush.bf16.msra.mxu0 %v342
      %399 = vmatmul.bf16.gmra.mxu0 %v363
      %v400 = vpop.f32.mrf.mxu0
      %v401 = vadd.f32 %v388, %v400
      %v402 = vpop.f32.mrf.mxu0
      %403 = vdwg.mxu0
      %v404 = vld [vmem:[%s204] sm:$0x7]
      %406 = vst [vmem:[#allocation1] ss:$9 sm:$0xff] %v404
      %v407 = vld [vmem:[#allocation1] sm:$0xff]
      %v408 = vld [vmem:[#allocation1 + $0x9] sm:$0xff]
      %v409 = vld [vmem:[#allocation1 + $0x12] sm:$0xff]
      %v412 = vsel %vm362, %v409, 0
      %414 = vmatpush.bf16.msra.mxu0 %v333
      %415 = vmatpush.bf16.msra.mxu0 %v332
      %416 = vmatpush.bf16.msra.mxu0 %v331
      %417 = vmatpush.bf16.msra.mxu0 %v330
      %418 = vmatpush.bf16.msra.mxu0 %v329
      %419 = vmatpush.bf16.msra.mxu0 %v328
      %420 = vmatpush.bf16.msra.mxu0 %v327
      %421 = vmatpush.bf16.msra.mxu0 %v326
      %422 = vmatmul.bf16.gmra.mxu0 %v407
      %v423 = vpop.f32.mrf.mxu0
      %v424 = vadd.f32 0.0, %v423
      %v425 = vpop.f32.mrf.mxu0
      %426 = vdwg.mxu0
      %427 = vmatpush.bf16.msra.mxu0 %v341
      %428 = vmatpush.bf16.msra.mxu0 %v340
      %429 = vmatpush.bf16.msra.mxu0 %v339
      %430 = vmatpush.bf16.msra.mxu0 %v338
      %431 = vmatpush.bf16.msra.mxu0 %v337
      %432 = vmatpush.bf16.msra.mxu0 %v336
      %433 = vmatpush.bf16.msra.mxu0 %v335
      %434 = vmatpush.bf16.msra.mxu0 %v334
      %435 = vmatmul.bf16.gmra.mxu0 %v408
      %v436 = vpop.f32.mrf.mxu0
      %v437 = vadd.f32 %v424, %v436
      %v438 = vpop.f32.mrf.mxu0
      %439 = vdwg.mxu0
      %440 = vmatpush.bf16.msra.mxu0 0
      %441 = vmatpush.bf16.msra.mxu0 0
      %442 = vmatpush.bf16.msra.mxu0 0
      %443 = vmatpush.bf16.msra.mxu0 0
      %444 = vmatpush.bf16.msra.mxu0 0
      %445 = vmatpush.bf16.msra.mxu0 0
      %446 = vmatpush.bf16.msra.mxu0 %v343
      %447 = vmatpush.bf16.msra.mxu0 %v342
      %448 = vmatmul.bf16.gmra.mxu0 %v412
      %v449 = vpop.f32.mrf.mxu0
      %v450 = vadd.f32 %v437, %v449
      %v451 = vpop.f32.mrf.mxu0
      %452 = vdwg.mxu0
      %s453 = scalar_lea.vmem %s200, 3
      %v454 = vld [vmem:[%s453] sm:$0x7]
      %456 = vst [vmem:[#allocation1] ss:$9 sm:$0xff] %v454
      %v457 = vld [vmem:[#allocation1] sm:$0xff]
      %v458 = vld [vmem:[#allocation1 + $0x9] sm:$0xff]
      %v459 = vld [vmem:[#allocation1 + $0x12] sm:$0xff]
      %v462 = vsel %vm362, %v459, 0
      %464 = vmatpush.bf16.msra.mxu0 %v333
      %465 = vmatpush.bf16.msra.mxu0 %v332
      %466 = vmatpush.bf16.msra.mxu0 %v331
      %467 = vmatpush.bf16.msra.mxu0 %v330
      %468 = vmatpush.bf16.msra.mxu0 %v329
      %469 = vmatpush.bf16.msra.mxu0 %v328
      %470 = vmatpush.bf16.msra.mxu0 %v327
      %471 = vmatpush.bf16.msra.mxu0 %v326
      %472 = vmatmul.bf16.gmra.mxu0 %v457
      %v473 = vpop.f32.mrf.mxu0
      %v474 = vadd.f32 0.0, %v473
      %v475 = vpop.f32.mrf.mxu0
      %476 = vdwg.mxu0
      %477 = vmatpush.bf16.msra.mxu0 %v341
      %478 = vmatpush.bf16.msra.mxu0 %v340
      %479 = vmatpush.bf16.msra.mxu0 %v339
      %480 = vmatpush.bf16.msra.mxu0 %v338
      %481 = vmatpush.bf16.msra.mxu0 %v337
      %482 = vmatpush.bf16.msra.mxu0 %v336
      %483 = vmatpush.bf16.msra.mxu0 %v335
      %484 = vmatpush.bf16.msra.mxu0 %v334
      %485 = vmatmul.bf16.gmra.mxu0 %v458
      %v486 = vpop.f32.mrf.mxu0
      %v487 = vadd.f32 %v474, %v486
      %v488 = vpop.f32.mrf.mxu0
      %489 = vdwg.mxu0
      %490 = vmatpush.bf16.msra.mxu0 0
      %491 = vmatpush.bf16.msra.mxu0 0
      %492 = vmatpush.bf16.msra.mxu0 0
      %493 = vmatpush.bf16.msra.mxu0 0
      %494 = vmatpush.bf16.msra.mxu0 0
      %495 = vmatpush.bf16.msra.mxu0 0
      %496 = vmatpush.bf16.msra.mxu0 %v343
      %497 = vmatpush.bf16.msra.mxu0 %v342
      %498 = vmatmul.bf16.gmra.mxu0 %v462
      %v499 = vpop.f32.mrf.mxu0
      %v500 = vadd.f32 %v487, %v499
      %v501 = vpop.f32.mrf.mxu0
      %502 = vdwg.mxu0
      %s503 = scalar_lea.vmem %s204, 3
      %v504 = vld [vmem:[%s503] sm:$0x7]
      %506 = vst [vmem:[#allocation1] ss:$9 sm:$0xff] %v504
      %v507 = vld [vmem:[#allocation1] sm:$0xff]
      %v508 = vld [vmem:[#allocation1 + $0x9] sm:$0xff]
      %v509 = vld [vmem:[#allocation1 + $0x12] sm:$0xff]
      %v512 = vsel %vm362, %v509, 0
      %514 = vmatpush.bf16.msra.mxu0 %v333
      %515 = vmatpush.bf16.msra.mxu0 %v332
      %516 = vmatpush.bf16.msra.mxu0 %v331
      %517 = vmatpush.bf16.msra.mxu0 %v330
      %518 = vmatpush.bf16.msra.mxu0 %v329
      %519 = vmatpush.bf16.msra.mxu0 %v328
      %520 = vmatpush.bf16.msra.mxu0 %v327
      %521 = vmatpush.bf16.msra.mxu0 %v326
      %522 = vmatmul.bf16.gmra.mxu0 %v507
      %v523 = vpop.f32.mrf.mxu0
      %v524 = vadd.f32 0.0, %v523
      %v525 = vpop.f32.mrf.mxu0
      %526 = vdwg.mxu0
      %527 = vmatpush.bf16.msra.mxu0 %v341
      %528 = vmatpush.bf16.msra.mxu0 %v340
      %529 = vmatpush.bf16.msra.mxu0 %v339
      %530 = vmatpush.bf16.msra.mxu0 %v338
      %531 = vmatpush.bf16.msra.mxu0 %v337
      %532 = vmatpush.bf16.msra.mxu0 %v336
      %533 = vmatpush.bf16.msra.mxu0 %v335
      %534 = vmatpush.bf16.msra.mxu0 %v334
      %535 = vmatmul.bf16.gmra.mxu0 %v508
      %v536 = vpop.f32.mrf.mxu0
      %v537 = vadd.f32 %v524, %v536
      %v538 = vpop.f32.mrf.mxu0
      %539 = vdwg.mxu0
      %540 = vmatpush.bf16.msra.mxu0 0
      %541 = vmatpush.bf16.msra.mxu0 0
      %542 = vmatpush.bf16.msra.mxu0 0
      %543 = vmatpush.bf16.msra.mxu0 0
      %544 = vmatpush.bf16.msra.mxu0 0
      %545 = vmatpush.bf16.msra.mxu0 0
      %546 = vmatpush.bf16.msra.mxu0 %v343
      %547 = vmatpush.bf16.msra.mxu0 %v342
      %548 = vmatmul.bf16.gmra.mxu0 %v512
      %v549 = vpop.f32.mrf.mxu0
      %v550 = vadd.f32 %v537, %v549
      %v551 = vpop.f32.mrf.mxu0
      %552 = vdwg.mxu0
      %v553 = vmax.f32 %v401, %v450
      %v554 = vmax.f32 %v500, %v550
      %v555 = vmax.f32 %v553, %v554
      %v556 = vadd.f32 %v555, %v245
      %v557 = vmax.f32 %v556, 0.0
      %v558 = vpack.c.bf16 %v557, %v557
      %vm559 = vcmask 253952
      %vm560 = vsmask.f32 256
      %vm561 = vmand %vm559, %vm560
      %v562 = vld [vmem:[%s207] sm:$0x1]
      %v563 = vsel %vm561, %v558, %v562
      %564 = vst [vmem:[%s207] sm:$0x1] %v563
      %p565 = scmp.lt.s32.totalorder %s15, 1
      %s566 = scalar_select %p565, %s15, 1
      %s567 = scalar_lea.vmem %s4, %s566
      // Predicated region
      $region37: #{bt_model_forward.8} parent=35 // pred_check
        %p568 = pneg %p127
      $region38: #{bt_model_forward.8} parent=35 // pred_check_branch
        %570 = sbr.rel (%p568) target = $region40
      $region39: #{bt_model_forward.8} parent=35 // pred_region
        _
      $region40: #{bt_model_forward.8} parent=35 // pred_fallthru
        _
    $region36: #{bt_model_forward.8} parent=5 // pred_fallthru
      _
    %p571 = scmp.le.s32.totalorder 2, %s10
    // Predicated region
    $region41: #{bt_model_forward.8} parent=5 // pred_check
      %p572 = pneg %p571
    $region42: #{bt_model_forward.8} parent=5 // pred_check_branch
      %574 = sbr.rel (%p572) target = $region44
    $region43: #{bt_model_forward.8} parent=5 // pred_region
      %s575 = ssub.s32 %s10, 2
      // Predicated region
      $region45: #{bt_model_forward.8} parent=43 // pred_check
        %p576 = pneg %p133
      $region46: #{bt_model_forward.8} parent=43 // pred_check_branch
        %578 = sbr.rel (%p576) target = $region48
      $region47: #{bt_model_forward.8} parent=43 // pred_region
        %p579 = scmp.lt.s32.totalorder %s16, 1
        %s580 = scalar_select %p579, %s16, 1
        %s581 = scalar_lea.vmem %s4, %s580
      $region48: #{bt_model_forward.8} parent=43 // pred_fallthru
        _
    $region44: #{bt_model_forward.8} parent=5 // pred_fallthru
      _
  $region6: #{bt_model_forward.8} parent=0 // loop_footer
    %s14 = sadd.s32 1, %s10
  $region7: #{bt_model_forward.8} parent=0 // loop_footer_branch
    %9 = sbr.rel target = $region3
  $region8: #{bt_model_forward.8} parent=0 // loop_exit
    _

// kernel: bt_model_forward.9
$region0: #{bt_model_forward.9}
  #allocation0 [shape = 'u32[]', space=smem, size = 0x4, offset = 0x4, fixed_abs, tag = 'smem constant byte address 0x4 - core index']
  #allocation1 [shape = 'u32[72,128]{1,0:T(1,128)}', space=vmem, size = 0x9000, scoped, tag = 'internal scratch']
  #allocation2 [shape = 'f32[1,1]{1,0:T(1,128)S(1)}', space=vmem, size = 0x200, scoped, tag = 'scoped memory for bt_model_forward.9']
  %s0 = inlined_call_operand.vmem [shape: bf16[2,32], index: 0, kind: input, shape index: {}]
  %s1 = inlined_call_operand.vmem [shape: bf16[32,128], index: 1, kind: input, shape index: {}]
  %s2 = inlined_call_operand.vmem [shape: f32[1,128], index: 2, kind: input, shape index: {}]
  %s3 = inlined_call_operand.vmem [shape: f32[128,1], index: 3, kind: input, shape index: {}]
  %s4 = inlined_call_operand.<no memory space> [shape: f32[1,1], index: 4, kind: input, shape index: {}]
  %s5 = inlined_call_operand.vmem [shape: f32[2,1], index: 5, kind: output, shape index: {}]
  %s6 = sld [smem:[#allocation0]]
  $region30: #{bt_model_forward.9} parent=0
    _
  %s8 = ssub.s32 1, %s6
  %s9 = scalar_select 0, %s8, %s6
  %v10 = vstv %s4
  %11 = vst [vmem:[#allocation2] sm:$0x1] %v10
  // Predicated region
  $region2: #{bt_model_forward.9} parent=0 // pred_check
    _
  $region3: #{bt_model_forward.9} parent=0 // pred_check_branch
    %13 = sbr.rel (0) target = $region5
  $region4: #{bt_model_forward.9} parent=0 // pred_region
    _
  $region5: #{bt_model_forward.9} parent=0 // pred_fallthru
    _
  // Predicated region
  $region6: #{bt_model_forward.9} parent=0 // pred_check
    _
  $region7: #{bt_model_forward.9} parent=0 // pred_check_branch
    %15 = sbr.rel (0) target = $region9
  $region8: #{bt_model_forward.9} parent=0 // pred_region
    _
  $region9: #{bt_model_forward.9} parent=0 // pred_fallthru
    _
  // Predicated region
  $region10: #{bt_model_forward.9} parent=0 // pred_check
    _
  $region11: #{bt_model_forward.9} parent=0 // pred_check_branch
    %17 = sbr.rel (0) target = $region13
  $region12: #{bt_model_forward.9} parent=0 // pred_region
    _
  $region13: #{bt_model_forward.9} parent=0 // pred_fallthru
    _
  // Predicated region
  $region14: #{bt_model_forward.9} parent=0 // pred_check
    _
  $region15: #{bt_model_forward.9} parent=0 // pred_check_branch
    %19 = sbr.rel (0) target = $region17
  $region16: #{bt_model_forward.9} parent=0 // pred_region
    _
  $region17: #{bt_model_forward.9} parent=0 // pred_fallthru
    _
  // Predicated region
  $region18: #{bt_model_forward.9} parent=0 // pred_check
    _
  $region19: #{bt_model_forward.9} parent=0 // pred_check_branch
    %21 = sbr.rel (0) target = $region21
  $region20: #{bt_model_forward.9} parent=0 // pred_region
    _
  $region21: #{bt_model_forward.9} parent=0 // pred_fallthru
    _
  %v23 = vld [vmem:[%s0] sm:$0x1]
  %v24 = vld [vmem:[%s1] sm:$0xf]
  %v25 = vld [vmem:[%s1 + $0x4] sm:$0xf]
  %v26 = vld [vmem:[%s1 + $0x8] sm:$0xf]
  %v27 = vld [vmem:[%s1 + $0xc] sm:$0xf]
  %v28 = vld [vmem:[%s2] sm:$0x1]
  %v30 = vperm.slane %v28, 0
  %v36 = vunpack.c.l.b16 %v24
  %v37 = vunpack.c.l.b16 %v25
  %v38 = vunpack.c.l.b16 %v26
  %v39 = vunpack.c.l.b16 %v27
  %v40 = vpack.c.b16 %v37, %v36
  %v41 = vpack.c.b16 %v39, %v38
  %vm44 = vcmask 261120
  %v46 = vsel %vm44, %v23, 0
  %48 = vmatpush.bf16.msra.mxu0 0
  %49 = vmatpush.bf16.msra.mxu0 0
  %50 = vmatpush.bf16.msra.mxu0 0
  %51 = vmatpush.bf16.msra.mxu0 0
  %52 = vmatpush.bf16.msra.mxu0 0
  %53 = vmatpush.bf16.msra.mxu0 0
  %54 = vmatpush.bf16.msra.mxu0 %v41
  %55 = vmatpush.bf16.msra.mxu0 %v40
  %56 = vmatmul.bf16.gmra.mxu0 %v46
  %v57 = vpop.f32.mrf.mxu0
  %v58 = vadd.f32 %v30, %v57
  %v59 = vpop.f32.mrf.mxu0
  %60 = vdwg.mxu0
  %v61 = vmax.f32 %v58, 0.0
  %v62 = vld [vmem:[%s3] sm:$0xff]
  %v63 = vld [vmem:[%s3 + $0x8] sm:$0xff]
  %v64 = vld [vmem:[%s3 + $0x10] sm:$0xff]
  %v65 = vld [vmem:[%s3 + $0x18] sm:$0xff]
  %v66 = vld [vmem:[%s3 + $0x20] sm:$0xff]
  %v67 = vld [vmem:[%s3 + $0x28] sm:$0xff]
  %v68 = vld [vmem:[%s3 + $0x30] sm:$0xff]
  %v69 = vld [vmem:[%s3 + $0x38] sm:$0xff]
  %v70 = vld [vmem:[%s3 + $0x40] sm:$0xff]
  %v71 = vld [vmem:[%s3 + $0x48] sm:$0xff]
  %v72 = vld [vmem:[%s3 + $0x50] sm:$0xff]
  %v73 = vld [vmem:[%s3 + $0x58] sm:$0xff]
  %v74 = vld [vmem:[%s3 + $0x60] sm:$0xff]
  %v75 = vld [vmem:[%s3 + $0x68] sm:$0xff]
  %v76 = vld [vmem:[%s3 + $0x70] sm:$0xff]
  %v77 = vld [vmem:[%s3 + $0x78] sm:$0xff]
  %v78 = vld [vmem:[#allocation2] sm:$0x1]
  %v80 = vperm.slane %v78, 0
  %82 = vmatpush.msra.mxu0 %v77
  %83 = vmatpush.msra.mxu0 %v76
  %84 = vmatpush.msra.mxu0 %v75
  %85 = vmatpush.msra.mxu0 %v74
  %86 = vmatpush.msra.mxu0 %v73
  %87 = vmatpush.msra.mxu0 %v72
  %88 = vmatpush.msra.mxu0 %v71
  %89 = vmatpush.msra.mxu0 %v70
  %90 = vmatpush.msra.mxu0 %v69
  %91 = vmatpush.msra.mxu0 %v68
  %92 = vmatpush.msra.mxu0 %v67
  %93 = vmatpush.msra.mxu0 %v66
  %94 = vmatpush.msra.mxu0 %v65
  %95 = vmatpush.msra.mxu0 %v64
  %96 = vmatpush.msra.mxu0 %v63
  %97 = vmatpush.msra.mxu0 %v62
  %98 = vmatmul.f32.gmra.mxu0 %v61
  %v99 = vpop.f32.mrf.mxu0
  %v100 = vadd.f32 %v80, %v99
  %101 = vdwg.mxu0
  %v102 = vxor.u32 %v100, 2147483648
  %v103 = vmul.f32 %v102, 1.442695
  %v104 = vpow.pop %v103
  %v105 = vadd.f32 %v104, 1.0
  %v106 = vrcp.pop %v105
  %v107 = vmul.f32 %v105, %v106
  %v108 = vsub.f32 1.0, %v107
  %v109 = vmul.f32 %v106, %v108
  %v110 = vadd.f32 %v106, %v109
  %vm111 = vweird.f32 %v105
  %vm112 = vweird.f32 %v106
  %vm113 = vmor %vm111, %vm112
  %v114 = vsel %vm113, %v106, %v110
  %v115 = vand.u32 2147483647, %v105
  %vm116 = vcmp.eq.f32.partialorder %v115, 8.507059e+37
  %v117 = vand.u32 %v105, 2147483648
  %v118 = vor.u32 1.1754944e-38, %v117
  %v119 = vsel %vm116, %v118, %v114
  %v120 = vmul.f32 1.0, %v119
  %vm121 = vcmask 1024
  %122 = vst.msk [vmem:[%s5] sm:$0x3] %vm121, %v120
  // Predicated region
  $region22: #{bt_model_forward.9} parent=0 // pred_check
    _
  $region23: #{bt_model_forward.9} parent=0 // pred_check_branch
    %124 = sbr.rel (0) target = $region25
  $region24: #{bt_model_forward.9} parent=0 // pred_region
    _
  $region25: #{bt_model_forward.9} parent=0 // pred_fallthru
    _
  // Predicated region
  $region26: #{bt_model_forward.9} parent=0 // pred_check
    _
  $region27: #{bt_model_forward.9} parent=0 // pred_check_branch
    %126 = sbr.rel (0) target = $region29
  $region28: #{bt_model_forward.9} parent=0 // pred_region
    _
  $region29: #{bt_model_forward.9} parent=0 // pred_fallthru
    _

// kernel: bt_model_forward.7
$region0: #{bt_model_forward.7}
  #allocation0 [shape = 'u32[]', space=smem, size = 0x4, offset = 0x4, fixed_abs, tag = 'smem constant byte address 0x4 - core index']
  #allocation1 [shape = 'u32[72,128]{1,0:T(1,128)}', space=vmem, size = 0x9000, scoped, tag = 'internal scratch']
  %s0 = inlined_call_operand.vmem [shape: bf16[2,8,4,288], index: 0, kind: input, shape index: {}]
  %s1 = inlined_call_operand.vmem [shape: bf16[2,8,4,288], index: 1, kind: input, shape index: {}]
  %s2 = inlined_call_operand.vmem [shape: bf16[288,32], index: 2, kind: input, shape index: {}]
  %s3 = inlined_call_operand.vmem [shape: f32[1,32], index: 3, kind: input, shape index: {}]
  %s4 = inlined_call_operand.vmem [shape: bf16[2,4,4,32], index: 4, kind: output, shape index: {}]
  %s5 = sld [smem:[#allocation0]]
  $region49: #{bt_model_forward.7} parent=0
    _
  %s7 = ssub.s32 1, %s5
  %s8 = scalar_select 0, %s7, %s5
  loop: start=0, step=1, limit=4
  $region2: #{bt_model_forward.7} parent=0 // loop_pre_header
    _
  $region3: #{bt_model_forward.7} parent=0 // loop_header
    %s10 = sphi 0, %s14
    %p11 = scmp.ge.s32.totalorder %s10, 4
    %s20 = sphi 0, %s22
    %s23 = sphi 0, %s20
    %s24 = sphi 0, %s23
    %s40 = sphi 0, %s24
    %s46 = sphi 0, %s48
    %s49 = sphi 0, %s46
    %s50 = sphi 0, %s49
    %s66 = sphi 0, %s50
    %s70 = sphi 0, %s70
    %s72 = sphi 0, %s70
    %s73 = sphi 0, %s72
    %s87 = sphi 0, %s73
    %s91 = sphi 0, %s91
    %s93 = sphi 0, %s91
    %s94 = sphi 0, %s93
    %s108 = sphi 0, %s94
    %s114 = sphi 0, %s116
    %s117 = sphi 0, %s114
    %s118 = sphi 0, %s117
    %s134 = sphi 0, %s118
  $region4: #{bt_model_forward.7} parent=0 // loop_header_branch
    %13 = sbr.rel (%p11) target = $region8
  $region5: #{bt_model_forward.7} parent=0 // loop_body
    %s15 = ssub.s32 %s10, 1
    %s16 = ssub.s32 %s10, 2
    %s17 = sadd.s32 %s10, 1
    %s18 = ssub.s32 %s10, %s17
    %p19 = scmp.eq.s32.totalorder %s18, 0
    %s21 = sadd.s32 %s20, 1
    %s22 = scalar_select %p19, %s20, %s21
    %p25 = pneg %p19
    %p26 = scmp.eq.s32.totalorder %s10, 1
    %p27 = por %p25, %p26
    %p28 = scmp.ne.s32.totalorder %s20, %s23
    %p29 = scmp.eq.s32.totalorder %s10, 0
    %p30 = por %p28, %p29
    %p31 = scmp.ne.s32.totalorder %s20, %s23
    %p32 = scmp.eq.s32.totalorder %s15, 1
    %p33 = por %p31, %p32
    %p34 = scmp.ne.s32.totalorder %s23, %s24
    %p35 = scmp.eq.s32.totalorder %s15, 0
    %p36 = por %p34, %p35
    %p37 = scmp.ne.s32.totalorder %s23, %s24
    %p38 = scmp.eq.s32.totalorder %s16, 1
    %p39 = por %p37, %p38
    %p41 = scmp.ne.s32.totalorder %s24, %s40
    %p42 = scmp.eq.s32.totalorder %s16, 0
    %p43 = por %p41, %p42
    %s44 = ssub.s32 %s10, %s17
    %p45 = scmp.eq.s32.totalorder %s44, 0
    %s47 = sadd.s32 %s46, 1
    %s48 = scalar_select %p45, %s46, %s47
    %p51 = pneg %p45
    %p52 = scmp.eq.s32.totalorder %s10, 1
    %p53 = por %p51, %p52
    %p54 = scmp.ne.s32.totalorder %s46, %s49
    %p55 = scmp.eq.s32.totalorder %s10, 0
    %p56 = por %p54, %p55
    %p57 = scmp.ne.s32.totalorder %s46, %s49
    %p58 = scmp.eq.s32.totalorder %s15, 1
    %p59 = por %p57, %p58
    %p60 = scmp.ne.s32.totalorder %s49, %s50
    %p61 = scmp.eq.s32.totalorder %s15, 0
    %p62 = por %p60, %p61
    %p63 = scmp.ne.s32.totalorder %s49, %s50
    %p64 = scmp.eq.s32.totalorder %s16, 1
    %p65 = por %p63, %p64
    %p67 = scmp.ne.s32.totalorder %s50, %s66
    %p68 = scmp.eq.s32.totalorder %s16, 0
    %p69 = por %p67, %p68
    %s71 = sadd.s32 %s70, 1
    %p74 = scmp.eq.s32.totalorder %s10, 1
    %p75 = scmp.ne.s32.totalorder %s70, %s72
    %p76 = scmp.eq.s32.totalorder %s10, 0
    %p77 = por %p75, %p76
    %p78 = scmp.ne.s32.totalorder %s70, %s72
    %p79 = scmp.eq.s32.totalorder %s15, 1
    %p80 = por %p78, %p79
    %p81 = scmp.ne.s32.totalorder %s72, %s73
    %p82 = scmp.eq.s32.totalorder %s15, 0
    %p83 = por %p81, %p82
    %p84 = scmp.ne.s32.totalorder %s72, %s73
    %p85 = scmp.eq.s32.totalorder %s16, 1
    %p86 = por %p84, %p85
    %p88 = scmp.ne.s32.totalorder %s73, %s87
    %p89 = scmp.eq.s32.totalorder %s16, 0
    %p90 = por %p88, %p89
    %s92 = sadd.s32 %s91, 1
    %p95 = scmp.eq.s32.totalorder %s10, 1
    %p96 = scmp.ne.s32.totalorder %s91, %s93
    %p97 = scmp.eq.s32.totalorder %s10, 0
    %p98 = por %p96, %p97
    %p99 = scmp.ne.s32.totalorder %s91, %s93
    %p100 = scmp.eq.s32.totalorder %s15, 1
    %p101 = por %p99, %p100
    %p102 = scmp.ne.s32.totalorder %s93, %s94
    %p103 = scmp.eq.s32.totalorder %s15, 0
    %p104 = por %p102, %p103
    %p105 = scmp.ne.s32.totalorder %s93, %s94
    %p106 = scmp.eq.s32.totalorder %s16, 1
    %p107 = por %p105, %p106
    %p109 = scmp.ne.s32.totalorder %s94, %s108
    %p110 = scmp.eq.s32.totalorder %s16, 0
    %p111 = por %p109, %p110
    %s112 = ssub.s32 %s10, %s17
    %p113 = scmp.eq.s32.totalorder %s112, 0
    %s115 = sadd.s32 %s114, 1
    %s116 = scalar_select %p113, %s114, %s115
    %p119 = pneg %p113
    %p120 = scmp.eq.s32.totalorder %s10, 1
    %p121 = por %p119, %p120
    %p122 = scmp.ne.s32.totalorder %s114, %s117
    %p123 = scmp.eq.s32.totalorder %s10, 0
    %p124 = por %p122, %p123
    %p125 = scmp.ne.s32.totalorder %s114, %s117
    %p126 = scmp.eq.s32.totalorder %s15, 1
    %p127 = por %p125, %p126
    %p128 = scmp.ne.s32.totalorder %s117, %s118
    %p129 = scmp.eq.s32.totalorder %s15, 0
    %p130 = por %p128, %p129
    %p131 = scmp.ne.s32.totalorder %s117, %s118
    %p132 = scmp.eq.s32.totalorder %s16, 1
    %p133 = por %p131, %p132
    %p135 = scmp.ne.s32.totalorder %s118, %s134
    %p136 = scmp.eq.s32.totalorder %s16, 0
    %p137 = por %p135, %p136
    %p138 = scmp.le.s32.totalorder 1, %s10
    %p139 = scmp.lt.s32.totalorder %s10, 3
    %p140 = pnand %p138, %p139
    %p141 = pneg %p140
    // Predicated region
    $region9: #{bt_model_forward.7} parent=5 // pred_check
      _
    $region10: #{bt_model_forward.7} parent=5 // pred_check_branch
      %143 = sbr.rel (%p140) target = $region12
    $region11: #{bt_model_forward.7} parent=5 // pred_region
      %s144 = ssub.s32 %s10, 1
      // Predicated region
      $region13: #{bt_model_forward.7} parent=11 // pred_check
        %p145 = pneg %p83
      $region14: #{bt_model_forward.7} parent=11 // pred_check_branch
        %147 = sbr.rel (%p145) target = $region16
      $region15: #{bt_model_forward.7} parent=11 // pred_region
        _
      $region16: #{bt_model_forward.7} parent=11 // pred_fallthru
        _
      // Predicated region
      $region17: #{bt_model_forward.7} parent=11 // pred_check
        %p148 = pneg %p104
      $region18: #{bt_model_forward.7} parent=11 // pred_check_branch
        %150 = sbr.rel (%p148) target = $region20
      $region19: #{bt_model_forward.7} parent=11 // pred_region
        _
      $region20: #{bt_model_forward.7} parent=11 // pred_fallthru
        _
    $region12: #{bt_model_forward.7} parent=5 // pred_fallthru
      _
    %p151 = scmp.lt.s32.totalorder %s10, 2
    // Predicated region
    $region21: #{bt_model_forward.7} parent=5 // pred_check
      %p152 = pneg %p151
    $region22: #{bt_model_forward.7} parent=5 // pred_check_branch
      %154 = sbr.rel (%p152) target = $region24
    $region23: #{bt_model_forward.7} parent=5 // pred_region
      // Predicated region
      $region25: #{bt_model_forward.7} parent=23 // pred_check
        %p155 = pneg %p30
      $region26: #{bt_model_forward.7} parent=23 // pred_check_branch
        %157 = sbr.rel (%p155) target = $region28
      $region27: #{bt_model_forward.7} parent=23 // pred_region
        %p158 = scmp.lt.s32.totalorder %s10, 1
        %s159 = scalar_select %p158, %s10, 1
        %s160 = smul.addr %s159, 24
        %s161 = smul.addr %s160, 2
        %s162 = scalar_lea.vmem %s0, %s161
      $region28: #{bt_model_forward.7} parent=23 // pred_fallthru
        _
      // Predicated region
      $region29: #{bt_model_forward.7} parent=23 // pred_check
        %p163 = pneg %p56
      $region30: #{bt_model_forward.7} parent=23 // pred_check_branch
        %165 = sbr.rel (%p163) target = $region32
      $region31: #{bt_model_forward.7} parent=23 // pred_region
        %p166 = scmp.lt.s32.totalorder %s10, 1
        %s167 = scalar_select %p166, %s10, 1
        %s168 = smul.addr %s167, 24
        %s169 = smul.addr %s168, 2
        %s170 = scalar_lea.vmem %s1, %s169
      $region32: #{bt_model_forward.7} parent=23 // pred_fallthru
        _
    $region24: #{bt_model_forward.7} parent=5 // pred_fallthru
      _
    %p171 = scmp.le.s32.totalorder 1, %s10
    %p172 = scmp.lt.s32.totalorder %s10, 3
    %p173 = pnand %p171, %p172
    %p174 = pneg %p173
    // Predicated region
    $region33: #{bt_model_forward.7} parent=5 // pred_check
      _
    $region34: #{bt_model_forward.7} parent=5 // pred_check_branch
      %176 = sbr.rel (%p173) target = $region36
    $region35: #{bt_model_forward.7} parent=5 // pred_region
      %s177 = ssub.s32 %s10, 1
      %p178 = scmp.lt.s32.totalorder %s15, 1
      %s179 = scalar_select %p178, %s15, 1
      %s180 = smul.addr %s179, 24
      %s181 = smul.addr %s180, 2
      %s182 = scalar_lea.vmem %s0, %s181
      %p183 = pneg %p36
      %p184 = pneg %p33
      %p185 = scmp.lt.s32.totalorder %s15, 1
      %s186 = scalar_select %p185, %s15, 1
      %s187 = smul.addr %s186, 24
      %s188 = smul.addr %s187, 2
      %s189 = scalar_lea.vmem %s1, %s188
      %p190 = pneg %p62
      %p191 = pneg %p59
      %p192 = pneg %p83
      %p193 = pneg %p80
      %p194 = pneg %p104
      %p195 = pneg %p101
      %p196 = pneg %p130
      %p197 = pneg %p127
      %p198 = scmp.lt.s32.totalorder %s15, 1
      %s199 = scalar_select %p198, %s15, 1
      %s200 = smul.addr %s199, 4
      %s201 = smul.addr %s200, 2
      %s202 = scalar_lea.vmem %s4, %s201
      %p203 = scmp.lt.s32.totalorder %s15, 1
      %s204 = scalar_select %p203, %s15, 1
      %s205 = smul.addr %s204, 24
      %s206 = smul.addr %s205, 2
      %s207 = scalar_lea.vmem %s0, %s206
      %p208 = scmp.lt.s32.totalorder %s15, 1
      %s209 = scalar_select %p208, %s15, 1
      %s210 = smul.addr %s209, 24
      %s211 = smul.addr %s210, 2
      %s212 = scalar_lea.vmem %s1, %s211
      %p213 = scmp.lt.s32.totalorder %s15, 1
      %s214 = scalar_select %p213, %s15, 1
      %s215 = smul.addr %s214, 4
      %s216 = smul.addr %s215, 2
      %s217 = scalar_lea.vmem %s4, %s216
      %v219 = vld [vmem:[%s2] sm:$0xf]
      %v220 = vld [vmem:[%s2 + $0x4] sm:$0xf]
      %v221 = vld [vmem:[%s2 + $0x8] sm:$0xf]
      %v222 = vld [vmem:[%s2 + $0xc] sm:$0xf]
      %v223 = vld [vmem:[%s2 + $0x10] sm:$0xf]
      %v224 = vld [vmem:[%s2 + $0x14] sm:$0xf]
      %v225 = vld [vmem:[%s2 + $0x18] sm:$0xf]
      %v226 = vld [vmem:[%s2 + $0x1c] sm:$0xf]
      %v227 = vld [vmem:[%s2 + $0x20] sm:$0xf]
      %v228 = vld [vmem:[%s2 + $0x24] sm:$0xf]
      %v229 = vld [vmem:[%s2 + $0x28] sm:$0xf]
      %v230 = vld [vmem:[%s2 + $0x2c] sm:$0xf]
      %v231 = vld [vmem:[%s2 + $0x30] sm:$0xf]
      %v232 = vld [vmem:[%s2 + $0x34] sm:$0xf]
      %v233 = vld [vmem:[%s2 + $0x38] sm:$0xf]
      %v234 = vld [vmem:[%s2 + $0x3c] sm:$0xf]
      %v235 = vld [vmem:[%s2 + $0x40] sm:$0xf]
      %v236 = vld [vmem:[%s2 + $0x44] sm:$0xf]
      %v237 = vld [vmem:[%s2 + $0x48] sm:$0xf]
      %v238 = vld [vmem:[%s2 + $0x4c] sm:$0xf]
      %v239 = vld [vmem:[%s2 + $0x50] sm:$0xf]
      %v240 = vld [vmem:[%s2 + $0x54] sm:$0xf]
      %v241 = vld [vmem:[%s2 + $0x58] sm:$0xf]
      %v242 = vld [vmem:[%s2 + $0x5c] sm:$0xf]
      %v243 = vld [vmem:[%s2 + $0x60] sm:$0xf]
      %v244 = vld [vmem:[%s2 + $0x64] sm:$0xf]
      %v245 = vld [vmem:[%s2 + $0x68] sm:$0xf]
      %v246 = vld [vmem:[%s2 + $0x6c] sm:$0xf]
      %v247 = vld [vmem:[%s2 + $0x70] sm:$0xf]
      %v248 = vld [vmem:[%s2 + $0x74] sm:$0xf]
      %v249 = vld [vmem:[%s2 + $0x78] sm:$0xf]
      %v250 = vld [vmem:[%s2 + $0x7c] sm:$0xf]
      %v251 = vld [vmem:[%s2 + $0x80] sm:$0xf]
      %v252 = vld [vmem:[%s2 + $0x84] sm:$0xf]
      %v253 = vld [vmem:[%s2 + $0x88] sm:$0xf]
      %v254 = vld [vmem:[%s2 + $0x8c] sm:$0xf]
      %v255 = vld [vmem:[%s3] sm:$0x1]
      %v256 = vld [vmem:[%s207] sm:$0x3f]
      %258 = vst [vmem:[#allocation1] ss:$4 sm:$0xff] %v256
      %v259 = vld.sshfl [vmem:[#allocation1] sm:$0xff pattern:$0x73625140]
      %v260 = vld.sshfl [vmem:[#allocation1 + $0x8] sm:$0xff pattern:$0x73625140]
      %v261 = vld.sshfl [vmem:[#allocation1 + $0x10] sm:$0xff pattern:$0x73625140]
      %v300 = vunpack.c.l.b16 %v219
      %v301 = vunpack.c.l.b16 %v220
      %v302 = vunpack.c.l.b16 %v221
      %v303 = vunpack.c.l.b16 %v222
      %v304 = vunpack.c.l.b16 %v223
      %v305 = vunpack.c.l.b16 %v224
      %v306 = vunpack.c.l.b16 %v225
      %v307 = vunpack.c.l.b16 %v226
      %v308 = vunpack.c.l.b16 %v227
      %v309 = vunpack.c.l.b16 %v228
      %v310 = vunpack.c.l.b16 %v229
      %v311 = vunpack.c.l.b16 %v230
      %v312 = vunpack.c.l.b16 %v231
      %v313 = vunpack.c.l.b16 %v232
      %v314 = vunpack.c.l.b16 %v233
      %v315 = vunpack.c.l.b16 %v234
      %v316 = vunpack.c.l.b16 %v235
      %v317 = vunpack.c.l.b16 %v236
      %v318 = vunpack.c.l.b16 %v237
      %v319 = vunpack.c.l.b16 %v238
      %v320 = vunpack.c.l.b16 %v239
      %v321 = vunpack.c.l.b16 %v240
      %v322 = vunpack.c.l.b16 %v241
      %v323 = vunpack.c.l.b16 %v242
      %v324 = vunpack.c.l.b16 %v243
      %v325 = vunpack.c.l.b16 %v244
      %v326 = vunpack.c.l.b16 %v245
      %v327 = vunpack.c.l.b16 %v246
      %v328 = vunpack.c.l.b16 %v247
      %v329 = vunpack.c.l.b16 %v248
      %v330 = vunpack.c.l.b16 %v249
      %v331 = vunpack.c.l.b16 %v250
      %v332 = vunpack.c.l.b16 %v251
      %v333 = vunpack.c.l.b16 %v252
      %v334 = vunpack.c.l.b16 %v253
      %v335 = vunpack.c.l.b16 %v254
      %v336 = vpack.c.b16 %v301, %v300
      %v337 = vpack.c.b16 %v303, %v302
      %v338 = vpack.c.b16 %v305, %v304
      %v339 = vpack.c.b16 %v307, %v306
      %v340 = vpack.c.b16 %v309, %v308
      %v341 = vpack.c.b16 %v311, %v310
      %v342 = vpack.c.b16 %v313, %v312
      %v343 = vpack.c.b16 %v315, %v314
      %v344 = vpack.c.b16 %v317, %v316
      %v345 = vpack.c.b16 %v319, %v318
      %v346 = vpack.c.b16 %v321, %v320
      %v347 = vpack.c.b16 %v323, %v322
      %v348 = vpack.c.b16 %v325, %v324
      %v349 = vpack.c.b16 %v327, %v326
      %v350 = vpack.c.b16 %v329, %v328
      %v351 = vpack.c.b16 %v331, %v330
      %v352 = vpack.c.b16 %v333, %v332
      %v353 = vpack.c.b16 %v335, %v334
      %vm372 = vcmask 261120
      %v373 = vsel %vm372, %v261, 0
      %375 = vmatpush.bf16.msra.mxu0 %v343
      %376 = vmatpush.bf16.msra.mxu0 %v342
      %377 = vmatpush.bf16.msra.mxu0 %v341
      %378 = vmatpush.bf16.msra.mxu0 %v340
      %379 = vmatpush.bf16.msra.mxu0 %v339
      %380 = vmatpush.bf16.msra.mxu0 %v338
      %381 = vmatpush.bf16.msra.mxu0 %v337
      %382 = vmatpush.bf16.msra.mxu0 %v336
      %383 = vmatmul.bf16.gmra.mxu0 %v259
      %v384 = vpop.f32.mrf.mxu0
      %v385 = vadd.f32 0.0, %v384
      %v386 = vpop.f32.mrf.mxu0
      %387 = vdwg.mxu0
      %388 = vmatpush.bf16.msra.mxu0 %v351
      %389 = vmatpush.bf16.msra.mxu0 %v350
      %390 = vmatpush.bf16.msra.mxu0 %v349
      %391 = vmatpush.bf16.msra.mxu0 %v348
      %392 = vmatpush.bf16.msra.mxu0 %v347
      %393 = vmatpush.bf16.msra.mxu0 %v346
      %394 = vmatpush.bf16.msra.mxu0 %v345
      %395 = vmatpush.bf16.msra.mxu0 %v344
      %396 = vmatmul.bf16.gmra.mxu0 %v260
      %v397 = vpop.f32.mrf.mxu0
      %v398 = vadd.f32 %v385, %v397
      %v399 = vpop.f32.mrf.mxu0
      %400 = vdwg.mxu0
      %401 = vmatpush.bf16.msra.mxu0 0
      %402 = vmatpush.bf16.msra.mxu0 0
      %403 = vmatpush.bf16.msra.mxu0 0
      %404 = vmatpush.bf16.msra.mxu0 0
      %405 = vmatpush.bf16.msra.mxu0 0
      %406 = vmatpush.bf16.msra.mxu0 0
      %407 = vmatpush.bf16.msra.mxu0 %v353
      %408 = vmatpush.bf16.msra.mxu0 %v352
      %409 = vmatmul.bf16.gmra.mxu0 %v373
      %v410 = vpop.f32.mrf.mxu0
      %v411 = vadd.f32 %v398, %v410
      %v412 = vpop.f32.mrf.mxu0
      %413 = vdwg.mxu0
      %v414 = vld [vmem:[%s212] sm:$0x3f]
      %416 = vst [vmem:[#allocation1] ss:$4 sm:$0xff] %v414
      %v417 = vld.sshfl [vmem:[#allocation1] sm:$0xff pattern:$0x73625140]
      %v418 = vld.sshfl [vmem:[#allocation1 + $0x8] sm:$0xff pattern:$0x73625140]
      %v419 = vld.sshfl [vmem:[#allocation1 + $0x10] sm:$0xff pattern:$0x73625140]
      %v422 = vsel %vm372, %v419, 0
      %424 = vmatpush.bf16.msra.mxu0 %v343
      %425 = vmatpush.bf16.msra.mxu0 %v342
      %426 = vmatpush.bf16.msra.mxu0 %v341
      %427 = vmatpush.bf16.msra.mxu0 %v340
      %428 = vmatpush.bf16.msra.mxu0 %v339
      %429 = vmatpush.bf16.msra.mxu0 %v338
      %430 = vmatpush.bf16.msra.mxu0 %v337
      %431 = vmatpush.bf16.msra.mxu0 %v336
      %432 = vmatmul.bf16.gmra.mxu0 %v417
      %v433 = vpop.f32.mrf.mxu0
      %v434 = vadd.f32 0.0, %v433
      %v435 = vpop.f32.mrf.mxu0
      %436 = vdwg.mxu0
      %437 = vmatpush.bf16.msra.mxu0 %v351
      %438 = vmatpush.bf16.msra.mxu0 %v350
      %439 = vmatpush.bf16.msra.mxu0 %v349
      %440 = vmatpush.bf16.msra.mxu0 %v348
      %441 = vmatpush.bf16.msra.mxu0 %v347
      %442 = vmatpush.bf16.msra.mxu0 %v346
      %443 = vmatpush.bf16.msra.mxu0 %v345
      %444 = vmatpush.bf16.msra.mxu0 %v344
      %445 = vmatmul.bf16.gmra.mxu0 %v418
      %v446 = vpop.f32.mrf.mxu0
      %v447 = vadd.f32 %v434, %v446
      %v448 = vpop.f32.mrf.mxu0
      %449 = vdwg.mxu0
      %450 = vmatpush.bf16.msra.mxu0 0
      %451 = vmatpush.bf16.msra.mxu0 0
      %452 = vmatpush.bf16.msra.mxu0 0
      %453 = vmatpush.bf16.msra.mxu0 0
      %454 = vmatpush.bf16.msra.mxu0 0
      %455 = vmatpush.bf16.msra.mxu0 0
      %456 = vmatpush.bf16.msra.mxu0 %v353
      %457 = vmatpush.bf16.msra.mxu0 %v352
      %458 = vmatmul.bf16.gmra.mxu0 %v422
      %v459 = vpop.f32.mrf.mxu0
      %v460 = vadd.f32 %v447, %v459
      %v461 = vpop.f32.mrf.mxu0
      %462 = vdwg.mxu0
      %s463 = scalar_lea.vmem %s207, 6
      %v464 = vld [vmem:[%s463] sm:$0x3f]
      %466 = vst [vmem:[#allocation1] ss:$4 sm:$0xff] %v464
      %v467 = vld.sshfl [vmem:[#allocation1] sm:$0xff pattern:$0x73625140]
      %v468 = vld.sshfl [vmem:[#allocation1 + $0x8] sm:$0xff pattern:$0x73625140]
      %v469 = vld.sshfl [vmem:[#allocation1 + $0x10] sm:$0xff pattern:$0x73625140]
      %v472 = vsel %vm372, %v469, 0
      %474 = vmatpush.bf16.msra.mxu0 %v343
      %475 = vmatpush.bf16.msra.mxu0 %v342
      %476 = vmatpush.bf16.msra.mxu0 %v341
      %477 = vmatpush.bf16.msra.mxu0 %v340
      %478 = vmatpush.bf16.msra.mxu0 %v339
      %479 = vmatpush.bf16.msra.mxu0 %v338
      %480 = vmatpush.bf16.msra.mxu0 %v337
      %481 = vmatpush.bf16.msra.mxu0 %v336
      %482 = vmatmul.bf16.gmra.mxu0 %v467
      %v483 = vpop.f32.mrf.mxu0
      %v484 = vadd.f32 0.0, %v483
      %v485 = vpop.f32.mrf.mxu0
      %486 = vdwg.mxu0
      %487 = vmatpush.bf16.msra.mxu0 %v351
      %488 = vmatpush.bf16.msra.mxu0 %v350
      %489 = vmatpush.bf16.msra.mxu0 %v349
      %490 = vmatpush.bf16.msra.mxu0 %v348
      %491 = vmatpush.bf16.msra.mxu0 %v347
      %492 = vmatpush.bf16.msra.mxu0 %v346
      %493 = vmatpush.bf16.msra.mxu0 %v345
      %494 = vmatpush.bf16.msra.mxu0 %v344
      %495 = vmatmul.bf16.gmra.mxu0 %v468
      %v496 = vpop.f32.mrf.mxu0
      %v497 = vadd.f32 %v484, %v496
      %v498 = vpop.f32.mrf.mxu0
      %499 = vdwg.mxu0
      %500 = vmatpush.bf16.msra.mxu0 0
      %501 = vmatpush.bf16.msra.mxu0 0
      %502 = vmatpush.bf16.msra.mxu0 0
      %503 = vmatpush.bf16.msra.mxu0 0
      %504 = vmatpush.bf16.msra.mxu0 0
      %505 = vmatpush.bf16.msra.mxu0 0
      %506 = vmatpush.bf16.msra.mxu0 %v353
      %507 = vmatpush.bf16.msra.mxu0 %v352
      %508 = vmatmul.bf16.gmra.mxu0 %v472
      %v509 = vpop.f32.mrf.mxu0
      %v510 = vadd.f32 %v497, %v509
      %v511 = vpop.f32.mrf.mxu0
      %512 = vdwg.mxu0
      %s513 = scalar_lea.vmem %s212, 6
      %v514 = vld [vmem:[%s513] sm:$0x3f]
      %516 = vst [vmem:[#allocation1] ss:$4 sm:$0xff] %v514
      %v517 = vld.sshfl [vmem:[#allocation1] sm:$0xff pattern:$0x73625140]
      %v518 = vld.sshfl [vmem:[#allocation1 + $0x8] sm:$0xff pattern:$0x73625140]
      %v519 = vld.sshfl [vmem:[#allocation1 + $0x10] sm:$0xff pattern:$0x73625140]
      %v522 = vsel %vm372, %v519, 0
      %524 = vmatpush.bf16.msra.mxu0 %v343
      %525 = vmatpush.bf16.msra.mxu0 %v342
      %526 = vmatpush.bf16.msra.mxu0 %v341
      %527 = vmatpush.bf16.msra.mxu0 %v340
      %528 = vmatpush.bf16.msra.mxu0 %v339
      %529 = vmatpush.bf16.msra.mxu0 %v338
      %530 = vmatpush.bf16.msra.mxu0 %v337
      %531 = vmatpush.bf16.msra.mxu0 %v336
      %532 = vmatmul.bf16.gmra.mxu0 %v517
      %v533 = vpop.f32.mrf.mxu0
      %v534 = vadd.f32 0.0, %v533
      %v535 = vpop.f32.mrf.mxu0
      %536 = vdwg.mxu0
      %537 = vmatpush.bf16.msra.mxu0 %v351
      %538 = vmatpush.bf16.msra.mxu0 %v350
      %539 = vmatpush.bf16.msra.mxu0 %v349
      %540 = vmatpush.bf16.msra.mxu0 %v348
      %541 = vmatpush.bf16.msra.mxu0 %v347
      %542 = vmatpush.bf16.msra.mxu0 %v346
      %543 = vmatpush.bf16.msra.mxu0 %v345
      %544 = vmatpush.bf16.msra.mxu0 %v344
      %545 = vmatmul.bf16.gmra.mxu0 %v518
      %v546 = vpop.f32.mrf.mxu0
      %v547 = vadd.f32 %v534, %v546
      %v548 = vpop.f32.mrf.mxu0
      %549 = vdwg.mxu0
      %550 = vmatpush.bf16.msra.mxu0 0
      %551 = vmatpush.bf16.msra.mxu0 0
      %552 = vmatpush.bf16.msra.mxu0 0
      %553 = vmatpush.bf16.msra.mxu0 0
      %554 = vmatpush.bf16.msra.mxu0 0
      %555 = vmatpush.bf16.msra.mxu0 0
      %556 = vmatpush.bf16.msra.mxu0 %v353
      %557 = vmatpush.bf16.msra.mxu0 %v352
      %558 = vmatmul.bf16.gmra.mxu0 %v522
      %v559 = vpop.f32.mrf.mxu0
      %v560 = vadd.f32 %v547, %v559
      %v561 = vpop.f32.mrf.mxu0
      %562 = vdwg.mxu0
      %v563 = vmax.f32 %v411, %v460
      %v564 = vmax.f32 %v510, %v560
      %v565 = vmax.f32 %v563, %v564
      %v567 = vperm.slane %v255, 0
      %v569 = vadd.f32 %v565, %v567
      %v570 = vmax.f32 %v569, 0.0
      %v571 = vpack.c.bf16 %v570, %v570
      %vm572 = vcmask 254976
      %573 = vst.msk [vmem:[%s217] sm:$0x3] %vm572, %v571
      %s574 = scalar_lea.vmem %s207, 12
      %v575 = vld [vmem:[%s574] sm:$0x3f]
      %577 = vst [vmem:[#allocation1] ss:$4 sm:$0xff] %v575
      %v578 = vld.sshfl [vmem:[#allocation1] sm:$0xff pattern:$0x73625140]
      %v579 = vld.sshfl [vmem:[#allocation1 + $0x8] sm:$0xff pattern:$0x73625140]
      %v580 = vld.sshfl [vmem:[#allocation1 + $0x10] sm:$0xff pattern:$0x73625140]
      %v583 = vsel %vm372, %v580, 0
      %585 = vmatpush.bf16.msra.mxu0 %v343
      %586 = vmatpush.bf16.msra.mxu0 %v342
      %587 = vmatpush.bf16.msra.mxu0 %v341
      %588 = vmatpush.bf16.msra.mxu0 %v340
      %589 = vmatpush.bf16.msra.mxu0 %v339
      %590 = vmatpush.bf16.msra.mxu0 %v338
      %591 = vmatpush.bf16.msra.mxu0 %v337
      %592 = vmatpush.bf16.msra.mxu0 %v336
      %593 = vmatmul.bf16.gmra.mxu0 %v578
      %v594 = vpop.f32.mrf.mxu0
      %v595 = vadd.f32 0.0, %v594
      %v596 = vpop.f32.mrf.mxu0
      %597 = vdwg.mxu0
      %598 = vmatpush.bf16.msra.mxu0 %v351
      %599 = vmatpush.bf16.msra.mxu0 %v350
      %600 = vmatpush.bf16.msra.mxu0 %v349
      %601 = vmatpush.bf16.msra.mxu0 %v348
      %602 = vmatpush.bf16.msra.mxu0 %v347
      %603 = vmatpush.bf16.msra.mxu0 %v346
      %604 = vmatpush.bf16.msra.mxu0 %v345
      %605 = vmatpush.bf16.msra.mxu0 %v344
      %606 = vmatmul.bf16.gmra.mxu0 %v579
      %v607 = vpop.f32.mrf.mxu0
      %v608 = vadd.f32 %v595, %v607
      %v609 = vpop.f32.mrf.mxu0
      %610 = vdwg.mxu0
      %611 = vmatpush.bf16.msra.mxu0 0
      %612 = vmatpush.bf16.msra.mxu0 0
      %613 = vmatpush.bf16.msra.mxu0 0
      %614 = vmatpush.bf16.msra.mxu0 0
      %615 = vmatpush.bf16.msra.mxu0 0
      %616 = vmatpush.bf16.msra.mxu0 0
      %617 = vmatpush.bf16.msra.mxu0 %v353
      %618 = vmatpush.bf16.msra.mxu0 %v352
      %619 = vmatmul.bf16.gmra.mxu0 %v583
      %v620 = vpop.f32.mrf.mxu0
      %v621 = vadd.f32 %v608, %v620
      %v622 = vpop.f32.mrf.mxu0
      %623 = vdwg.mxu0
      %s624 = scalar_lea.vmem %s212, 12
      %v625 = vld [vmem:[%s624] sm:$0x3f]
      %627 = vst [vmem:[#allocation1] ss:$4 sm:$0xff] %v625
      %v628 = vld.sshfl [vmem:[#allocation1] sm:$0xff pattern:$0x73625140]
      %v629 = vld.sshfl [vmem:[#allocation1 + $0x8] sm:$0xff pattern:$0x73625140]
      %v630 = vld.sshfl [vmem:[#allocation1 + $0x10] sm:$0xff pattern:$0x73625140]
      %v633 = vsel %vm372, %v630, 0
      %635 = vmatpush.bf16.msra.mxu0 %v343
      %636 = vmatpush.bf16.msra.mxu0 %v342
      %637 = vmatpush.bf16.msra.mxu0 %v341
      %638 = vmatpush.bf16.msra.mxu0 %v340
      %639 = vmatpush.bf16.msra.mxu0 %v339
      %640 = vmatpush.bf16.msra.mxu0 %v338
      %641 = vmatpush.bf16.msra.mxu0 %v337
      %642 = vmatpush.bf16.msra.mxu0 %v336
      %643 = vmatmul.bf16.gmra.mxu0 %v628
      %v644 = vpop.f32.mrf.mxu0
      %v645 = vadd.f32 0.0, %v644
      %v646 = vpop.f32.mrf.mxu0
      %647 = vdwg.mxu0
      %648 = vmatpush.bf16.msra.mxu0 %v351
      %649 = vmatpush.bf16.msra.mxu0 %v350
      %650 = vmatpush.bf16.msra.mxu0 %v349
      %651 = vmatpush.bf16.msra.mxu0 %v348
      %652 = vmatpush.bf16.msra.mxu0 %v347
      %653 = vmatpush.bf16.msra.mxu0 %v346
      %654 = vmatpush.bf16.msra.mxu0 %v345
      %655 = vmatpush.bf16.msra.mxu0 %v344
      %656 = vmatmul.bf16.gmra.mxu0 %v629
      %v657 = vpop.f32.mrf.mxu0
      %v658 = vadd.f32 %v645, %v657
      %v659 = vpop.f32.mrf.mxu0
      %660 = vdwg.mxu0
      %661 = vmatpush.bf16.msra.mxu0 0
      %662 = vmatpush.bf16.msra.mxu0 0
      %663 = vmatpush.bf16.msra.mxu0 0
      %664 = vmatpush.bf16.msra.mxu0 0
      %665 = vmatpush.bf16.msra.mxu0 0
      %666 = vmatpush.bf16.msra.mxu0 0
      %667 = vmatpush.bf16.msra.mxu0 %v353
      %668 = vmatpush.bf16.msra.mxu0 %v352
      %669 = vmatmul.bf16.gmra.mxu0 %v633
      %v670 = vpop.f32.mrf.mxu0
      %v671 = vadd.f32 %v658, %v670
      %v672 = vpop.f32.mrf.mxu0
      %673 = vdwg.mxu0
      %s674 = scalar_lea.vmem %s207, 18
      %v675 = vld [vmem:[%s674] sm:$0x3f]
      %677 = vst [vmem:[#allocation1] ss:$4 sm:$0xff] %v675
      %v678 = vld.sshfl [vmem:[#allocation1] sm:$0xff pattern:$0x73625140]
      %v679 = vld.sshfl [vmem:[#allocation1 + $0x8] sm:$0xff pattern:$0x73625140]
      %v680 = vld.sshfl [vmem:[#allocation1 + $0x10] sm:$0xff pattern:$0x73625140]
      %v683 = vsel %vm372, %v680, 0
      %685 = vmatpush.bf16.msra.mxu0 %v343
      %686 = vmatpush.bf16.msra.mxu0 %v342
      %687 = vmatpush.bf16.msra.mxu0 %v341
      %688 = vmatpush.bf16.msra.mxu0 %v340
      %689 = vmatpush.bf16.msra.mxu0 %v339
      %690 = vmatpush.bf16.msra.mxu0 %v338
      %691 = vmatpush.bf16.msra.mxu0 %v337
      %692 = vmatpush.bf16.msra.mxu0 %v336
      %693 = vmatmul.bf16.gmra.mxu0 %v678
      %v694 = vpop.f32.mrf.mxu0
      %v695 = vadd.f32 0.0, %v694
      %v696 = vpop.f32.mrf.mxu0
      %697 = vdwg.mxu0
      %698 = vmatpush.bf16.msra.mxu0 %v351
      %699 = vmatpush.bf16.msra.mxu0 %v350
      %700 = vmatpush.bf16.msra.mxu0 %v349
      %701 = vmatpush.bf16.msra.mxu0 %v348
      %702 = vmatpush.bf16.msra.mxu0 %v347
      %703 = vmatpush.bf16.msra.mxu0 %v346
      %704 = vmatpush.bf16.msra.mxu0 %v345
      %705 = vmatpush.bf16.msra.mxu0 %v344
      %706 = vmatmul.bf16.gmra.mxu0 %v679
      %v707 = vpop.f32.mrf.mxu0
      %v708 = vadd.f32 %v695, %v707
      %v709 = vpop.f32.mrf.mxu0
      %710 = vdwg.mxu0
      %711 = vmatpush.bf16.msra.mxu0 0
      %712 = vmatpush.bf16.msra.mxu0 0
      %713 = vmatpush.bf16.msra.mxu0 0
      %714 = vmatpush.bf16.msra.mxu0 0
      %715 = vmatpush.bf16.msra.mxu0 0
      %716 = vmatpush.bf16.msra.mxu0 0
      %717 = vmatpush.bf16.msra.mxu0 %v353
      %718 = vmatpush.bf16.msra.mxu0 %v352
      %719 = vmatmul.bf16.gmra.mxu0 %v683
      %v720 = vpop.f32.mrf.mxu0
      %v721 = vadd.f32 %v708, %v720
      %v722 = vpop.f32.mrf.mxu0
      %723 = vdwg.mxu0
      %s724 = scalar_lea.vmem %s212, 18
      %v725 = vld [vmem:[%s724] sm:$0x3f]
      %727 = vst [vmem:[#allocation1] ss:$4 sm:$0xff] %v725
      %v728 = vld.sshfl [vmem:[#allocation1] sm:$0xff pattern:$0x73625140]
      %v729 = vld.sshfl [vmem:[#allocation1 + $0x8] sm:$0xff pattern:$0x73625140]
      %v730 = vld.sshfl [vmem:[#allocation1 + $0x10] sm:$0xff pattern:$0x73625140]
      %v733 = vsel %vm372, %v730, 0
      %735 = vmatpush.bf16.msra.mxu0 %v343
      %736 = vmatpush.bf16.msra.mxu0 %v342
      %737 = vmatpush.bf16.msra.mxu0 %v341
      %738 = vmatpush.bf16.msra.mxu0 %v340
      %739 = vmatpush.bf16.msra.mxu0 %v339
      %740 = vmatpush.bf16.msra.mxu0 %v338
      %741 = vmatpush.bf16.msra.mxu0 %v337
      %742 = vmatpush.bf16.msra.mxu0 %v336
      %743 = vmatmul.bf16.gmra.mxu0 %v728
      %v744 = vpop.f32.mrf.mxu0
      %v745 = vadd.f32 0.0, %v744
      %v746 = vpop.f32.mrf.mxu0
      %747 = vdwg.mxu0
      %748 = vmatpush.bf16.msra.mxu0 %v351
      %749 = vmatpush.bf16.msra.mxu0 %v350
      %750 = vmatpush.bf16.msra.mxu0 %v349
      %751 = vmatpush.bf16.msra.mxu0 %v348
      %752 = vmatpush.bf16.msra.mxu0 %v347
      %753 = vmatpush.bf16.msra.mxu0 %v346
      %754 = vmatpush.bf16.msra.mxu0 %v345
      %755 = vmatpush.bf16.msra.mxu0 %v344
      %756 = vmatmul.bf16.gmra.mxu0 %v729
      %v757 = vpop.f32.mrf.mxu0
      %v758 = vadd.f32 %v745, %v757
      %v759 = vpop.f32.mrf.mxu0
      %760 = vdwg.mxu0
      %761 = vmatpush.bf16.msra.mxu0 0
      %762 = vmatpush.bf16.msra.mxu0 0
      %763 = vmatpush.bf16.msra.mxu0 0
      %764 = vmatpush.bf16.msra.mxu0 0
      %765 = vmatpush.bf16.msra.mxu0 0
      %766 = vmatpush.bf16.msra.mxu0 0
      %767 = vmatpush.bf16.msra.mxu0 %v353
      %768 = vmatpush.bf16.msra.mxu0 %v352
      %769 = vmatmul.bf16.gmra.mxu0 %v733
      %v770 = vpop.f32.mrf.mxu0
      %v771 = vadd.f32 %v758, %v770
      %v772 = vpop.f32.mrf.mxu0
      %773 = vdwg.mxu0
      %v774 = vmax.f32 %v621, %v671
      %v775 = vmax.f32 %v721, %v771
      %v776 = vmax.f32 %v774, %v775
      %v777 = vadd.f32 %v776, %v567
      %v778 = vmax.f32 %v777, 0.0
      %v779 = vpack.c.bf16 %v778, %v778
      %s780 = scalar_lea.vmem %s217, 2
      %781 = vst.msk [vmem:[%s780] sm:$0x3] %vm572, %v779
      %s782 = scalar_lea.vmem %s207, 24
      %v783 = vld [vmem:[%s782] sm:$0x3f]
      %785 = vst [vmem:[#allocation1] ss:$4 sm:$0xff] %v783
      %v786 = vld.sshfl [vmem:[#allocation1] sm:$0xff pattern:$0x73625140]
      %v787 = vld.sshfl [vmem:[#allocation1 + $0x8] sm:$0xff pattern:$0x73625140]
      %v788 = vld.sshfl [vmem:[#allocation1 + $0x10] sm:$0xff pattern:$0x73625140]
      %v791 = vsel %vm372, %v788, 0
      %793 = vmatpush.bf16.msra.mxu0 %v343
      %794 = vmatpush.bf16.msra.mxu0 %v342
      %795 = vmatpush.bf16.msra.mxu0 %v341
      %796 = vmatpush.bf16.msra.mxu0 %v340
      %797 = vmatpush.bf16.msra.mxu0 %v339
      %798 = vmatpush.bf16.msra.mxu0 %v338
      %799 = vmatpush.bf16.msra.mxu0 %v337
      %800 = vmatpush.bf16.msra.mxu0 %v336
      %801 = vmatmul.bf16.gmra.mxu0 %v786
      %v802 = vpop.f32.mrf.mxu0
      %v803 = vadd.f32 0.0, %v802
      %v804 = vpop.f32.mrf.mxu0
      %805 = vdwg.mxu0
      %806 = vmatpush.bf16.msra.mxu0 %v351
      %807 = vmatpush.bf16.msra.mxu0 %v350
      %808 = vmatpush.bf16.msra.mxu0 %v349
      %809 = vmatpush.bf16.msra.mxu0 %v348
      %810 = vmatpush.bf16.msra.mxu0 %v347
      %811 = vmatpush.bf16.msra.mxu0 %v346
      %812 = vmatpush.bf16.msra.mxu0 %v345
      %813 = vmatpush.bf16.msra.mxu0 %v344
      %814 = vmatmul.bf16.gmra.mxu0 %v787
      %v815 = vpop.f32.mrf.mxu0
      %v816 = vadd.f32 %v803, %v815
      %v817 = vpop.f32.mrf.mxu0
      %818 = vdwg.mxu0
      %819 = vmatpush.bf16.msra.mxu0 0
      %820 = vmatpush.bf16.msra.mxu0 0
      %821 = vmatpush.bf16.msra.mxu0 0
      %822 = vmatpush.bf16.msra.mxu0 0
      %823 = vmatpush.bf16.msra.mxu0 0
      %824 = vmatpush.bf16.msra.mxu0 0
      %825 = vmatpush.bf16.msra.mxu0 %v353
      %826 = vmatpush.bf16.msra.mxu0 %v352
      %827 = vmatmul.bf16.gmra.mxu0 %v791
      %v828 = vpop.f32.mrf.mxu0
      %v829 = vadd.f32 %v816, %v828
      %v830 = vpop.f32.mrf.mxu0
      %831 = vdwg.mxu0
      %s832 = scalar_lea.vmem %s212, 24
      %v833 = vld [vmem:[%s832] sm:$0x3f]
      %835 = vst [vmem:[#allocation1] ss:$4 sm:$0xff] %v833
      %v836 = vld.sshfl [vmem:[#allocation1] sm:$0xff pattern:$0x73625140]
      %v837 = vld.sshfl [vmem:[#allocation1 + $0x8] sm:$0xff pattern:$0x73625140]
      %v838 = vld.sshfl [vmem:[#allocation1 + $0x10] sm:$0xff pattern:$0x73625140]
      %v841 = vsel %vm372, %v838, 0
      %843 = vmatpush.bf16.msra.mxu0 %v343
      %844 = vmatpush.bf16.msra.mxu0 %v342
      %845 = vmatpush.bf16.msra.mxu0 %v341
      %846 = vmatpush.bf16.msra.mxu0 %v340
      %847 = vmatpush.bf16.msra.mxu0 %v339
      %848 = vmatpush.bf16.msra.mxu0 %v338
      %849 = vmatpush.bf16.msra.mxu0 %v337
      %850 = vmatpush.bf16.msra.mxu0 %v336
      %851 = vmatmul.bf16.gmra.mxu0 %v836
      %v852 = vpop.f32.mrf.mxu0
      %v853 = vadd.f32 0.0, %v852
      %v854 = vpop.f32.mrf.mxu0
      %855 = vdwg.mxu0
      %856 = vmatpush.bf16.msra.mxu0 %v351
      %857 = vmatpush.bf16.msra.mxu0 %v350
      %858 = vmatpush.bf16.msra.mxu0 %v349
      %859 = vmatpush.bf16.msra.mxu0 %v348
      %860 = vmatpush.bf16.msra.mxu0 %v347
      %861 = vmatpush.bf16.msra.mxu0 %v346
      %862 = vmatpush.bf16.msra.mxu0 %v345
      %863 = vmatpush.bf16.msra.mxu0 %v344
      %864 = vmatmul.bf16.gmra.mxu0 %v837
      %v865 = vpop.f32.mrf.mxu0
      %v866 = vadd.f32 %v853, %v865
      %v867 = vpop.f32.mrf.mxu0
      %868 = vdwg.mxu0
      %869 = vmatpush.bf16.msra.mxu0 0
      %870 = vmatpush.bf16.msra.mxu0 0
      %871 = vmatpush.bf16.msra.mxu0 0
      %872 = vmatpush.bf16.msra.mxu0 0
      %873 = vmatpush.bf16.msra.mxu0 0
      %874 = vmatpush.bf16.msra.mxu0 0
      %875 = vmatpush.bf16.msra.mxu0 %v353
      %876 = vmatpush.bf16.msra.mxu0 %v352
      %877 = vmatmul.bf16.gmra.mxu0 %v841
      %v878 = vpop.f32.mrf.mxu0
      %v879 = vadd.f32 %v866, %v878
      %v880 = vpop.f32.mrf.mxu0
      %881 = vdwg.mxu0
      %s882 = scalar_lea.vmem %s207, 30
      %v883 = vld [vmem:[%s882] sm:$0x3f]
      %885 = vst [vmem:[#allocation1] ss:$4 sm:$0xff] %v883
      %v886 = vld.sshfl [vmem:[#allocation1] sm:$0xff pattern:$0x73625140]
      %v887 = vld.sshfl [vmem:[#allocation1 + $0x8] sm:$0xff pattern:$0x73625140]
      %v888 = vld.sshfl [vmem:[#allocation1 + $0x10] sm:$0xff pattern:$0x73625140]
      %v891 = vsel %vm372, %v888, 0
      %893 = vmatpush.bf16.msra.mxu0 %v343
      %894 = vmatpush.bf16.msra.mxu0 %v342
      %895 = vmatpush.bf16.msra.mxu0 %v341
      %896 = vmatpush.bf16.msra.mxu0 %v340
      %897 = vmatpush.bf16.msra.mxu0 %v339
      %898 = vmatpush.bf16.msra.mxu0 %v338
      %899 = vmatpush.bf16.msra.mxu0 %v337
      %900 = vmatpush.bf16.msra.mxu0 %v336
      %901 = vmatmul.bf16.gmra.mxu0 %v886
      %v902 = vpop.f32.mrf.mxu0
      %v903 = vadd.f32 0.0, %v902
      %v904 = vpop.f32.mrf.mxu0
      %905 = vdwg.mxu0
      %906 = vmatpush.bf16.msra.mxu0 %v351
      %907 = vmatpush.bf16.msra.mxu0 %v350
      %908 = vmatpush.bf16.msra.mxu0 %v349
      %909 = vmatpush.bf16.msra.mxu0 %v348
      %910 = vmatpush.bf16.msra.mxu0 %v347
      %911 = vmatpush.bf16.msra.mxu0 %v346
      %912 = vmatpush.bf16.msra.mxu0 %v345
      %913 = vmatpush.bf16.msra.mxu0 %v344
      %914 = vmatmul.bf16.gmra.mxu0 %v887
      %v915 = vpop.f32.mrf.mxu0
      %v916 = vadd.f32 %v903, %v915
      %v917 = vpop.f32.mrf.mxu0
      %918 = vdwg.mxu0
      %919 = vmatpush.bf16.msra.mxu0 0
      %920 = vmatpush.bf16.msra.mxu0 0
      %921 = vmatpush.bf16.msra.mxu0 0
      %922 = vmatpush.bf16.msra.mxu0 0
      %923 = vmatpush.bf16.msra.mxu0 0
      %924 = vmatpush.bf16.msra.mxu0 0
      %925 = vmatpush.bf16.msra.mxu0 %v353
      %926 = vmatpush.bf16.msra.mxu0 %v352
      %927 = vmatmul.bf16.gmra.mxu0 %v891
      %v928 = vpop.f32.mrf.mxu0
      %v929 = vadd.f32 %v916, %v928
      %v930 = vpop.f32.mrf.mxu0
      %931 = vdwg.mxu0
      %s932 = scalar_lea.vmem %s212, 30
      %v933 = vld [vmem:[%s932] sm:$0x3f]
      %935 = vst [vmem:[#allocation1] ss:$4 sm:$0xff] %v933
      %v936 = vld.sshfl [vmem:[#allocation1] sm:$0xff pattern:$0x73625140]
      %v937 = vld.sshfl [vmem:[#allocation1 + $0x8] sm:$0xff pattern:$0x73625140]
      %v938 = vld.sshfl [vmem:[#allocation1 + $0x10] sm:$0xff pattern:$0x73625140]
      %v941 = vsel %vm372, %v938, 0
      %943 = vmatpush.bf16.msra.mxu0 %v343
      %944 = vmatpush.bf16.msra.mxu0 %v342
      %945 = vmatpush.bf16.msra.mxu0 %v341
      %946 = vmatpush.bf16.msra.mxu0 %v340
      %947 = vmatpush.bf16.msra.mxu0 %v339
      %948 = vmatpush.bf16.msra.mxu0 %v338
      %949 = vmatpush.bf16.msra.mxu0 %v337
      %950 = vmatpush.bf16.msra.mxu0 %v336
      %951 = vmatmul.bf16.gmra.mxu0 %v936
      %v952 = vpop.f32.mrf.mxu0
      %v953 = vadd.f32 0.0, %v952
      %v954 = vpop.f32.mrf.mxu0
      %955 = vdwg.mxu0
      %956 = vmatpush.bf16.msra.mxu0 %v351
      %957 = vmatpush.bf16.msra.mxu0 %v350
      %958 = vmatpush.bf16.msra.mxu0 %v349
      %959 = vmatpush.bf16.msra.mxu0 %v348
      %960 = vmatpush.bf16.msra.mxu0 %v347
      %961 = vmatpush.bf16.msra.mxu0 %v346
      %962 = vmatpush.bf16.msra.mxu0 %v345
      %963 = vmatpush.bf16.msra.mxu0 %v344
      %964 = vmatmul.bf16.gmra.mxu0 %v937
      %v965 = vpop.f32.mrf.mxu0
      %v966 = vadd.f32 %v953, %v965
      %v967 = vpop.f32.mrf.mxu0
      %968 = vdwg.mxu0
      %969 = vmatpush.bf16.msra.mxu0 0
      %970 = vmatpush.bf16.msra.mxu0 0
      %971 = vmatpush.bf16.msra.mxu0 0
      %972 = vmatpush.bf16.msra.mxu0 0
      %973 = vmatpush.bf16.msra.mxu0 0
      %974 = vmatpush.bf16.msra.mxu0 0
      %975 = vmatpush.bf16.msra.mxu0 %v353
      %976 = vmatpush.bf16.msra.mxu0 %v352
      %977 = vmatmul.bf16.gmra.mxu0 %v941
      %v978 = vpop.f32.mrf.mxu0
      %v979 = vadd.f32 %v966, %v978
      %v980 = vpop.f32.mrf.mxu0
      %981 = vdwg.mxu0
      %v982 = vmax.f32 %v829, %v879
      %v983 = vmax.f32 %v929, %v979
      %v984 = vmax.f32 %v982, %v983
      %v985 = vadd.f32 %v984, %v567
      %v986 = vmax.f32 %v985, 0.0
      %v987 = vpack.c.bf16 %v986, %v986
      %s988 = scalar_lea.vmem %s217, 4
      %989 = vst.msk [vmem:[%s988] sm:$0x3] %vm572, %v987
      %s990 = scalar_lea.vmem %s207, 36
      %v991 = vld [vmem:[%s990] sm:$0x3f]
      %993 = vst [vmem:[#allocation1] ss:$4 sm:$0xff] %v991
      %v994 = vld.sshfl [vmem:[#allocation1] sm:$0xff pattern:$0x73625140]
      %v995 = vld.sshfl [vmem:[#allocation1 + $0x8] sm:$0xff pattern:$0x73625140]
      %v996 = vld.sshfl [vmem:[#allocation1 + $0x10] sm:$0xff pattern:$0x73625140]
      %v999 = vsel %vm372, %v996, 0
      %1001 = vmatpush.bf16.msra.mxu0 %v343
      %1002 = vmatpush.bf16.msra.mxu0 %v342
      %1003 = vmatpush.bf16.msra.mxu0 %v341
      %1004 = vmatpush.bf16.msra.mxu0 %v340
      %1005 = vmatpush.bf16.msra.mxu0 %v339
      %1006 = vmatpush.bf16.msra.mxu0 %v338
      %1007 = vmatpush.bf16.msra.mxu0 %v337
      %1008 = vmatpush.bf16.msra.mxu0 %v336
      %1009 = vmatmul.bf16.gmra.mxu0 %v994
      %v1010 = vpop.f32.mrf.mxu0
      %v1011 = vadd.f32 0.0, %v1010
      %v1012 = vpop.f32.mrf.mxu0
      %1013 = vdwg.mxu0
      %1014 = vmatpush.bf16.msra.mxu0 %v351
      %1015 = vmatpush.bf16.msra.mxu0 %v350
      %1016 = vmatpush.bf16.msra.mxu0 %v349
      %1017 = vmatpush.bf16.msra.mxu0 %v348
      %1018 = vmatpush.bf16.msra.mxu0 %v347
      %1019 = vmatpush.bf16.msra.mxu0 %v346
      %1020 = vmatpush.bf16.msra.mxu0 %v345
      %1021 = vmatpush.bf16.msra.mxu0 %v344
      %1022 = vmatmul.bf16.gmra.mxu0 %v995
      %v1023 = vpop.f32.mrf.mxu0
      %v1024 = vadd.f32 %v1011, %v1023
      %v1025 = vpop.f32.mrf.mxu0
      %1026 = vdwg.mxu0
      %1027 = vmatpush.bf16.msra.mxu0 0
      %1028 = vmatpush.bf16.msra.mxu0 0
      %1029 = vmatpush.bf16.msra.mxu0 0
      %1030 = vmatpush.bf16.msra.mxu0 0
      %1031 = vmatpush.bf16.msra.mxu0 0
      %1032 = vmatpush.bf16.msra.mxu0 0
      %1033 = vmatpush.bf16.msra.mxu0 %v353
      %1034 = vmatpush.bf16.msra.mxu0 %v352
      %1035 = vmatmul.bf16.gmra.mxu0 %v999
      %v1036 = vpop.f32.mrf.mxu0
      %v1037 = vadd.f32 %v1024, %v1036
      %v1038 = vpop.f32.mrf.mxu0
      %1039 = vdwg.mxu0
      %s1040 = scalar_lea.vmem %s212, 36
      %v1041 = vld [vmem:[%s1040] sm:$0x3f]
      %1043 = vst [vmem:[#allocation1] ss:$4 sm:$0xff] %v1041
      %v1044 = vld.sshfl [vmem:[#allocation1] sm:$0xff pattern:$0x73625140]
      %v1045 = vld.sshfl [vmem:[#allocation1 + $0x8] sm:$0xff pattern:$0x73625140]
      %v1046 = vld.sshfl [vmem:[#allocation1 + $0x10] sm:$0xff pattern:$0x73625140]
      %v1049 = vsel %vm372, %v1046, 0
      %1051 = vmatpush.bf16.msra.mxu0 %v343
      %1052 = vmatpush.bf16.msra.mxu0 %v342
      %1053 = vmatpush.bf16.msra.mxu0 %v341
      %1054 = vmatpush.bf16.msra.mxu0 %v340
      %1055 = vmatpush.bf16.msra.mxu0 %v339
      %1056 = vmatpush.bf16.msra.mxu0 %v338
      %1057 = vmatpush.bf16.msra.mxu0 %v337
      %1058 = vmatpush.bf16.msra.mxu0 %v336
      %1059 = vmatmul.bf16.gmra.mxu0 %v1044
      %v1060 = vpop.f32.mrf.mxu0
      %v1061 = vadd.f32 0.0, %v1060
      %v1062 = vpop.f32.mrf.mxu0
      %1063 = vdwg.mxu0
      %1064 = vmatpush.bf16.msra.mxu0 %v351
      %1065 = vmatpush.bf16.msra.mxu0 %v350
      %1066 = vmatpush.bf16.msra.mxu0 %v349
      %1067 = vmatpush.bf16.msra.mxu0 %v348
      %1068 = vmatpush.bf16.msra.mxu0 %v347
      %1069 = vmatpush.bf16.msra.mxu0 %v346
      %1070 = vmatpush.bf16.msra.mxu0 %v345
      %1071 = vmatpush.bf16.msra.mxu0 %v344
      %1072 = vmatmul.bf16.gmra.mxu0 %v1045
      %v1073 = vpop.f32.mrf.mxu0
      %v1074 = vadd.f32 %v1061, %v1073
      %v1075 = vpop.f32.mrf.mxu0
      %1076 = vdwg.mxu0
      %1077 = vmatpush.bf16.msra.mxu0 0
      %1078 = vmatpush.bf16.msra.mxu0 0
      %1079 = vmatpush.bf16.msra.mxu0 0
      %1080 = vmatpush.bf16.msra.mxu0 0
      %1081 = vmatpush.bf16.msra.mxu0 0
      %1082 = vmatpush.bf16.msra.mxu0 0
      %1083 = vmatpush.bf16.msra.mxu0 %v353
      %1084 = vmatpush.bf16.msra.mxu0 %v352
      %1085 = vmatmul.bf16.gmra.mxu0 %v1049
      %v1086 = vpop.f32.mrf.mxu0
      %v1087 = vadd.f32 %v1074, %v1086
      %v1088 = vpop.f32.mrf.mxu0
      %1089 = vdwg.mxu0
      %s1090 = scalar_lea.vmem %s207, 42
      %v1091 = vld [vmem:[%s1090] sm:$0x3f]
      %1093 = vst [vmem:[#allocation1] ss:$4 sm:$0xff] %v1091
      %v1094 = vld.sshfl [vmem:[#allocation1] sm:$0xff pattern:$0x73625140]
      %v1095 = vld.sshfl [vmem:[#allocation1 + $0x8] sm:$0xff pattern:$0x73625140]
      %v1096 = vld.sshfl [vmem:[#allocation1 + $0x10] sm:$0xff pattern:$0x73625140]
      %v1099 = vsel %vm372, %v1096, 0
      %1101 = vmatpush.bf16.msra.mxu0 %v343
      %1102 = vmatpush.bf16.msra.mxu0 %v342
      %1103 = vmatpush.bf16.msra.mxu0 %v341
      %1104 = vmatpush.bf16.msra.mxu0 %v340
      %1105 = vmatpush.bf16.msra.mxu0 %v339
      %1106 = vmatpush.bf16.msra.mxu0 %v338
      %1107 = vmatpush.bf16.msra.mxu0 %v337
      %1108 = vmatpush.bf16.msra.mxu0 %v336
      %1109 = vmatmul.bf16.gmra.mxu0 %v1094
      %v1110 = vpop.f32.mrf.mxu0
      %v1111 = vadd.f32 0.0, %v1110
      %v1112 = vpop.f32.mrf.mxu0
      %1113 = vdwg.mxu0
      %1114 = vmatpush.bf16.msra.mxu0 %v351
      %1115 = vmatpush.bf16.msra.mxu0 %v350
      %1116 = vmatpush.bf16.msra.mxu0 %v349
      %1117 = vmatpush.bf16.msra.mxu0 %v348
      %1118 = vmatpush.bf16.msra.mxu0 %v347
      %1119 = vmatpush.bf16.msra.mxu0 %v346
      %1120 = vmatpush.bf16.msra.mxu0 %v345
      %1121 = vmatpush.bf16.msra.mxu0 %v344
      %1122 = vmatmul.bf16.gmra.mxu0 %v1095
      %v1123 = vpop.f32.mrf.mxu0
      %v1124 = vadd.f32 %v1111, %v1123
      %v1125 = vpop.f32.mrf.mxu0
      %1126 = vdwg.mxu0
      %1127 = vmatpush.bf16.msra.mxu0 0
      %1128 = vmatpush.bf16.msra.mxu0 0
      %1129 = vmatpush.bf16.msra.mxu0 0
      %1130 = vmatpush.bf16.msra.mxu0 0
      %1131 = vmatpush.bf16.msra.mxu0 0
      %1132 = vmatpush.bf16.msra.mxu0 0
      %1133 = vmatpush.bf16.msra.mxu0 %v353
      %1134 = vmatpush.bf16.msra.mxu0 %v352
      %1135 = vmatmul.bf16.gmra.mxu0 %v1099
      %v1136 = vpop.f32.mrf.mxu0
      %v1137 = vadd.f32 %v1124, %v1136
      %v1138 = vpop.f32.mrf.mxu0
      %1139 = vdwg.mxu0
      %s1140 = scalar_lea.vmem %s212, 42
      %v1141 = vld [vmem:[%s1140] sm:$0x3f]
      %1143 = vst [vmem:[#allocation1] ss:$4 sm:$0xff] %v1141
      %v1144 = vld.sshfl [vmem:[#allocation1] sm:$0xff pattern:$0x73625140]
      %v1145 = vld.sshfl [vmem:[#allocation1 + $0x8] sm:$0xff pattern:$0x73625140]
      %v1146 = vld.sshfl [vmem:[#allocation1 + $0x10] sm:$0xff pattern:$0x73625140]
      %v1149 = vsel %vm372, %v1146, 0
      %1151 = vmatpush.bf16.msra.mxu0 %v343
      %1152 = vmatpush.bf16.msra.mxu0 %v342
      %1153 = vmatpush.bf16.msra.mxu0 %v341
      %1154 = vmatpush.bf16.msra.mxu0 %v340
      %1155 = vmatpush.bf16.msra.mxu0 %v339
      %1156 = vmatpush.bf16.msra.mxu0 %v338
      %1157 = vmatpush.bf16.msra.mxu0 %v337
      %1158 = vmatpush.bf16.msra.mxu0 %v336
      %1159 = vmatmul.bf16.gmra.mxu0 %v1144
      %v1160 = vpop.f32.mrf.mxu0
      %v1161 = vadd.f32 0.0, %v1160
      %v1162 = vpop.f32.mrf.mxu0
      %1163 = vdwg.mxu0
      %1164 = vmatpush.bf16.msra.mxu0 %v351
      %1165 = vmatpush.bf16.msra.mxu0 %v350
      %1166 = vmatpush.bf16.msra.mxu0 %v349
      %1167 = vmatpush.bf16.msra.mxu0 %v348
      %1168 = vmatpush.bf16.msra.mxu0 %v347
      %1169 = vmatpush.bf16.msra.mxu0 %v346
      %1170 = vmatpush.bf16.msra.mxu0 %v345
      %1171 = vmatpush.bf16.msra.mxu0 %v344
      %1172 = vmatmul.bf16.gmra.mxu0 %v1145
      %v1173 = vpop.f32.mrf.mxu0
      %v1174 = vadd.f32 %v1161, %v1173
      %v1175 = vpop.f32.mrf.mxu0
      %1176 = vdwg.mxu0
      %1177 = vmatpush.bf16.msra.mxu0 0
      %1178 = vmatpush.bf16.msra.mxu0 0
      %1179 = vmatpush.bf16.msra.mxu0 0
      %1180 = vmatpush.bf16.msra.mxu0 0
      %1181 = vmatpush.bf16.msra.mxu0 0
      %1182 = vmatpush.bf16.msra.mxu0 0
      %1183 = vmatpush.bf16.msra.mxu0 %v353
      %1184 = vmatpush.bf16.msra.mxu0 %v352
      %1185 = vmatmul.bf16.gmra.mxu0 %v1149
      %v1186 = vpop.f32.mrf.mxu0
      %v1187 = vadd.f32 %v1174, %v1186
      %v1188 = vpop.f32.mrf.mxu0
      %1189 = vdwg.mxu0
      %v1190 = vmax.f32 %v1037, %v1087
      %v1191 = vmax.f32 %v1137, %v1187
      %v1192 = vmax.f32 %v1190, %v1191
      %v1193 = vadd.f32 %v1192, %v567
      %v1194 = vmax.f32 %v1193, 0.0
      %v1195 = vpack.c.bf16 %v1194, %v1194
      %s1196 = scalar_lea.vmem %s217, 6
      %1197 = vst.msk [vmem:[%s1196] sm:$0x3] %vm572, %v1195
      %p1198 = scmp.lt.s32.totalorder %s15, 1
      %s1199 = scalar_select %p1198, %s15, 1
      %s1200 = smul.addr %s1199, 4
      %s1201 = smul.addr %s1200, 2
      %s1202 = scalar_lea.vmem %s4, %s1201
      // Predicated region
      $region37: #{bt_model_forward.7} parent=35 // pred_check
        %p1203 = pneg %p127
      $region38: #{bt_model_forward.7} parent=35 // pred_check_branch
        %1205 = sbr.rel (%p1203) target = $region40
      $region39: #{bt_model_forward.7} parent=35 // pred_region
        _
      $region40: #{bt_model_forward.7} parent=35 // pred_fallthru
        _
    $region36: #{bt_model_forward.7} parent=5 // pred_fallthru
      _
    %p1206 = scmp.le.s32.totalorder 2, %s10
    // Predicated region
    $region41: #{bt_model_forward.7} parent=5 // pred_check
      %p1207 = pneg %p1206
    $region42: #{bt_model_forward.7} parent=5 // pred_check_branch
      %1209 = sbr.rel (%p1207) target = $region44
    $region43: #{bt_model_forward.7} parent=5 // pred_region
      %s1210 = ssub.s32 %s10, 2
      // Predicated region
      $region45: #{bt_model_forward.7} parent=43 // pred_check
        %p1211 = pneg %p133
      $region46: #{bt_model_forward.7} parent=43 // pred_check_branch
        %1213 = sbr.rel (%p1211) target = $region48
      $region47: #{bt_model_forward.7} parent=43 // pred_region
        %p1214 = scmp.lt.s32.totalorder %s16, 1
        %s1215 = scalar_select %p1214, %s16, 1
        %s1216 = smul.addr %s1215, 4
        %s1217 = smul.addr %s1216, 2
        %s1218 = scalar_lea.vmem %s4, %s1217
      $region48: #{bt_model_forward.7} parent=43 // pred_fallthru
        _
    $region44: #{bt_model_forward.7} parent=5 // pred_fallthru
      _
  $region6: #{bt_model_forward.7} parent=0 // loop_footer
    %s14 = sadd.s32 1, %s10
  $region7: #{bt_model_forward.7} parent=0 // loop_footer_branch
    %9 = sbr.rel target = $region3
  $region8: #{bt_model_forward.7} parent=0 // loop_exit
    _

</llo_original>
